<compile_context>
chip_gen: v7x
topology: tpu7x:2x2x1
jax: 0.10.0
libtpu: 0.0.40
codegen_flags: <defaults>
</compile_context>

<pallas_src>
import functools

import jax
import jax.numpy as jnp
from jax.experimental import pallas as pl
from jax.experimental.pallas import tpu as pltpu

LANE = 128


def _ceil_to(v, m):
    return ((v + m - 1) // m) * m


# ----------------------------- Pallas kernels -------------------------------

def _make_conv_stats_kernel(taps, ho, wo, has_aux):
    """3x3 conv as one fat MXU matmul + per-image BN partial statistics.

    taps: static list of (row_off, col_off) into the (phase-major, halo-padded)
          input block, in the same order the flattened weight was built with.
    Per image the kernel emits:
      y  : (1, ho, wo, Coutp)  conv output (compute dtype)
      st : (1, 8, Coutp) f32   rows [sum, ssd] (+ [sum_aux, ssd_aux]); ssd is
           the sum of squared deviations about this image's own channel mean
           (combined exactly in the wrapper -> no E[x^2]-E[x]^2 cancellation).
    """
    m_tile = ho * wo
    inv_m = 1.0 / float(m_tile)

    def _partial_stats(acc):
        s = jnp.sum(acc, axis=0, keepdims=True)           # (1, C)
        d = acc - s * inv_m                                # shift by own mean
        return [s, jnp.sum(d * d, axis=0, keepdims=True)]

    def kernel(*refs):
        if has_aux:
            x_ref, w_ref, xa_ref, wa_ref, y_ref, ya_ref, st_ref = refs
        else:
            x_ref, w_ref, y_ref, st_ref = refs
        cinp = x_ref.shape[-1]
        coutp = w_ref.shape[-1]

        # Gather the shifted tap views (full, lane-dense channel dim) and fold
        # them into the contraction dim: a single
        # (m_tile, ntaps*cinp) @ (ntaps*cinp, coutp) MXU matmul.
        cols = [x_ref[0, ro:ro + ho, co:co + wo, :].reshape(m_tile, cinp)
                for (ro, co) in taps]
        lhs = cols[0] if len(cols) == 1 else jnp.concatenate(cols, axis=-1)
        acc = jnp.dot(lhs, w_ref[...], preferred_element_type=jnp.float32)
        y_ref[...] = acc.reshape(1, ho, wo, coutp).astype(y_ref.dtype)
        rows = _partial_stats(acc)

        if has_aux:
            ca = xa_ref.shape[-1]
            acc_a = jnp.dot(xa_ref[0].reshape(m_tile, ca), wa_ref[...],
                            preferred_element_type=jnp.float32)
            ya_ref[...] = acc_a.reshape(1, ho, wo, coutp).astype(ya_ref.dtype)
            rows += _partial_stats(acc_a)

        pad_rows = 8 - len(rows)
        st = jnp.concatenate(
            rows + [jnp.zeros((pad_rows, coutp), jnp.float32)], axis=0)
        st_ref[...] = st.reshape(1, 8, coutp)

    return kernel


def _make_affine_relu_kernel(mode, halo):
    """y*scale+shift -> ReLU (+ residual combine), optional zero-halo output.

    mode: "plain"    -> relu(affine(y))
          "aux"      -> relu(affine(y)) + relu(affine(y_aux))  (conv shortcut)
          "identity" -> relu(affine(y)) + residual             (identity shortcut)
    halo: store the result into the interior of a spatially (+1,+1) padded
          output whose border is zero - exactly the layout the following 3x3
          stride-1 conv kernel reads (removes a wrapper pad HBM round trip).
    """

    def kernel(*refs):
        if mode == "aux":
            y_ref, ya_ref, p_ref, o_ref = refs
        elif mode == "identity":
            y_ref, r_ref, p_ref, o_ref = refs
        else:
            y_ref, p_ref, o_ref = refs

        _, ho, wo, c = y_ref.shape
        pr = p_ref[...]                        # (8, C) f32 folded scale/shift
        sc = pr[0:1, :].reshape(1, 1, 1, c)
        sh = pr[1:2, :].reshape(1, 1, 1, c)
        out = jnp.maximum(y_ref[...].astype(jnp.float32) * sc + sh, 0.0)

        if mode == "aux":
            sca = pr[2:3, :].reshape(1, 1, 1, c)
            sha = pr[3:4, :].reshape(1, 1, 1, c)
            out = out + jnp.maximum(
                ya_ref[...].astype(jnp.float32) * sca + sha, 0.0)
        elif mode == "identity":
            out = out + r_ref[...].astype(jnp.float32)

        if halo:
            o_ref[...] = jnp.zeros_like(o_ref)
            o_ref[:, 1:1 + ho, 1:1 + wo, :] = out.astype(o_ref.dtype)
        else:
            o_ref[...] = out.astype(o_ref.dtype)

    return kernel


# ------------------------------ JAX wrappers ---------------------------------

def _phase_split(x_nhwc, kh, kw, stride, padding, cinp):
    """Zero-pad spatially, pad channels to cinp (lane-dense), and fold the
    stride phases onto a leading block of the row axis:
        xps shape (n, s*s*hq, wq, cinp);  output pixel (i, j) of tap (di, dj)
        reads xps[n, ((di%s)*s + dj%s)*hq + i + di//s, j + dj//s, :].
    Returns (xps, taps, (ho, wo)) with taps = [(row_off, col_off), ...].
    """
    n, h, w, c = x_nhwc.shape
    s = stride
    ho = (h + 2 * padding - kh) // s + 1
    wo = (w + 2 * padding - kw) // s + 1
    hq = _ceil_to(h + 2 * padding, s) // s
    wq = _ceil_to(w + 2 * padding, s) // s
    xp = jnp.pad(x_nhwc, ((0, 0),
                          (padding, hq * s - h - padding),
                          (padding, wq * s - w - padding),
                          (0, cinp - c)))
    if s > 1:
        xps = xp.reshape(n, hq, s, wq, s, cinp)
        xps = xps.transpose(0, 2, 4, 1, 3, 5).reshape(n, s * s * hq, wq, cinp)
    else:
        xps = xp
    taps = [(((di % s) * s + (dj % s)) * hq + di // s, dj // s)
            for di in range(kh) for dj in range(kw)]
    return xps, taps, (ho, wo)


def _prep_conv_weight(w_oihw, cinp, coutp, dtype):
    """(O,I,kh,kw) -> flattened (kh*kw*cinp, coutp), tap-major, channel-padded."""
    cout, cin, kh, kw = w_oihw.shape
    w = jnp.transpose(w_oihw, (2, 3, 1, 0))               # (kh, kw, cin, cout)
    w = jnp.pad(w, ((0, 0), (0, 0), (0, cinp - cin), (0, coutp - cout)))
    return w.reshape(kh * kw * cinp, coutp).astype(dtype)


def _conv_stats_call(xps, w_flat, taps, ho, wo, *, aux=None, compute_dtype):
    n = xps.shape[0]
    coutp = w_flat.shape[-1]
    has_aux = aux is not None
    kernel = _make_conv_stats_kernel(taps, ho, wo, has_aux)

    inputs = [xps, w_flat]
    in_specs = [
        pl.BlockSpec((1,) + xps.shape[1:], lambda i: (i, 0, 0, 0)),
        pl.BlockSpec(w_flat.shape, lambda i: (0, 0)),
    ]
    out_shape = [jax.ShapeDtypeStruct((n, ho, wo, coutp), compute_dtype)]
    out_specs = [pl.BlockSpec((1, ho, wo, coutp), lambda i: (i, 0, 0, 0))]
    if has_aux:
        xa, wa = aux
        inputs += [xa, wa]
        in_specs += [
            pl.BlockSpec((1,) + xa.shape[1:], lambda i: (i, 0, 0, 0)),
            pl.BlockSpec(wa.shape, lambda i: (0, 0)),
        ]
        out_shape.append(jax.ShapeDtypeStruct((n, ho, wo, coutp),
                                              compute_dtype))
        out_specs.append(pl.BlockSpec((1, ho, wo, coutp),
                                      lambda i: (i, 0, 0, 0)))
    out_shape.append(jax.ShapeDtypeStruct((n, 8, coutp), jnp.float32))
    out_specs.append(pl.BlockSpec((1, 8, coutp), lambda i: (i, 0, 0)))

    # NOTE: for very large feature maps (e.g. 112^2) add a row-tile grid axis so
    # the f32 accumulator + operands stay well under v7x's 64 MiB VMEM.
    return pl.pallas_call(
        kernel,
        grid=(n,),
        in_specs=in_specs,
        out_specs=tuple(out_specs),
        out_shape=tuple(out_shape),
        compiler_params=pltpu.CompilerParams(
            dimension_semantics=("parallel",)),    # stats are per-image partials
    )(*inputs)


def _affine_relu_call(y, params8, *, mode, extra=None, halo=False, out_dtype):
    n, ho, wo, coutp = y.shape
    kernel = _make_affine_relu_kernel(mode, halo)
    inputs = [y]
    in_specs = [pl.BlockSpec((1, ho, wo, coutp), lambda i: (i, 0, 0, 0))]
    if mode in ("aux", "identity"):
        inputs.append(extra)
        in_specs.append(pl.BlockSpec((1,) + extra.shape[1:],
                                     lambda i: (i, 0, 0, 0)))
    inputs.append(params8)
    in_specs.append(pl.BlockSpec(params8.shape, lambda i: (0, 0)))

    osp = (ho + 2, wo + 2) if halo else (ho, wo)
    return pl.pallas_call(
        kernel,
        grid=(n,),
        in_specs=in_specs,
        out_specs=pl.BlockSpec((1,) + osp + (coutp,), lambda i: (i, 0, 0, 0)),
        out_shape=jax.ShapeDtypeStruct((n,) + osp + (coutp,), out_dtype),
        compiler_params=pltpu.CompilerParams(
            dimension_semantics=("parallel",)),    # independent per image
    )(*inputs)


def _bn_scale_shift(sum_i, ssd_i, m_per_img, gamma_p, beta_p, eps):
    """Exact Chan combine of per-image partial stats -> per-channel scale/shift."""
    n_img = sum_i.shape[0]
    count = float(n_img * m_per_img)
    mu_i = sum_i / float(m_per_img)                       # per-image means
    mu = jnp.sum(sum_i, axis=0) / count                   # global mean
    var = (jnp.sum(ssd_i, axis=0)
           + float(m_per_img) * jnp.sum((mu_i - mu) ** 2, axis=0)) / count
    inv = jax.lax.rsqrt(jnp.maximum(var, 0.0) + eps)
    scale = inv * gamma_p
    shift = beta_p - mu * scale
    return scale, shift


# ------------------------------- BasicBlock ----------------------------------

def init_basic_block_params(key, in_ch, out_ch, stride):
    ks = jax.random.split(key, 9)

    def conv_w(k, o, i, s):
        fan_in = i * s * s
        return jax.random.normal(k, (o, i, s, s), jnp.float32) / jnp.sqrt(fan_in)

    params = {
        "conv1_w": conv_w(ks[0], out_ch, in_ch, 3),
        "bn1_g": 1.0 + 0.1 * jax.random.normal(ks[1], (out_ch,), jnp.float32),
        "bn1_b": 0.1 * jax.random.normal(ks[2], (out_ch,), jnp.float32),
        "conv2_w": conv_w(ks[3], out_ch, out_ch, 3),
        "bn2_g": 1.0 + 0.1 * jax.random.normal(ks[4], (out_ch,), jnp.float32),
        "bn2_b": 0.1 * jax.random.normal(ks[5], (out_ch,), jnp.float32),
    }
    if stride == 2:
        params.update({
            "convs_w": conv_w(ks[6], out_ch, in_ch, 1),
            "bns_g": 1.0 + 0.1 * jax.random.normal(ks[7], (out_ch,), jnp.float32),
            "bns_b": 0.1 * jax.random.normal(ks[8], (out_ch,), jnp.float32),
        })
    return params


def basic_block_forward(x_nchw, params, stride, *, compute_dtype=jnp.bfloat16,
                        eps=1e-5):
    # NOTE: for a full network keep activations NHWC end-to-end and hoist these
    # two transposes (and the residual channel pad) out of the per-block path.
    x = jnp.transpose(x_nchw, (0, 2, 3, 1))              # NCHW -> NHWC
    n, h, w, cin = x.shape
    cout = params["conv1_w"].shape[0]
    coutp = _ceil_to(cout, LANE)                          # lane-dense channels
    cinp = _ceil_to(cin, LANE)
    cd = compute_dtype

    if stride != 2:
        # PyTorch BasicBlock uses a raw identity shortcut in this case.
        assert cin == cout, "identity shortcut requires in_ch == out_ch"

    def pad_ch(v):
        return jnp.pad(v, (0, coutp - cout)).astype(jnp.float32)

    # ---------------- stage 1: conv1 (3x3, stride) + BN + ReLU ---------------
    xps1, taps1, (ho, wo) = _phase_split(x.astype(cd), 3, 3, stride, 1, cinp)
    w1 = _prep_conv_weight(params["conv1_w"], cinp, coutp, cd)
    y1, st1 = _conv_stats_call(xps1, w1, taps1, ho, wo, compute_dtype=cd)
    m_img = ho * wo
    sc1, sh1 = _bn_scale_shift(st1[:, 0], st1[:, 1], m_img,
                               pad_ch(params["bn1_g"]), pad_ch(params["bn1_b"]),
                               eps)
    p1 = jnp.zeros((8, coutp), jnp.float32).at[0].set(sc1).at[1].set(sh1)
    # relu(bn(y1)) written straight into the zero-halo layout conv2 consumes.
    out1p = _affine_relu_call(y1, p1, mode="plain", halo=True, out_dtype=cd)

    # ------ stage 2: conv2 (3x3, s=1) + BN + ReLU, shortcut fused, add -------
    taps2 = [(di, dj) for di in range(3) for dj in range(3)]
    w2 = _prep_conv_weight(params["conv2_w"], coutp, coutp, cd)

    if stride == 2:
        # 1x1 stride-2 shortcut: wrapper-side spatial subsample (no blowup),
        # lane-dense channel pad; its matmul + BN stats fused into stage 2.
        xs = x[:, ::stride, ::stride, :][:, :ho, :wo, :]
        xs = jnp.pad(xs, ((0, 0), (0, 0), (0, 0), (0, cinp - cin))).astype(cd)
        ws = jnp.pad(params["convs_w"][:, :, 0, 0].T,
                     ((0, cinp - cin), (0, coutp - cout))).astype(cd)
        y2, ys, st2 = _conv_stats_call(out1p, w2, taps2, ho, wo,
                                       aux=(xs, ws), compute_dtype=cd)
        sc2, sh2 = _bn_scale_shift(st2[:, 0], st2[:, 1], m_img,
                                   pad_ch(params["bn2_g"]),
                                   pad_ch(params["bn2_b"]), eps)
        scs, shs = _bn_scale_shift(st2[:, 2], st2[:, 3], m_img,
                                   pad_ch(params["bns_g"]),
                                   pad_ch(params["bns_b"]), eps)
        p2 = (jnp.zeros((8, coutp), jnp.float32)
              .at[0].set(sc2).at[1].set(sh2).at[2].set(scs).at[3].set(shs))
        out = _affine_relu_call(y2, p2, mode="aux", extra=ys, out_dtype=cd)
    else:
        y2, st2 = _conv_stats_call(out1p, w2, taps2, ho, wo, compute_dtype=cd)
        sc2, sh2 = _bn_scale_shift(st2[:, 0], st2[:, 1], m_img,
                                   pad_ch(params["bn2_g"]),
                                   pad_ch(params["bn2_b"]), eps)
        p2 = jnp.zeros((8, coutp), jnp.float32).at[0].set(sc2).at[1].set(sh2)
        res = x.astype(cd)
        if cin != coutp:       # no-op for already lane-dense 128/256/512-ch blocks
            res = jnp.pad(res, ((0, 0), (0, 0), (0, 0), (0, coutp - cin)))
        out = _affine_relu_call(y2, p2, mode="identity", extra=res,
                                out_dtype=cd)

    out = out[:, :, :, :cout]                            # drop padded channels
    return jnp.transpose(out, (0, 3, 1, 2)).astype(x_nchw.dtype)


# ---------------------------- pure-JAX reference -----------------------------

def _ref_conv_bn_relu(x, w, g, b, stride, padding, eps=1e-5):
    y = jax.lax.conv_general_dilated(
        x, jnp.transpose(w, (2, 3, 1, 0)),
        window_strides=(stride, stride),
        padding=((padding, padding), (padding, padding)),
        dimension_numbers=("NHWC", "HWIO", "NHWC"))
    mean = jnp.mean(y, axis=(0, 1, 2), keepdims=True)
    var = jnp.mean((y - mean) ** 2, axis=(0, 1, 2), keepdims=True)
    y = (y - mean) * jax.lax.rsqrt(var + eps) * g.reshape(1, 1, 1, -1) \
        + b.reshape(1, 1, 1, -1)
    return jnp.maximum(y, 0.0)


def _ref_basic_block(x_nchw, params, stride):
    x = jnp.transpose(x_nchw, (0, 2, 3, 1))
    out = _ref_conv_bn_relu(x, params["conv1_w"], params["bn1_g"],
                            params["bn1_b"], stride, 1)
    if stride == 2:
        shortcut = _ref_conv_bn_relu(x, params["convs_w"], params["bns_g"],
                                     params["bns_b"], stride, 0)
    else:
        shortcut = x
    out = _ref_conv_bn_relu(out, params["conv2_w"], params["bn2_g"],
                            params["bn2_b"], 1, 1)
    out = out + shortcut
    return jnp.transpose(out, (0, 3, 1, 2))


# ----------------------------------- main ------------------------------------

if __name__ == "__main__":
    key = jax.random.PRNGKey(0)
    kx1, kx2, kp1, kp2 = jax.random.split(key, 4)

    # --- config 1: downsampling block (stride 2, fused conv shortcut) --------
    in_ch, out_ch, stride = 4, 8, 2
    x1 = jax.random.normal(kx1, (2, in_ch, 16, 16), jnp.float32)
    params1 = init_basic_block_params(kp1, in_ch, out_ch, stride)

    fwd_bf16 = jax.jit(functools.partial(basic_block_forward, stride=stride,
                                         compute_dtype=jnp.bfloat16))
    fwd_f32 = jax.jit(functools.partial(basic_block_forward, stride=stride,
                                        compute_dtype=jnp.float32))
    out_bf16 = jax.block_until_ready(fwd_bf16(x1, params1))
    out_f32 = jax.block_until_ready(fwd_f32(x1, params1))
    ref1 = jax.block_until_ready(_ref_basic_block(x1, params1, stride))

    assert out_f32.shape == (2, out_ch, 8, 8), out_f32.shape
    assert jnp.allclose(out_f32, ref1, atol=1e-3, rtol=1e-3), \
        float(jnp.max(jnp.abs(out_f32 - ref1)))
    err = jnp.abs(out_bf16 - ref1)
    rel_rms = float(jnp.sqrt(jnp.mean(err ** 2)) /
                    (jnp.sqrt(jnp.mean(ref1 ** 2)) + 1e-12))
    assert rel_rms < 0.08 and float(jnp.max(err)) < 0.5, \
        (rel_rms, float(jnp.max(err)))

    # --- config 2: identity-shortcut block (stride 1, in_ch == out_ch) -------
    ch = 8
    x2 = jax.random.normal(kx2, (2, ch, 16, 16), jnp.float32)
    params2 = init_basic_block_params(kp2, ch, ch, 1)
    out2 = jax.block_until_ready(
        jax.jit(functools.partial(basic_block_forward, stride=1,
                                  compute_dtype=jnp.float32))(x2, params2))
    ref2 = jax.block_until_ready(_ref_basic_block(x2, params2, 1))
    assert out2.shape == (2, ch, 16, 16), out2.shape
    assert jnp.allclose(out2, ref2, atol=1e-3, rtol=1e-3), \
        float(jnp.max(jnp.abs(out2 - ref2)))

    print("KERNEL_OK")
</pallas_src>

<mosaic_0001>
module attributes {stable_mosaic.version = 11 : i64} {
  func.func @kernel(%arg0: i32, %arg1: memref<1x36x9x128xbf16, #tpu.memory_space<vmem>>, %arg2: memref<1152x128xbf16, #tpu.memory_space<vmem>>, %arg3: memref<1x8x8x128xbf16, #tpu.memory_space<vmem>>, %arg4: memref<1x8x128xf32, #tpu.memory_space<vmem>>) attributes {dimension_semantics = [#tpu.dimension_semantics<parallel>], iteration_bounds = array<i64: 2>, scalar_prefetch = 0 : i64, scratch_operands = 0 : i64, tpu.core_type = #tpu.core_type<tc>, window_params = [{transform_indices = @transform_0, window_bounds = array<i64: 1, 36, 9, 128>}, {pipeline_mode = #tpu.pipeline_mode<synchronous>, transform_indices = @transform_1, window_bounds = array<i64: 1152, 128>}, {transform_indices = @transform_2, window_bounds = array<i64: 1, 8, 8, 128>}, {transform_indices = @transform_3, window_bounds = array<i64: 1, 8, 128>}]} {
    %c0 = arith.constant 0 : index
    %c0_0 = arith.constant 0 : index
    %c0_1 = arith.constant 0 : index
    %c0_2 = arith.constant 0 : index
    %0 = vector.load %arg1[%c0, %c0_0, %c0_1, %c0_2] : memref<1x36x9x128xbf16, #tpu.memory_space<vmem>>, vector<1x8x8x128xbf16>
    %1 = vector.shape_cast %0 : vector<1x8x8x128xbf16> to vector<8x8x128xbf16>
    %2 = vector.shape_cast %1 : vector<8x8x128xbf16> to vector<64x128xbf16>
    %c0_3 = arith.constant 0 : index
    %c9 = arith.constant 9 : index
    %c0_4 = arith.constant 0 : index
    %c0_5 = arith.constant 0 : index
    %3 = vector.load %arg1[%c0_3, %c9, %c0_4, %c0_5] : memref<1x36x9x128xbf16, #tpu.memory_space<vmem>>, vector<1x8x8x128xbf16>
    %4 = vector.shape_cast %3 : vector<1x8x8x128xbf16> to vector<8x8x128xbf16>
    %5 = vector.shape_cast %4 : vector<8x8x128xbf16> to vector<64x128xbf16>
    %c0_6 = arith.constant 0 : index
    %c0_7 = arith.constant 0 : index
    %c1 = arith.constant 1 : index
    %c0_8 = arith.constant 0 : index
    %6 = vector.load %arg1[%c0_6, %c0_7, %c1, %c0_8] : memref<1x36x9x128xbf16, #tpu.memory_space<vmem>>, vector<1x8x8x128xbf16>
    %7 = vector.shape_cast %6 : vector<1x8x8x128xbf16> to vector<8x8x128xbf16>
    %8 = vector.shape_cast %7 : vector<8x8x128xbf16> to vector<64x128xbf16>
    %c0_9 = arith.constant 0 : index
    %c18 = arith.constant 18 : index
    %c0_10 = arith.constant 0 : index
    %c0_11 = arith.constant 0 : index
    %9 = vector.load %arg1[%c0_9, %c18, %c0_10, %c0_11] : memref<1x36x9x128xbf16, #tpu.memory_space<vmem>>, vector<1x8x8x128xbf16>
    %10 = vector.shape_cast %9 : vector<1x8x8x128xbf16> to vector<8x8x128xbf16>
    %11 = vector.shape_cast %10 : vector<8x8x128xbf16> to vector<64x128xbf16>
    %c0_12 = arith.constant 0 : index
    %c27 = arith.constant 27 : index
    %c0_13 = arith.constant 0 : index
    %c0_14 = arith.constant 0 : index
    %12 = vector.load %arg1[%c0_12, %c27, %c0_13, %c0_14] : memref<1x36x9x128xbf16, #tpu.memory_space<vmem>>, vector<1x8x8x128xbf16>
    %13 = vector.shape_cast %12 : vector<1x8x8x128xbf16> to vector<8x8x128xbf16>
    %14 = vector.shape_cast %13 : vector<8x8x128xbf16> to vector<64x128xbf16>
    %c0_15 = arith.constant 0 : index
    %c18_16 = arith.constant 18 : index
    %c1_17 = arith.constant 1 : index
    %c0_18 = arith.constant 0 : index
    %15 = vector.load %arg1[%c0_15, %c18_16, %c1_17, %c0_18] : memref<1x36x9x128xbf16, #tpu.memory_space<vmem>>, vector<1x8x8x128xbf16>
    %16 = vector.shape_cast %15 : vector<1x8x8x128xbf16> to vector<8x8x128xbf16>
    %17 = vector.shape_cast %16 : vector<8x8x128xbf16> to vector<64x128xbf16>
    %c0_19 = arith.constant 0 : index
    %c1_20 = arith.constant 1 : index
    %c0_21 = arith.constant 0 : index
    %c0_22 = arith.constant 0 : index
    %18 = vector.load %arg1[%c0_19, %c1_20, %c0_21, %c0_22] : memref<1x36x9x128xbf16, #tpu.memory_space<vmem>>, vector<1x8x8x128xbf16>
    %19 = vector.shape_cast %18 : vector<1x8x8x128xbf16> to vector<8x8x128xbf16>
    %20 = vector.shape_cast %19 : vector<8x8x128xbf16> to vector<64x128xbf16>
    %c0_23 = arith.constant 0 : index
    %c10 = arith.constant 10 : index
    %c0_24 = arith.constant 0 : index
    %c0_25 = arith.constant 0 : index
    %21 = vector.load %arg1[%c0_23, %c10, %c0_24, %c0_25] : memref<1x36x9x128xbf16, #tpu.memory_space<vmem>>, vector<1x8x8x128xbf16>
    %22 = vector.shape_cast %21 : vector<1x8x8x128xbf16> to vector<8x8x128xbf16>
    %23 = vector.shape_cast %22 : vector<8x8x128xbf16> to vector<64x128xbf16>
    %c0_26 = arith.constant 0 : index
    %c1_27 = arith.constant 1 : index
    %c1_28 = arith.constant 1 : index
    %c0_29 = arith.constant 0 : index
    %24 = vector.load %arg1[%c0_26, %c1_27, %c1_28, %c0_29] : memref<1x36x9x128xbf16, #tpu.memory_space<vmem>>, vector<1x8x8x128xbf16>
    %25 = vector.shape_cast %24 : vector<1x8x8x128xbf16> to vector<8x8x128xbf16>
    %26 = vector.shape_cast %25 : vector<8x8x128xbf16> to vector<64x128xbf16>
    %27 = tpu.concatenate %2, %5, %8, %11, %14, %17, %20, %23, %26 in 1 : vector<64x128xbf16>, vector<64x128xbf16>, vector<64x128xbf16>, vector<64x128xbf16>, vector<64x128xbf16>, vector<64x128xbf16>, vector<64x128xbf16>, vector<64x128xbf16>, vector<64x128xbf16> -> vector<64x1152xbf16>
    %c0_30 = arith.constant 0 : index
    %c0_31 = arith.constant 0 : index
    %28 = vector.load %arg2[%c0_30, %c0_31] : memref<1152x128xbf16, #tpu.memory_space<vmem>>, vector<1152x128xbf16>
    %cst = arith.constant dense<0.000000e+00> : vector<64x128xf32>
    %29 = tpu.matmul %27, %28, %cst {dimension_numbers = #tpu.dot_dimension_numbers<[1], [0], [0], [1], [0, 0, 1, 1], [], []>} : vector<64x1152xbf16>, vector<1152x128xbf16>, vector<64x128xf32> -> vector<64x128xf32>
    %30 = vector.shape_cast %29 : vector<64x128xf32> to vector<1x8x8x128xf32>
    %31 = arith.truncf %30 : vector<1x8x8x128xf32> to vector<1x8x8x128xbf16>
    %c0_32 = arith.constant 0 : index
    %c0_33 = arith.constant 0 : index
    %c0_34 = arith.constant 0 : index
    %c0_35 = arith.constant 0 : index
    %32 = vector.load %arg3[%c0_32, %c0_33, %c0_34, %c0_35] : memref<1x8x8x128xbf16, #tpu.memory_space<vmem>>, vector<1x8x8x128xbf16>
    tpu.vector_store %arg3[%c0_32, %c0_33, %c0_34, %c0_35], %31 {strides = array<i32>} : memref<1x8x8x128xbf16, #tpu.memory_space<vmem>>, vector<1x8x8x128xbf16>,
    %cst_36 = arith.constant dense<0.000000e+00> : vector<128xf32>
    %33 = vector.multi_reduction <add>, %29, %cst_36 [0] : vector<64x128xf32> to vector<128xf32>
    %34 = vector.shape_cast %33 : vector<128xf32> to vector<1x128xf32>
    %cst_37 = arith.constant 1.562500e-02 : f32
    %35 = vector.broadcast %cst_37 : f32 to vector<1x128xf32>
    %36 = arith.mulf %34, %35 : vector<1x128xf32>
    %37 = vector.broadcast %36 : vector<1x128xf32> to vector<64x128xf32>
    %38 = arith.subf %29, %37 : vector<64x128xf32>
    %39 = arith.mulf %38, %38 : vector<64x128xf32>
    %cst_38 = arith.constant dense<0.000000e+00> : vector<128xf32>
    %40 = vector.multi_reduction <add>, %39, %cst_38 [0] : vector<64x128xf32> to vector<128xf32>
    %41 = vector.shape_cast %40 : vector<128xf32> to vector<1x128xf32>
    %cst_39 = arith.constant 0.000000e+00 : f32
    %42 = vector.broadcast %cst_39 : f32 to vector<6x128xf32>
    %43 = tpu.concatenate %34, %41, %42 in 0 : vector<1x128xf32>, vector<1x128xf32>, vector<6x128xf32> -> vector<8x128xf32>
    %44 = vector.shape_cast %43 : vector<8x128xf32> to vector<1x8x128xf32>
    %c0_40 = arith.constant 0 : index
    %c0_41 = arith.constant 0 : index
    %c0_42 = arith.constant 0 : index
    %45 = vector.load %arg4[%c0_40, %c0_41, %c0_42] : memref<1x8x128xf32, #tpu.memory_space<vmem>>, vector<1x8x128xf32>
    tpu.vector_store %arg4[%c0_40, %c0_41, %c0_42], %44 {strides = array<i32>} : memref<1x8x128xf32, #tpu.memory_space<vmem>>, vector<1x8x128xf32>,
    return
  }
  func.func @transform_0(%arg0: i32) -> (i32, i32, i32, i32) {
    %c0_i32 = arith.constant 0 : i32
    %c0_i32_0 = arith.constant 0 : i32
    %c0_i32_1 = arith.constant 0 : i32
    %c0_i32_2 = arith.constant 0 : i32
    return %arg0, %c0_i32, %c0_i32_0, %c0_i32_1 : i32, i32, i32, i32
  }
  func.func @transform_1(%arg0: i32) -> (i32, i32) {
    %c0_i32 = arith.constant 0 : i32
    %c0_i32_0 = arith.constant 0 : i32
    %c0_i32_1 = arith.constant 0 : i32
    return %c0_i32, %c0_i32_0 : i32, i32
  }
  func.func @transform_2(%arg0: i32) -> (i32, i32, i32, i32) {
    %c0_i32 = arith.constant 0 : i32
    %c0_i32_0 = arith.constant 0 : i32
    %c0_i32_1 = arith.constant 0 : i32
    %c0_i32_2 = arith.constant 0 : i32
    return %arg0, %c0_i32, %c0_i32_0, %c0_i32_1 : i32, i32, i32, i32
  }
  func.func @transform_3(%arg0: i32) -> (i32, i32, i32) {
    %c0_i32 = arith.constant 0 : i32
    %c0_i32_0 = arith.constant 0 : i32
    %c0_i32_1 = arith.constant 0 : i32
    return %arg0, %c0_i32, %c0_i32_0 : i32, i32, i32
  }
}

module attributes {stable_mosaic.version = 11 : i64} {
  func.func @kernel(%arg0: i32, %arg1: memref<1x8x8x128xbf16, #tpu.memory_space<vmem>>, %arg2: memref<8x128xf32, #tpu.memory_space<vmem>>, %arg3: memref<1x10x10x128xbf16, #tpu.memory_space<vmem>>) attributes {dimension_semantics = [#tpu.dimension_semantics<parallel>], iteration_bounds = array<i64: 2>, scalar_prefetch = 0 : i64, scratch_operands = 0 : i64, tpu.core_type = #tpu.core_type<tc>, window_params = [{transform_indices = @transform_0, window_bounds = array<i64: 1, 8, 8, 128>}, {pipeline_mode = #tpu.pipeline_mode<synchronous>, transform_indices = @transform_1, window_bounds = array<i64: 8, 128>}, {transform_indices = @transform_2, window_bounds = array<i64: 1, 10, 10, 128>}]} {
    %c0 = arith.constant 0 : index
    %c0_0 = arith.constant 0 : index
    %0 = vector.load %arg2[%c0, %c0_0] : memref<8x128xf32, #tpu.memory_space<vmem>>, vector<8x128xf32>
    %1 = vector.extract_strided_slice %0 {offsets = [0, 0], sizes = [1, 128], strides = [1, 1]} : vector<8x128xf32> to vector<1x128xf32>
    %2 = vector.shape_cast %1 : vector<1x128xf32> to vector<1x1x1x128xf32>
    %3 = vector.extract_strided_slice %0 {offsets = [1, 0], sizes = [1, 128], strides = [1, 1]} : vector<8x128xf32> to vector<1x128xf32>
    %4 = vector.shape_cast %3 : vector<1x128xf32> to vector<1x1x1x128xf32>
    %c0_1 = arith.constant 0 : index
    %c0_2 = arith.constant 0 : index
    %c0_3 = arith.constant 0 : index
    %c0_4 = arith.constant 0 : index
    %5 = vector.load %arg1[%c0_1, %c0_2, %c0_3, %c0_4] : memref<1x8x8x128xbf16, #tpu.memory_space<vmem>>, vector<1x8x8x128xbf16>
    %6 = arith.extf %5 : vector<1x8x8x128xbf16> to vector<1x8x8x128xf32>
    %7 = vector.broadcast %2 : vector<1x1x1x128xf32> to vector<1x8x8x128xf32>
    %8 = arith.mulf %6, %7 : vector<1x8x8x128xf32>
    %9 = vector.broadcast %4 : vector<1x1x1x128xf32> to vector<1x8x8x128xf32>
    %10 = arith.addf %8, %9 : vector<1x8x8x128xf32>
    %cst = arith.constant 0.000000e+00 : f32
    %11 = vector.broadcast %cst : f32 to vector<1x8x8x128xf32>
    %12 = arith.maximumf %10, %11 : vector<1x8x8x128xf32>
    %cst_5 = arith.constant 0.000000e+00 : bf16
    %13 = vector.broadcast %cst_5 : bf16 to vector<1x10x10x128xbf16>
    %c0_6 = arith.constant 0 : index
    %c0_7 = arith.constant 0 : index
    %c0_8 = arith.constant 0 : index
    %c0_9 = arith.constant 0 : index
    %14 = vector.load %arg3[%c0_6, %c0_7, %c0_8, %c0_9] : memref<1x10x10x128xbf16, #tpu.memory_space<vmem>>, vector<1x10x10x128xbf16>
    tpu.vector_store %arg3[%c0_6, %c0_7, %c0_8, %c0_9], %13 {strides = array<i32>} : memref<1x10x10x128xbf16, #tpu.memory_space<vmem>>, vector<1x10x10x128xbf16>,
    %15 = arith.truncf %12 : vector<1x8x8x128xf32> to vector<1x8x8x128xbf16>
    %c0_10 = arith.constant 0 : index
    %c1 = arith.constant 1 : index
    %c1_11 = arith.constant 1 : index
    %c0_12 = arith.constant 0 : index
    %16 = vector.load %arg3[%c0_10, %c1, %c1_11, %c0_12] : memref<1x10x10x128xbf16, #tpu.memory_space<vmem>>, vector<1x8x8x128xbf16>
    tpu.vector_store %arg3[%c0_10, %c1, %c1_11, %c0_12], %15 {strides = array<i32>} : memref<1x10x10x128xbf16, #tpu.memory_space<vmem>>, vector<1x8x8x128xbf16>,
    return
  }
  func.func @transform_0(%arg0: i32) -> (i32, i32, i32, i32) {
    %c0_i32 = arith.constant 0 : i32
    %c0_i32_0 = arith.constant 0 : i32
    %c0_i32_1 = arith.constant 0 : i32
    %c0_i32_2 = arith.constant 0 : i32
    return %arg0, %c0_i32, %c0_i32_0, %c0_i32_1 : i32, i32, i32, i32
  }
  func.func @transform_1(%arg0: i32) -> (i32, i32) {
    %c0_i32 = arith.constant 0 : i32
    %c0_i32_0 = arith.constant 0 : i32
    %c0_i32_1 = arith.constant 0 : i32
    return %c0_i32, %c0_i32_0 : i32, i32
  }
  func.func @transform_2(%arg0: i32) -> (i32, i32, i32, i32) {
    %c0_i32 = arith.constant 0 : i32
    %c0_i32_0 = arith.constant 0 : i32
    %c0_i32_1 = arith.constant 0 : i32
    %c0_i32_2 = arith.constant 0 : i32
    return %arg0, %c0_i32, %c0_i32_0, %c0_i32_1 : i32, i32, i32, i32
  }
}

module attributes {stable_mosaic.version = 11 : i64} {
  func.func @kernel(%arg0: i32, %arg1: memref<1x10x10x128xbf16, #tpu.memory_space<vmem>>, %arg2: memref<1152x128xbf16, #tpu.memory_space<vmem>>, %arg3: memref<1x8x8x128xbf16, #tpu.memory_space<vmem>>, %arg4: memref<128x128xbf16, #tpu.memory_space<vmem>>, %arg5: memref<1x8x8x128xbf16, #tpu.memory_space<vmem>>, %arg6: memref<1x8x8x128xbf16, #tpu.memory_space<vmem>>, %arg7: memref<1x8x128xf32, #tpu.memory_space<vmem>>) attributes {dimension_semantics = [#tpu.dimension_semantics<parallel>], iteration_bounds = array<i64: 2>, scalar_prefetch = 0 : i64, scratch_operands = 0 : i64, tpu.core_type = #tpu.core_type<tc>, window_params = [{transform_indices = @transform_0, window_bounds = array<i64: 1, 10, 10, 128>}, {pipeline_mode = #tpu.pipeline_mode<synchronous>, transform_indices = @transform_1, window_bounds = array<i64: 1152, 128>}, {transform_indices = @transform_2, window_bounds = array<i64: 1, 8, 8, 128>}, {pipeline_mode = #tpu.pipeline_mode<synchronous>, transform_indices = @transform_3, window_bounds = array<i64: 128, 128>}, {transform_indices = @transform_4, window_bounds = array<i64: 1, 8, 8, 128>}, {transform_indices = @transform_5, window_bounds = array<i64: 1, 8, 8, 128>}, {transform_indices = @transform_6, window_bounds = array<i64: 1, 8, 128>}]} {
    %c0 = arith.constant 0 : index
    %c0_0 = arith.constant 0 : index
    %c0_1 = arith.constant 0 : index
    %c0_2 = arith.constant 0 : index
    %0 = vector.load %arg1[%c0, %c0_0, %c0_1, %c0_2] : memref<1x10x10x128xbf16, #tpu.memory_space<vmem>>, vector<1x8x8x128xbf16>
    %1 = vector.shape_cast %0 : vector<1x8x8x128xbf16> to vector<8x8x128xbf16>
    %2 = vector.shape_cast %1 : vector<8x8x128xbf16> to vector<64x128xbf16>
    %c0_3 = arith.constant 0 : index
    %c0_4 = arith.constant 0 : index
    %c1 = arith.constant 1 : index
    %c0_5 = arith.constant 0 : index
    %3 = vector.load %arg1[%c0_3, %c0_4, %c1, %c0_5] : memref<1x10x10x128xbf16, #tpu.memory_space<vmem>>, vector<1x8x8x128xbf16>
    %4 = vector.shape_cast %3 : vector<1x8x8x128xbf16> to vector<8x8x128xbf16>
    %5 = vector.shape_cast %4 : vector<8x8x128xbf16> to vector<64x128xbf16>
    %c0_6 = arith.constant 0 : index
    %c0_7 = arith.constant 0 : index
    %c2 = arith.constant 2 : index
    %c0_8 = arith.constant 0 : index
    %6 = vector.load %arg1[%c0_6, %c0_7, %c2, %c0_8] : memref<1x10x10x128xbf16, #tpu.memory_space<vmem>>, vector<1x8x8x128xbf16>
    %7 = vector.shape_cast %6 : vector<1x8x8x128xbf16> to vector<8x8x128xbf16>
    %8 = vector.shape_cast %7 : vector<8x8x128xbf16> to vector<64x128xbf16>
    %c0_9 = arith.constant 0 : index
    %c1_10 = arith.constant 1 : index
    %c0_11 = arith.constant 0 : index
    %c0_12 = arith.constant 0 : index
    %9 = vector.load %arg1[%c0_9, %c1_10, %c0_11, %c0_12] : memref<1x10x10x128xbf16, #tpu.memory_space<vmem>>, vector<1x8x8x128xbf16>
    %10 = vector.shape_cast %9 : vector<1x8x8x128xbf16> to vector<8x8x128xbf16>
    %11 = vector.shape_cast %10 : vector<8x8x128xbf16> to vector<64x128xbf16>
    %c0_13 = arith.constant 0 : index
    %c1_14 = arith.constant 1 : index
    %c1_15 = arith.constant 1 : index
    %c0_16 = arith.constant 0 : index
    %12 = vector.load %arg1[%c0_13, %c1_14, %c1_15, %c0_16] : memref<1x10x10x128xbf16, #tpu.memory_space<vmem>>, vector<1x8x8x128xbf16>
    %13 = vector.shape_cast %12 : vector<1x8x8x128xbf16> to vector<8x8x128xbf16>
    %14 = vector.shape_cast %13 : vector<8x8x128xbf16> to vector<64x128xbf16>
    %c0_17 = arith.constant 0 : index
    %c1_18 = arith.constant 1 : index
    %c2_19 = arith.constant 2 : index
    %c0_20 = arith.constant 0 : index
    %15 = vector.load %arg1[%c0_17, %c1_18, %c2_19, %c0_20] : memref<1x10x10x128xbf16, #tpu.memory_space<vmem>>, vector<1x8x8x128xbf16>
    %16 = vector.shape_cast %15 : vector<1x8x8x128xbf16> to vector<8x8x128xbf16>
    %17 = vector.shape_cast %16 : vector<8x8x128xbf16> to vector<64x128xbf16>
    %c0_21 = arith.constant 0 : index
    %c2_22 = arith.constant 2 : index
    %c0_23 = arith.constant 0 : index
    %c0_24 = arith.constant 0 : index
    %18 = vector.load %arg1[%c0_21, %c2_22, %c0_23, %c0_24] : memref<1x10x10x128xbf16, #tpu.memory_space<vmem>>, vector<1x8x8x128xbf16>
    %19 = vector.shape_cast %18 : vector<1x8x8x128xbf16> to vector<8x8x128xbf16>
    %20 = vector.shape_cast %19 : vector<8x8x128xbf16> to vector<64x128xbf16>
    %c0_25 = arith.constant 0 : index
    %c2_26 = arith.constant 2 : index
    %c1_27 = arith.constant 1 : index
    %c0_28 = arith.constant 0 : index
    %21 = vector.load %arg1[%c0_25, %c2_26, %c1_27, %c0_28] : memref<1x10x10x128xbf16, #tpu.memory_space<vmem>>, vector<1x8x8x128xbf16>
    %22 = vector.shape_cast %21 : vector<1x8x8x128xbf16> to vector<8x8x128xbf16>
    %23 = vector.shape_cast %22 : vector<8x8x128xbf16> to vector<64x128xbf16>
    %c0_29 = arith.constant 0 : index
    %c2_30 = arith.constant 2 : index
    %c2_31 = arith.constant 2 : index
    %c0_32 = arith.constant 0 : index
    %24 = vector.load %arg1[%c0_29, %c2_30, %c2_31, %c0_32] : memref<1x10x10x128xbf16, #tpu.memory_space<vmem>>, vector<1x8x8x128xbf16>
    %25 = vector.shape_cast %24 : vector<1x8x8x128xbf16> to vector<8x8x128xbf16>
    %26 = vector.shape_cast %25 : vector<8x8x128xbf16> to vector<64x128xbf16>
    %27 = tpu.concatenate %2, %5, %8, %11, %14, %17, %20, %23, %26 in 1 : vector<64x128xbf16>, vector<64x128xbf16>, vector<64x128xbf16>, vector<64x128xbf16>, vector<64x128xbf16>, vector<64x128xbf16>, vector<64x128xbf16>, vector<64x128xbf16>, vector<64x128xbf16> -> vector<64x1152xbf16>
    %c0_33 = arith.constant 0 : index
    %c0_34 = arith.constant 0 : index
    %28 = vector.load %arg2[%c0_33, %c0_34] : memref<1152x128xbf16, #tpu.memory_space<vmem>>, vector<1152x128xbf16>
    %cst = arith.constant dense<0.000000e+00> : vector<64x128xf32>
    %29 = tpu.matmul %27, %28, %cst {dimension_numbers = #tpu.dot_dimension_numbers<[1], [0], [0], [1], [0, 0, 1, 1], [], []>} : vector<64x1152xbf16>, vector<1152x128xbf16>, vector<64x128xf32> -> vector<64x128xf32>
    %30 = vector.shape_cast %29 : vector<64x128xf32> to vector<1x8x8x128xf32>
    %31 = arith.truncf %30 : vector<1x8x8x128xf32> to vector<1x8x8x128xbf16>
    %c0_35 = arith.constant 0 : index
    %c0_36 = arith.constant 0 : index
    %c0_37 = arith.constant 0 : index
    %c0_38 = arith.constant 0 : index
    %32 = vector.load %arg5[%c0_35, %c0_36, %c0_37, %c0_38] : memref<1x8x8x128xbf16, #tpu.memory_space<vmem>>, vector<1x8x8x128xbf16>
    tpu.vector_store %arg5[%c0_35, %c0_36, %c0_37, %c0_38], %31 {strides = array<i32>} : memref<1x8x8x128xbf16, #tpu.memory_space<vmem>>, vector<1x8x8x128xbf16>,
    %cst_39 = arith.constant dense<0.000000e+00> : vector<128xf32>
    %33 = vector.multi_reduction <add>, %29, %cst_39 [0] : vector<64x128xf32> to vector<128xf32>
    %34 = vector.shape_cast %33 : vector<128xf32> to vector<1x128xf32>
    %cst_40 = arith.constant 1.562500e-02 : f32
    %35 = vector.broadcast %cst_40 : f32 to vector<1x128xf32>
    %36 = arith.mulf %34, %35 : vector<1x128xf32>
    %37 = vector.broadcast %36 : vector<1x128xf32> to vector<64x128xf32>
    %38 = arith.subf %29, %37 : vector<64x128xf32>
    %39 = arith.mulf %38, %38 : vector<64x128xf32>
    %cst_41 = arith.constant dense<0.000000e+00> : vector<128xf32>
    %40 = vector.multi_reduction <add>, %39, %cst_41 [0] : vector<64x128xf32> to vector<128xf32>
    %41 = vector.shape_cast %40 : vector<128xf32> to vector<1x128xf32>
    %c0_42 = arith.constant 0 : index
    %c0_43 = arith.constant 0 : index
    %c0_44 = arith.constant 0 : index
    %c0_45 = arith.constant 0 : index
    %42 = vector.load %arg3[%c0_42, %c0_43, %c0_44, %c0_45] : memref<1x8x8x128xbf16, #tpu.memory_space<vmem>>, vector<1x8x8x128xbf16>
    %43 = vector.shape_cast %42 : vector<1x8x8x128xbf16> to vector<8x8x128xbf16>
    %44 = vector.shape_cast %43 : vector<8x8x128xbf16> to vector<64x128xbf16>
    %c0_46 = arith.constant 0 : index
    %c0_47 = arith.constant 0 : index
    %45 = vector.load %arg4[%c0_46, %c0_47] : memref<128x128xbf16, #tpu.memory_space<vmem>>, vector<128x128xbf16>
    %cst_48 = arith.constant dense<0.000000e+00> : vector<64x128xf32>
    %46 = tpu.matmul %44, %45, %cst_48 {dimension_numbers = #tpu.dot_dimension_numbers<[1], [0], [0], [1], [0, 0, 1, 1], [], []>} : vector<64x128xbf16>, vector<128x128xbf16>, vector<64x128xf32> -> vector<64x128xf32>
    %47 = vector.shape_cast %46 : vector<64x128xf32> to vector<1x8x8x128xf32>
    %48 = arith.truncf %47 : vector<1x8x8x128xf32> to vector<1x8x8x128xbf16>
    %c0_49 = arith.constant 0 : index
    %c0_50 = arith.constant 0 : index
    %c0_51 = arith.constant 0 : index
    %c0_52 = arith.constant 0 : index
    %49 = vector.load %arg6[%c0_49, %c0_50, %c0_51, %c0_52] : memref<1x8x8x128xbf16, #tpu.memory_space<vmem>>, vector<1x8x8x128xbf16>
    tpu.vector_store %arg6[%c0_49, %c0_50, %c0_51, %c0_52], %48 {strides = array<i32>} : memref<1x8x8x128xbf16, #tpu.memory_space<vmem>>, vector<1x8x8x128xbf16>,
    %cst_53 = arith.constant dense<0.000000e+00> : vector<128xf32>
    %50 = vector.multi_reduction <add>, %46, %cst_53 [0] : vector<64x128xf32> to vector<128xf32>
    %51 = vector.shape_cast %50 : vector<128xf32> to vector<1x128xf32>
    %cst_54 = arith.constant 1.562500e-02 : f32
    %52 = vector.broadcast %cst_54 : f32 to vector<1x128xf32>
    %53 = arith.mulf %51, %52 : vector<1x128xf32>
    %54 = vector.broadcast %53 : vector<1x128xf32> to vector<64x128xf32>
    %55 = arith.subf %46, %54 : vector<64x128xf32>
    %56 = arith.mulf %55, %55 : vector<64x128xf32>
    %cst_55 = arith.constant dense<0.000000e+00> : vector<128xf32>
    %57 = vector.multi_reduction <add>, %56, %cst_55 [0] : vector<64x128xf32> to vector<128xf32>
    %58 = vector.shape_cast %57 : vector<128xf32> to vector<1x128xf32>
    %cst_56 = arith.constant 0.000000e+00 : f32
    %59 = vector.broadcast %cst_56 : f32 to vector<4x128xf32>
    %60 = tpu.concatenate %34, %41, %51, %58, %59 in 0 : vector<1x128xf32>, vector<1x128xf32>, vector<1x128xf32>, vector<1x128xf32>, vector<4x128xf32> -> vector<8x128xf32>
    %61 = vector.shape_cast %60 : vector<8x128xf32> to vector<1x8x128xf32>
    %c0_57 = arith.constant 0 : index
    %c0_58 = arith.constant 0 : index
    %c0_59 = arith.constant 0 : index
    %62 = vector.load %arg7[%c0_57, %c0_58, %c0_59] : memref<1x8x128xf32, #tpu.memory_space<vmem>>, vector<1x8x128xf32>
    tpu.vector_store %arg7[%c0_57, %c0_58, %c0_59], %61 {strides = array<i32>} : memref<1x8x128xf32, #tpu.memory_space<vmem>>, vector<1x8x128xf32>,
    return
  }
  func.func @transform_0(%arg0: i32) -> (i32, i32, i32, i32) {
    %c0_i32 = arith.constant 0 : i32
    %c0_i32_0 = arith.constant 0 : i32
    %c0_i32_1 = arith.constant 0 : i32
    %c0_i32_2 = arith.constant 0 : i32
    return %arg0, %c0_i32, %c0_i32_0, %c0_i32_1 : i32, i32, i32, i32
  }
  func.func @transform_1(%arg0: i32) -> (i32, i32) {
    %c0_i32 = arith.constant 0 : i32
    %c0_i32_0 = arith.constant 0 : i32
    %c0_i32_1 = arith.constant 0 : i32
    return %c0_i32, %c0_i32_0 : i32, i32
  }
  func.func @transform_2(%arg0: i32) -> (i32, i32, i32, i32) {
    %c0_i32 = arith.constant 0 : i32
    %c0_i32_0 = arith.constant 0 : i32
    %c0_i32_1 = arith.constant 0 : i32
    %c0_i32_2 = arith.constant 0 : i32
    return %arg0, %c0_i32, %c0_i32_0, %c0_i32_1 : i32, i32, i32, i32
  }
  func.func @transform_3(%arg0: i32) -> (i32, i32) {
    %c0_i32 = arith.constant 0 : i32
    %c0_i32_0 = arith.constant 0 : i32
    %c0_i32_1 = arith.constant 0 : i32
    return %c0_i32, %c0_i32_0 : i32, i32
  }
  func.func @transform_4(%arg0: i32) -> (i32, i32, i32, i32) {
    %c0_i32 = arith.constant 0 : i32
    %c0_i32_0 = arith.constant 0 : i32
    %c0_i32_1 = arith.constant 0 : i32
    %c0_i32_2 = arith.constant 0 : i32
    return %arg0, %c0_i32, %c0_i32_0, %c0_i32_1 : i32, i32, i32, i32
  }
  func.func @transform_5(%arg0: i32) -> (i32, i32, i32, i32) {
    %c0_i32 = arith.constant 0 : i32
    %c0_i32_0 = arith.constant 0 : i32
    %c0_i32_1 = arith.constant 0 : i32
    %c0_i32_2 = arith.constant 0 : i32
    return %arg0, %c0_i32, %c0_i32_0, %c0_i32_1 : i32, i32, i32, i32
  }
  func.func @transform_6(%arg0: i32) -> (i32, i32, i32) {
    %c0_i32 = arith.constant 0 : i32
    %c0_i32_0 = arith.constant 0 : i32
    %c0_i32_1 = arith.constant 0 : i32
    return %arg0, %c0_i32, %c0_i32_0 : i32, i32, i32
  }
}

module attributes {stable_mosaic.version = 11 : i64} {
  func.func @kernel(%arg0: i32, %arg1: memref<1x8x8x128xbf16, #tpu.memory_space<vmem>>, %arg2: memref<1x8x8x128xbf16, #tpu.memory_space<vmem>>, %arg3: memref<8x128xf32, #tpu.memory_space<vmem>>, %arg4: memref<1x8x8x128xbf16, #tpu.memory_space<vmem>>) attributes {dimension_semantics = [#tpu.dimension_semantics<parallel>], iteration_bounds = array<i64: 2>, scalar_prefetch = 0 : i64, scratch_operands = 0 : i64, tpu.core_type = #tpu.core_type<tc>, window_params = [{transform_indices = @transform_0, window_bounds = array<i64: 1, 8, 8, 128>}, {transform_indices = @transform_1, window_bounds = array<i64: 1, 8, 8, 128>}, {pipeline_mode = #tpu.pipeline_mode<synchronous>, transform_indices = @transform_2, window_bounds = array<i64: 8, 128>}, {transform_indices = @transform_3, window_bounds = array<i64: 1, 8, 8, 128>}]} {
    %c0 = arith.constant 0 : index
    %c0_0 = arith.constant 0 : index
    %0 = vector.load %arg3[%c0, %c0_0] : memref<8x128xf32, #tpu.memory_space<vmem>>, vector<8x128xf32>
    %1 = vector.extract_strided_slice %0 {offsets = [0, 0], sizes = [1, 128], strides = [1, 1]} : vector<8x128xf32> to vector<1x128xf32>
    %2 = vector.shape_cast %1 : vector<1x128xf32> to vector<1x1x1x128xf32>
    %3 = vector.extract_strided_slice %0 {offsets = [1, 0], sizes = [1, 128], strides = [1, 1]} : vector<8x128xf32> to vector<1x128xf32>
    %4 = vector.shape_cast %3 : vector<1x128xf32> to vector<1x1x1x128xf32>
    %c0_1 = arith.constant 0 : index
    %c0_2 = arith.constant 0 : index
    %c0_3 = arith.constant 0 : index
    %c0_4 = arith.constant 0 : index
    %5 = vector.load %arg1[%c0_1, %c0_2, %c0_3, %c0_4] : memref<1x8x8x128xbf16, #tpu.memory_space<vmem>>, vector<1x8x8x128xbf16>
    %6 = arith.extf %5 : vector<1x8x8x128xbf16> to vector<1x8x8x128xf32>
    %7 = vector.broadcast %2 : vector<1x1x1x128xf32> to vector<1x8x8x128xf32>
    %8 = arith.mulf %6, %7 : vector<1x8x8x128xf32>
    %9 = vector.broadcast %4 : vector<1x1x1x128xf32> to vector<1x8x8x128xf32>
    %10 = arith.addf %8, %9 : vector<1x8x8x128xf32>
    %cst = arith.constant 0.000000e+00 : f32
    %11 = vector.broadcast %cst : f32 to vector<1x8x8x128xf32>
    %12 = arith.maximumf %10, %11 : vector<1x8x8x128xf32>
    %13 = vector.extract_strided_slice %0 {offsets = [2, 0], sizes = [1, 128], strides = [1, 1]} : vector<8x128xf32> to vector<1x128xf32>
    %14 = vector.shape_cast %13 : vector<1x128xf32> to vector<1x1x1x128xf32>
    %15 = vector.extract_strided_slice %0 {offsets = [3, 0], sizes = [1, 128], strides = [1, 1]} : vector<8x128xf32> to vector<1x128xf32>
    %16 = vector.shape_cast %15 : vector<1x128xf32> to vector<1x1x1x128xf32>
    %c0_5 = arith.constant 0 : index
    %c0_6 = arith.constant 0 : index
    %c0_7 = arith.constant 0 : index
    %c0_8 = arith.constant 0 : index
    %17 = vector.load %arg2[%c0_5, %c0_6, %c0_7, %c0_8] : memref<1x8x8x128xbf16, #tpu.memory_space<vmem>>, vector<1x8x8x128xbf16>
    %18 = arith.extf %17 : vector<1x8x8x128xbf16> to vector<1x8x8x128xf32>
    %19 = vector.broadcast %14 : vector<1x1x1x128xf32> to vector<1x8x8x128xf32>
    %20 = arith.mulf %18, %19 : vector<1x8x8x128xf32>
    %21 = vector.broadcast %16 : vector<1x1x1x128xf32> to vector<1x8x8x128xf32>
    %22 = arith.addf %20, %21 : vector<1x8x8x128xf32>
    %cst_9 = arith.constant 0.000000e+00 : f32
    %23 = vector.broadcast %cst_9 : f32 to vector<1x8x8x128xf32>
    %24 = arith.maximumf %22, %23 : vector<1x8x8x128xf32>
    %25 = arith.addf %12, %24 : vector<1x8x8x128xf32>
    %26 = arith.truncf %25 : vector<1x8x8x128xf32> to vector<1x8x8x128xbf16>
    %c0_10 = arith.constant 0 : index
    %c0_11 = arith.constant 0 : index
    %c0_12 = arith.constant 0 : index
    %c0_13 = arith.constant 0 : index
    %27 = vector.load %arg4[%c0_10, %c0_11, %c0_12, %c0_13] : memref<1x8x8x128xbf16, #tpu.memory_space<vmem>>, vector<1x8x8x128xbf16>
    tpu.vector_store %arg4[%c0_10, %c0_11, %c0_12, %c0_13], %26 {strides = array<i32>} : memref<1x8x8x128xbf16, #tpu.memory_space<vmem>>, vector<1x8x8x128xbf16>,
    return
  }
  func.func @transform_0(%arg0: i32) -> (i32, i32, i32, i32) {
    %c0_i32 = arith.constant 0 : i32
    %c0_i32_0 = arith.constant 0 : i32
    %c0_i32_1 = arith.constant 0 : i32
    %c0_i32_2 = arith.constant 0 : i32
    return %arg0, %c0_i32, %c0_i32_0, %c0_i32_1 : i32, i32, i32, i32
  }
  func.func @transform_1(%arg0: i32) -> (i32, i32, i32, i32) {
    %c0_i32 = arith.constant 0 : i32
    %c0_i32_0 = arith.constant 0 : i32
    %c0_i32_1 = arith.constant 0 : i32
    %c0_i32_2 = arith.constant 0 : i32
    return %arg0, %c0_i32, %c0_i32_0, %c0_i32_1 : i32, i32, i32, i32
  }
  func.func @transform_2(%arg0: i32) -> (i32, i32) {
    %c0_i32 = arith.constant 0 : i32
    %c0_i32_0 = arith.constant 0 : i32
    %c0_i32_1 = arith.constant 0 : i32
    return %c0_i32, %c0_i32_0 : i32, i32
  }
  func.func @transform_3(%arg0: i32) -> (i32, i32, i32, i32) {
    %c0_i32 = arith.constant 0 : i32
    %c0_i32_0 = arith.constant 0 : i32
    %c0_i32_1 = arith.constant 0 : i32
    %c0_i32_2 = arith.constant 0 : i32
    return %arg0, %c0_i32, %c0_i32_0, %c0_i32_1 : i32, i32, i32, i32
  }
}

</mosaic_0001>

<llo_original>
// kernel: basic_block_forward.5
$region0: #{basic_block_forward.5}
  #allocation0 [shape = 'u32[]', space=smem, size = 0x4, offset = 0x4, fixed_abs, tag = 'smem constant byte address 0x4 - core index']
  #allocation1 [shape = 'u32[144,128]{1,0:T(1,128)}', space=vmem, size = 0x12000, scoped, tag = 'internal scratch']
  %s0 = inlined_call_operand.vmem [shape: bf16[2,8,8,128], index: 0, kind: input, shape index: {}]
  %s1 = inlined_call_operand.vmem [shape: f32[8,128], index: 1, kind: input, shape index: {}]
  %s2 = inlined_call_operand.vmem [shape: bf16[2,10,10,128], index: 2, kind: output, shape index: {}]
  %s3 = sld [smem:[#allocation0]]
  $region41: #{basic_block_forward.5} parent=0
    _
  %s5 = ssub.s32 1, %s3
  %s6 = scalar_select 0, %s5, %s3
  loop: start=0, step=1, limit=4
  $region2: #{basic_block_forward.5} parent=0 // loop_pre_header
    _
  $region3: #{basic_block_forward.5} parent=0 // loop_header
    %s8 = sphi 0, %s12
    %p9 = scmp.ge.s32.totalorder %s8, 4
    %s18 = sphi 0, %s20
    %s21 = sphi 0, %s18
    %s22 = sphi 0, %s21
    %s38 = sphi 0, %s22
    %s42 = sphi 0, %s42
    %s44 = sphi 0, %s42
    %s45 = sphi 0, %s44
    %s59 = sphi 0, %s45
    %s65 = sphi 0, %s67
    %s68 = sphi 0, %s65
    %s69 = sphi 0, %s68
    %s85 = sphi 0, %s69
  $region4: #{basic_block_forward.5} parent=0 // loop_header_branch
    %11 = sbr.rel (%p9) target = $region8
  $region5: #{basic_block_forward.5} parent=0 // loop_body
    %s13 = ssub.s32 %s8, 1
    %s14 = ssub.s32 %s8, 2
    %s15 = sadd.s32 %s8, 1
    %s16 = ssub.s32 %s8, %s15
    %p17 = scmp.eq.s32.totalorder %s16, 0
    %s19 = sadd.s32 %s18, 1
    %s20 = scalar_select %p17, %s18, %s19
    %p23 = pneg %p17
    %p24 = scmp.eq.s32.totalorder %s8, 1
    %p25 = por %p23, %p24
    %p26 = scmp.ne.s32.totalorder %s18, %s21
    %p27 = scmp.eq.s32.totalorder %s8, 0
    %p28 = por %p26, %p27
    %p29 = scmp.ne.s32.totalorder %s18, %s21
    %p30 = scmp.eq.s32.totalorder %s13, 1
    %p31 = por %p29, %p30
    %p32 = scmp.ne.s32.totalorder %s21, %s22
    %p33 = scmp.eq.s32.totalorder %s13, 0
    %p34 = por %p32, %p33
    %p35 = scmp.ne.s32.totalorder %s21, %s22
    %p36 = scmp.eq.s32.totalorder %s14, 1
    %p37 = por %p35, %p36
    %p39 = scmp.ne.s32.totalorder %s22, %s38
    %p40 = scmp.eq.s32.totalorder %s14, 0
    %p41 = por %p39, %p40
    %s43 = sadd.s32 %s42, 1
    %p46 = scmp.eq.s32.totalorder %s8, 1
    %p47 = scmp.ne.s32.totalorder %s42, %s44
    %p48 = scmp.eq.s32.totalorder %s8, 0
    %p49 = por %p47, %p48
    %p50 = scmp.ne.s32.totalorder %s42, %s44
    %p51 = scmp.eq.s32.totalorder %s13, 1
    %p52 = por %p50, %p51
    %p53 = scmp.ne.s32.totalorder %s44, %s45
    %p54 = scmp.eq.s32.totalorder %s13, 0
    %p55 = por %p53, %p54
    %p56 = scmp.ne.s32.totalorder %s44, %s45
    %p57 = scmp.eq.s32.totalorder %s14, 1
    %p58 = por %p56, %p57
    %p60 = scmp.ne.s32.totalorder %s45, %s59
    %p61 = scmp.eq.s32.totalorder %s14, 0
    %p62 = por %p60, %p61
    %s63 = ssub.s32 %s8, %s15
    %p64 = scmp.eq.s32.totalorder %s63, 0
    %s66 = sadd.s32 %s65, 1
    %s67 = scalar_select %p64, %s65, %s66
    %p70 = pneg %p64
    %p71 = scmp.eq.s32.totalorder %s8, 1
    %p72 = por %p70, %p71
    %p73 = scmp.ne.s32.totalorder %s65, %s68
    %p74 = scmp.eq.s32.totalorder %s8, 0
    %p75 = por %p73, %p74
    %p76 = scmp.ne.s32.totalorder %s65, %s68
    %p77 = scmp.eq.s32.totalorder %s13, 1
    %p78 = por %p76, %p77
    %p79 = scmp.ne.s32.totalorder %s68, %s69
    %p80 = scmp.eq.s32.totalorder %s13, 0
    %p81 = por %p79, %p80
    %p82 = scmp.ne.s32.totalorder %s68, %s69
    %p83 = scmp.eq.s32.totalorder %s14, 1
    %p84 = por %p82, %p83
    %p86 = scmp.ne.s32.totalorder %s69, %s85
    %p87 = scmp.eq.s32.totalorder %s14, 0
    %p88 = por %p86, %p87
    %p89 = scmp.le.s32.totalorder 1, %s8
    %p90 = scmp.lt.s32.totalorder %s8, 3
    %p91 = pnand %p89, %p90
    %p92 = pneg %p91
    // Predicated region
    $region9: #{basic_block_forward.5} parent=5 // pred_check
      _
    $region10: #{basic_block_forward.5} parent=5 // pred_check_branch
      %94 = sbr.rel (%p91) target = $region12
    $region11: #{basic_block_forward.5} parent=5 // pred_region
      %s95 = ssub.s32 %s8, 1
      // Predicated region
      $region13: #{basic_block_forward.5} parent=11 // pred_check
        %p96 = pneg %p55
      $region14: #{basic_block_forward.5} parent=11 // pred_check_branch
        %98 = sbr.rel (%p96) target = $region16
      $region15: #{basic_block_forward.5} parent=11 // pred_region
        _
      $region16: #{basic_block_forward.5} parent=11 // pred_fallthru
        _
    $region12: #{basic_block_forward.5} parent=5 // pred_fallthru
      _
    %p99 = scmp.lt.s32.totalorder %s8, 2
    // Predicated region
    $region17: #{basic_block_forward.5} parent=5 // pred_check
      %p100 = pneg %p99
    $region18: #{basic_block_forward.5} parent=5 // pred_check_branch
      %102 = sbr.rel (%p100) target = $region20
    $region19: #{basic_block_forward.5} parent=5 // pred_region
      // Predicated region
      $region21: #{basic_block_forward.5} parent=19 // pred_check
        %p103 = pneg %p28
      $region22: #{basic_block_forward.5} parent=19 // pred_check_branch
        %105 = sbr.rel (%p103) target = $region24
      $region23: #{basic_block_forward.5} parent=19 // pred_region
        %p106 = scmp.lt.s32.totalorder %s8, 1
        %s107 = scalar_select %p106, %s8, 1
        %s108 = smul.addr %s107, 8
        %s109 = smul.addr %s108, 4
        %s110 = scalar_lea.vmem %s0, %s109
      $region24: #{basic_block_forward.5} parent=19 // pred_fallthru
        _
    $region20: #{basic_block_forward.5} parent=5 // pred_fallthru
      _
    %p111 = scmp.le.s32.totalorder 1, %s8
    %p112 = scmp.lt.s32.totalorder %s8, 3
    %p113 = pnand %p111, %p112
    %p114 = pneg %p113
    // Predicated region
    $region25: #{basic_block_forward.5} parent=5 // pred_check
      _
    $region26: #{basic_block_forward.5} parent=5 // pred_check_branch
      %116 = sbr.rel (%p113) target = $region28
    $region27: #{basic_block_forward.5} parent=5 // pred_region
      %s117 = ssub.s32 %s8, 1
      %p118 = scmp.lt.s32.totalorder %s13, 1
      %s119 = scalar_select %p118, %s13, 1
      %s120 = smul.addr %s119, 8
      %s121 = smul.addr %s120, 4
      %s122 = scalar_lea.vmem %s0, %s121
      %p123 = pneg %p34
      %p124 = pneg %p31
      %p125 = pneg %p55
      %p126 = pneg %p52
      %p127 = pneg %p81
      %p128 = pneg %p78
      %p129 = scmp.lt.s32.totalorder %s13, 1
      %s130 = scalar_select %p129, %s13, 1
      %s131 = smul.addr %s130, 20
      %s132 = smul.addr %s131, 4
      %s133 = scalar_lea.vmem %s2, %s132
      %p134 = scmp.lt.s32.totalorder %s13, 1
      %s135 = scalar_select %p134, %s13, 1
      %s136 = smul.addr %s135, 8
      %s137 = smul.addr %s136, 4
      %s138 = scalar_lea.vmem %s0, %s137
      %p139 = scmp.lt.s32.totalorder %s13, 1
      %s140 = scalar_select %p139, %s13, 1
      %s141 = smul.addr %s140, 20
      %s142 = smul.addr %s141, 4
      %s143 = scalar_lea.vmem %s2, %s142
      %v145 = vld [vmem:[%s1] sm:$0xff]
      %v146 = vld [vmem:[%s138] sm:$0xf]
      %v147 = vld [vmem:[%s138 + $0x4] sm:$0xf]
      %v148 = vld [vmem:[%s138 + $0x8] sm:$0xf]
      %v149 = vld [vmem:[%s138 + $0xc] sm:$0xf]
      %v150 = vld [vmem:[%s138 + $0x10] sm:$0xf]
      %v151 = vld [vmem:[%s138 + $0x14] sm:$0xf]
      %v152 = vld [vmem:[%s138 + $0x18] sm:$0xf]
      %v153 = vld [vmem:[%s138 + $0x1c] sm:$0xf]
      %v154 = vunpack.c.l.bf16 %v146
      %v155 = vunpack.c.l.bf16 %v147
      %v156 = vunpack.c.l.bf16 %v148
      %v157 = vunpack.c.l.bf16 %v149
      %v158 = vunpack.c.l.bf16 %v150
      %v159 = vunpack.c.l.bf16 %v151
      %v160 = vunpack.c.l.bf16 %v152
      %v161 = vunpack.c.l.bf16 %v153
      %v162 = vlaneseq
      %v163 = vshrl.u32 %v162, 7
      %v164 = vsub.s32 0, %v163
      %v165 = vrot.slane %v145, %v164
      %v166 = vmul.f32 %v154, %v165
      %v167 = vmul.f32 %v155, %v165
      %v168 = vmul.f32 %v156, %v165
      %v169 = vmul.f32 %v157, %v165
      %v170 = vmul.f32 %v158, %v165
      %v171 = vmul.f32 %v159, %v165
      %v172 = vmul.f32 %v160, %v165
      %v173 = vmul.f32 %v161, %v165
      %v174 = vlaneseq
      %v175 = vshrl.u32 %v174, 7
      %v176 = vsub.s32 1, %v175
      %v177 = vrot.slane %v145, %v176
      %v178 = vadd.f32 %v166, %v177
      %v179 = vadd.f32 %v167, %v177
      %v180 = vadd.f32 %v168, %v177
      %v181 = vadd.f32 %v169, %v177
      %v182 = vadd.f32 %v170, %v177
      %v183 = vadd.f32 %v171, %v177
      %v184 = vadd.f32 %v172, %v177
      %v185 = vadd.f32 %v173, %v177
      %v186 = vmax.f32 %v178, 0.0
      %v187 = vmax.f32 %v179, 0.0
      %v188 = vmax.f32 %v180, 0.0
      %v189 = vmax.f32 %v181, 0.0
      %v190 = vmax.f32 %v182, 0.0
      %v191 = vmax.f32 %v183, 0.0
      %v192 = vmax.f32 %v184, 0.0
      %v193 = vmax.f32 %v185, 0.0
      %194 = vst [vmem:[%s143] sm:$0xf] 0
      %195 = vst [vmem:[%s143 + $0x4] sm:$0x1] 0
      %196 = vst [vmem:[%s143 + $0x8] sm:$0xf] 0
      %197 = vst [vmem:[%s143 + $0xc] sm:$0x1] 0
      %198 = vst [vmem:[%s143 + $0x10] sm:$0xf] 0
      %199 = vst [vmem:[%s143 + $0x14] sm:$0x1] 0
      %200 = vst [vmem:[%s143 + $0x18] sm:$0xf] 0
      %201 = vst [vmem:[%s143 + $0x1c] sm:$0x1] 0
      %202 = vst [vmem:[%s143 + $0x20] sm:$0xf] 0
      %203 = vst [vmem:[%s143 + $0x24] sm:$0x1] 0
      %204 = vst [vmem:[%s143 + $0x28] sm:$0xf] 0
      %205 = vst [vmem:[%s143 + $0x2c] sm:$0x1] 0
      %206 = vst [vmem:[%s143 + $0x30] sm:$0xf] 0
      %207 = vst [vmem:[%s143 + $0x34] sm:$0x1] 0
      %208 = vst [vmem:[%s143 + $0x38] sm:$0xf] 0
      %209 = vst [vmem:[%s143 + $0x3c] sm:$0x1] 0
      %210 = vst [vmem:[%s143 + $0x40] sm:$0xf] 0
      %211 = vst [vmem:[%s143 + $0x44] sm:$0x1] 0
      %212 = vst [vmem:[%s143 + $0x48] sm:$0xf] 0
      %213 = vst [vmem:[%s143 + $0x4c] sm:$0x1] 0
      %v214 = vpack.c.bf16 %v186, %v186
      %v215 = vpack.c.bf16 %v187, %v187
      %v216 = vpack.c.bf16 %v188, %v188
      %v217 = vpack.c.bf16 %v189, %v189
      %v218 = vpack.c.bf16 %v190, %v190
      %v219 = vpack.c.bf16 %v191, %v191
      %v220 = vpack.c.bf16 %v192, %v192
      %v221 = vpack.c.bf16 %v193, %v193
      %v230 = vunpack.c.l.b16 %v214
      %v231 = vunpack.c.l.b16 %v215
      %v232 = vunpack.c.l.b16 %v216
      %v233 = vunpack.c.l.b16 %v217
      %v234 = vunpack.c.l.b16 %v218
      %v235 = vunpack.c.l.b16 %v219
      %v236 = vunpack.c.l.b16 %v220
      %v237 = vunpack.c.l.b16 %v221
      %v238 = vpack.c.b16 %v230, %v230
      %v239 = vpack.c.b16 %v231, %v231
      %v240 = vpack.c.b16 %v232, %v232
      %v241 = vpack.c.b16 %v233, %v233
      %v242 = vpack.c.b16 %v234, %v234
      %v243 = vpack.c.b16 %v235, %v235
      %v244 = vpack.c.b16 %v236, %v236
      %v245 = vpack.c.b16 %v237, %v237
      %v247 = vshrl.u32 %v238, 16
      %v249 = vrot.slane %v247, 7
      %v250 = vshll.u32 %v238, 16
      %v252 = vor.u32 %v249, %v250
      %v253 = vrot.slane %v249, 4
      %v255 = vshrl.u32 %v239, 16
      %v257 = vrot.slane %v255, 7
      %v258 = vshll.u32 %v239, 16
      %v260 = vor.u32 %v257, %v258
      %v261 = vrot.slane %v257, 4
      %v263 = vshrl.u32 %v240, 16
      %v265 = vrot.slane %v263, 7
      %v266 = vshll.u32 %v240, 16
      %v268 = vor.u32 %v265, %v266
      %v269 = vrot.slane %v265, 4
      %v271 = vshrl.u32 %v241, 16
      %v273 = vrot.slane %v271, 7
      %v274 = vshll.u32 %v241, 16
      %v276 = vor.u32 %v273, %v274
      %v277 = vrot.slane %v273, 4
      %v279 = vshrl.u32 %v242, 16
      %v281 = vrot.slane %v279, 7
      %v282 = vshll.u32 %v242, 16
      %v284 = vor.u32 %v281, %v282
      %v285 = vrot.slane %v281, 4
      %v287 = vshrl.u32 %v243, 16
      %v289 = vrot.slane %v287, 7
      %v290 = vshll.u32 %v243, 16
      %v292 = vor.u32 %v289, %v290
      %v293 = vrot.slane %v289, 4
      %v295 = vshrl.u32 %v244, 16
      %v297 = vrot.slane %v295, 7
      %v298 = vshll.u32 %v244, 16
      %v300 = vor.u32 %v297, %v298
      %v301 = vrot.slane %v297, 4
      %v303 = vshrl.u32 %v245, 16
      %v305 = vrot.slane %v303, 7
      %v306 = vshll.u32 %v245, 16
      %v308 = vor.u32 %v305, %v306
      %v309 = vrot.slane %v305, 4
      %s326 = scalar_lea.vmem %s143, 8
      %vm327 = vcmask 1043456
      %vm328 = vsmask.f32 7938
      %vm329 = vmand %vm327, %vm328
      %v330 = vld [vmem:[%s326] sm:$0xf]
      %v331 = vsel %vm329, %v252, %v330
      %332 = vst [vmem:[%s326] sm:$0xf] %v331
      %vm333 = vcmask 1040384
      %vm334 = vsmask.f32 256
      %vm335 = vmand %vm333, %vm334
      %v336 = vld [vmem:[%s326 + $0x4] sm:$0x1]
      %v337 = vsel %vm335, %v253, %v336
      %338 = vst [vmem:[%s326 + $0x4] sm:$0x1] %v337
      %v339 = vld [vmem:[%s326 + $0x8] sm:$0xf]
      %v340 = vsel %vm329, %v260, %v339
      %341 = vst [vmem:[%s326 + $0x8] sm:$0xf] %v340
      %v342 = vld [vmem:[%s326 + $0xc] sm:$0x1]
      %v343 = vsel %vm335, %v261, %v342
      %344 = vst [vmem:[%s326 + $0xc] sm:$0x1] %v343
      %v345 = vld [vmem:[%s326 + $0x10] sm:$0xf]
      %v346 = vsel %vm329, %v268, %v345
      %347 = vst [vmem:[%s326 + $0x10] sm:$0xf] %v346
      %v348 = vld [vmem:[%s326 + $0x14] sm:$0x1]
      %v349 = vsel %vm335, %v269, %v348
      %350 = vst [vmem:[%s326 + $0x14] sm:$0x1] %v349
      %v351 = vld [vmem:[%s326 + $0x18] sm:$0xf]
      %v352 = vsel %vm329, %v276, %v351
      %353 = vst [vmem:[%s326 + $0x18] sm:$0xf] %v352
      %v354 = vld [vmem:[%s326 + $0x1c] sm:$0x1]
      %v355 = vsel %vm335, %v277, %v354
      %356 = vst [vmem:[%s326 + $0x1c] sm:$0x1] %v355
      %v357 = vld [vmem:[%s326 + $0x20] sm:$0xf]
      %v358 = vsel %vm329, %v284, %v357
      %359 = vst [vmem:[%s326 + $0x20] sm:$0xf] %v358
      %v360 = vld [vmem:[%s326 + $0x24] sm:$0x1]
      %v361 = vsel %vm335, %v285, %v360
      %362 = vst [vmem:[%s326 + $0x24] sm:$0x1] %v361
      %v363 = vld [vmem:[%s326 + $0x28] sm:$0xf]
      %v364 = vsel %vm329, %v292, %v363
      %365 = vst [vmem:[%s326 + $0x28] sm:$0xf] %v364
      %v366 = vld [vmem:[%s326 + $0x2c] sm:$0x1]
      %v367 = vsel %vm335, %v293, %v366
      %368 = vst [vmem:[%s326 + $0x2c] sm:$0x1] %v367
      %v369 = vld [vmem:[%s326 + $0x30] sm:$0xf]
      %v370 = vsel %vm329, %v300, %v369
      %371 = vst [vmem:[%s326 + $0x30] sm:$0xf] %v370
      %v372 = vld [vmem:[%s326 + $0x34] sm:$0x1]
      %v373 = vsel %vm335, %v301, %v372
      %374 = vst [vmem:[%s326 + $0x34] sm:$0x1] %v373
      %v375 = vld [vmem:[%s326 + $0x38] sm:$0xf]
      %v376 = vsel %vm329, %v308, %v375
      %377 = vst [vmem:[%s326 + $0x38] sm:$0xf] %v376
      %v378 = vld [vmem:[%s326 + $0x3c] sm:$0x1]
      %v379 = vsel %vm335, %v309, %v378
      %380 = vst [vmem:[%s326 + $0x3c] sm:$0x1] %v379
      %p381 = scmp.lt.s32.totalorder %s13, 1
      %s382 = scalar_select %p381, %s13, 1
      %s383 = smul.addr %s382, 20
      %s384 = smul.addr %s383, 4
      %s385 = scalar_lea.vmem %s2, %s384
      // Predicated region
      $region29: #{basic_block_forward.5} parent=27 // pred_check
        %p386 = pneg %p78
      $region30: #{basic_block_forward.5} parent=27 // pred_check_branch
        %388 = sbr.rel (%p386) target = $region32
      $region31: #{basic_block_forward.5} parent=27 // pred_region
        _
      $region32: #{basic_block_forward.5} parent=27 // pred_fallthru
        _
    $region28: #{basic_block_forward.5} parent=5 // pred_fallthru
      _
    %p389 = scmp.le.s32.totalorder 2, %s8
    // Predicated region
    $region33: #{basic_block_forward.5} parent=5 // pred_check
      %p390 = pneg %p389
    $region34: #{basic_block_forward.5} parent=5 // pred_check_branch
      %392 = sbr.rel (%p390) target = $region36
    $region35: #{basic_block_forward.5} parent=5 // pred_region
      %s393 = ssub.s32 %s8, 2
      // Predicated region
      $region37: #{basic_block_forward.5} parent=35 // pred_check
        %p394 = pneg %p84
      $region38: #{basic_block_forward.5} parent=35 // pred_check_branch
        %396 = sbr.rel (%p394) target = $region40
      $region39: #{basic_block_forward.5} parent=35 // pred_region
        %p397 = scmp.lt.s32.totalorder %s14, 1
        %s398 = scalar_select %p397, %s14, 1
        %s399 = smul.addr %s398, 20
        %s400 = smul.addr %s399, 4
        %s401 = scalar_lea.vmem %s2, %s400
      $region40: #{basic_block_forward.5} parent=35 // pred_fallthru
        _
    $region36: #{basic_block_forward.5} parent=5 // pred_fallthru
      _
  $region6: #{basic_block_forward.5} parent=0 // loop_footer
    %s12 = sadd.s32 1, %s8
  $region7: #{basic_block_forward.5} parent=0 // loop_footer_branch
    %7 = sbr.rel target = $region3
  $region8: #{basic_block_forward.5} parent=0 // loop_exit
    _

// kernel: basic_block_forward.4
$region0: #{basic_block_forward.4}
  #allocation0 [shape = 'u32[]', space=smem, size = 0x4, offset = 0x4, fixed_abs, tag = 'smem constant byte address 0x4 - core index']
  #allocation1 [shape = 'u32[144,128]{1,0:T(1,128)}', space=vmem, size = 0x12000, scoped, tag = 'internal scratch']
  %s0 = inlined_call_operand.vmem [shape: bf16[2,36,9,128], index: 0, kind: input, shape index: {}]
  %s1 = inlined_call_operand.vmem [shape: bf16[1152,128], index: 1, kind: input, shape index: {}]
  %s2 = inlined_call_operand.vmem [shape: bf16[2,8,8,128], index: 2, kind: output, shape index: {0}]
  %s3 = inlined_call_operand.vmem [shape: f32[2,8,128], index: 3, kind: output, shape index: {1}]
  %4 = xla_tuple %s2, %s3
  %s5 = sld [smem:[#allocation0]]
  $region49: #{basic_block_forward.4} parent=0
    _
  %s7 = ssub.s32 1, %s5
  %s8 = scalar_select 0, %s7, %s5
  loop: start=0, step=1, limit=4
  $region2: #{basic_block_forward.4} parent=0 // loop_pre_header
    _
  $region3: #{basic_block_forward.4} parent=0 // loop_header
    %s10 = sphi 0, %s14
    %p11 = scmp.ge.s32.totalorder %s10, 4
    %s20 = sphi 0, %s22
    %s23 = sphi 0, %s20
    %s24 = sphi 0, %s23
    %s40 = sphi 0, %s24
    %s44 = sphi 0, %s44
    %s46 = sphi 0, %s44
    %s47 = sphi 0, %s46
    %s61 = sphi 0, %s47
    %s67 = sphi 0, %s69
    %s70 = sphi 0, %s67
    %s71 = sphi 0, %s70
    %s87 = sphi 0, %s71
    %s93 = sphi 0, %s95
    %s96 = sphi 0, %s93
    %s97 = sphi 0, %s96
    %s113 = sphi 0, %s97
  $region4: #{basic_block_forward.4} parent=0 // loop_header_branch
    %13 = sbr.rel (%p11) target = $region8
  $region5: #{basic_block_forward.4} parent=0 // loop_body
    %s15 = ssub.s32 %s10, 1
    %s16 = ssub.s32 %s10, 2
    %s17 = sadd.s32 %s10, 1
    %s18 = ssub.s32 %s10, %s17
    %p19 = scmp.eq.s32.totalorder %s18, 0
    %s21 = sadd.s32 %s20, 1
    %s22 = scalar_select %p19, %s20, %s21
    %p25 = pneg %p19
    %p26 = scmp.eq.s32.totalorder %s10, 1
    %p27 = por %p25, %p26
    %p28 = scmp.ne.s32.totalorder %s20, %s23
    %p29 = scmp.eq.s32.totalorder %s10, 0
    %p30 = por %p28, %p29
    %p31 = scmp.ne.s32.totalorder %s20, %s23
    %p32 = scmp.eq.s32.totalorder %s15, 1
    %p33 = por %p31, %p32
    %p34 = scmp.ne.s32.totalorder %s23, %s24
    %p35 = scmp.eq.s32.totalorder %s15, 0
    %p36 = por %p34, %p35
    %p37 = scmp.ne.s32.totalorder %s23, %s24
    %p38 = scmp.eq.s32.totalorder %s16, 1
    %p39 = por %p37, %p38
    %p41 = scmp.ne.s32.totalorder %s24, %s40
    %p42 = scmp.eq.s32.totalorder %s16, 0
    %p43 = por %p41, %p42
    %s45 = sadd.s32 %s44, 1
    %p48 = scmp.eq.s32.totalorder %s10, 1
    %p49 = scmp.ne.s32.totalorder %s44, %s46
    %p50 = scmp.eq.s32.totalorder %s10, 0
    %p51 = por %p49, %p50
    %p52 = scmp.ne.s32.totalorder %s44, %s46
    %p53 = scmp.eq.s32.totalorder %s15, 1
    %p54 = por %p52, %p53
    %p55 = scmp.ne.s32.totalorder %s46, %s47
    %p56 = scmp.eq.s32.totalorder %s15, 0
    %p57 = por %p55, %p56
    %p58 = scmp.ne.s32.totalorder %s46, %s47
    %p59 = scmp.eq.s32.totalorder %s16, 1
    %p60 = por %p58, %p59
    %p62 = scmp.ne.s32.totalorder %s47, %s61
    %p63 = scmp.eq.s32.totalorder %s16, 0
    %p64 = por %p62, %p63
    %s65 = ssub.s32 %s10, %s17
    %p66 = scmp.eq.s32.totalorder %s65, 0
    %s68 = sadd.s32 %s67, 1
    %s69 = scalar_select %p66, %s67, %s68
    %p72 = pneg %p66
    %p73 = scmp.eq.s32.totalorder %s10, 1
    %p74 = por %p72, %p73
    %p75 = scmp.ne.s32.totalorder %s67, %s70
    %p76 = scmp.eq.s32.totalorder %s10, 0
    %p77 = por %p75, %p76
    %p78 = scmp.ne.s32.totalorder %s67, %s70
    %p79 = scmp.eq.s32.totalorder %s15, 1
    %p80 = por %p78, %p79
    %p81 = scmp.ne.s32.totalorder %s70, %s71
    %p82 = scmp.eq.s32.totalorder %s15, 0
    %p83 = por %p81, %p82
    %p84 = scmp.ne.s32.totalorder %s70, %s71
    %p85 = scmp.eq.s32.totalorder %s16, 1
    %p86 = por %p84, %p85
    %p88 = scmp.ne.s32.totalorder %s71, %s87
    %p89 = scmp.eq.s32.totalorder %s16, 0
    %p90 = por %p88, %p89
    %s91 = ssub.s32 %s10, %s17
    %p92 = scmp.eq.s32.totalorder %s91, 0
    %s94 = sadd.s32 %s93, 1
    %s95 = scalar_select %p92, %s93, %s94
    %p98 = pneg %p92
    %p99 = scmp.eq.s32.totalorder %s10, 1
    %p100 = por %p98, %p99
    %p101 = scmp.ne.s32.totalorder %s93, %s96
    %p102 = scmp.eq.s32.totalorder %s10, 0
    %p103 = por %p101, %p102
    %p104 = scmp.ne.s32.totalorder %s93, %s96
    %p105 = scmp.eq.s32.totalorder %s15, 1
    %p106 = por %p104, %p105
    %p107 = scmp.ne.s32.totalorder %s96, %s97
    %p108 = scmp.eq.s32.totalorder %s15, 0
    %p109 = por %p107, %p108
    %p110 = scmp.ne.s32.totalorder %s96, %s97
    %p111 = scmp.eq.s32.totalorder %s16, 1
    %p112 = por %p110, %p111
    %p114 = scmp.ne.s32.totalorder %s97, %s113
    %p115 = scmp.eq.s32.totalorder %s16, 0
    %p116 = por %p114, %p115
    %p117 = scmp.le.s32.totalorder 1, %s10
    %p118 = scmp.lt.s32.totalorder %s10, 3
    %p119 = pnand %p117, %p118
    %p120 = pneg %p119
    // Predicated region
    $region9: #{basic_block_forward.4} parent=5 // pred_check
      _
    $region10: #{basic_block_forward.4} parent=5 // pred_check_branch
      %122 = sbr.rel (%p119) target = $region12
    $region11: #{basic_block_forward.4} parent=5 // pred_region
      %s123 = ssub.s32 %s10, 1
      // Predicated region
      $region13: #{basic_block_forward.4} parent=11 // pred_check
        %p124 = pneg %p57
      $region14: #{basic_block_forward.4} parent=11 // pred_check_branch
        %126 = sbr.rel (%p124) target = $region16
      $region15: #{basic_block_forward.4} parent=11 // pred_region
        _
      $region16: #{basic_block_forward.4} parent=11 // pred_fallthru
        _
    $region12: #{basic_block_forward.4} parent=5 // pred_fallthru
      _
    %p127 = scmp.lt.s32.totalorder %s10, 2
    // Predicated region
    $region17: #{basic_block_forward.4} parent=5 // pred_check
      %p128 = pneg %p127
    $region18: #{basic_block_forward.4} parent=5 // pred_check_branch
      %130 = sbr.rel (%p128) target = $region20
    $region19: #{basic_block_forward.4} parent=5 // pred_region
      // Predicated region
      $region21: #{basic_block_forward.4} parent=19 // pred_check
        %p131 = pneg %p30
      $region22: #{basic_block_forward.4} parent=19 // pred_check_branch
        %133 = sbr.rel (%p131) target = $region24
      $region23: #{basic_block_forward.4} parent=19 // pred_region
        %p134 = scmp.lt.s32.totalorder %s10, 1
        %s135 = scalar_select %p134, %s10, 1
        %s136 = smul.addr %s135, 72
        %s137 = smul.addr %s136, 4
        %s138 = scalar_lea.vmem %s0, %s137
      $region24: #{basic_block_forward.4} parent=19 // pred_fallthru
        _
    $region20: #{basic_block_forward.4} parent=5 // pred_fallthru
      _
    %p139 = scmp.le.s32.totalorder 1, %s10
    %p140 = scmp.lt.s32.totalorder %s10, 3
    %p141 = pnand %p139, %p140
    %p142 = pneg %p141
    // Predicated region
    $region25: #{basic_block_forward.4} parent=5 // pred_check
      _
    $region26: #{basic_block_forward.4} parent=5 // pred_check_branch
      %144 = sbr.rel (%p141) target = $region28
    $region27: #{basic_block_forward.4} parent=5 // pred_region
      %s145 = ssub.s32 %s10, 1
      %p146 = scmp.lt.s32.totalorder %s15, 1
      %s147 = scalar_select %p146, %s15, 1
      %s148 = smul.addr %s147, 72
      %s149 = smul.addr %s148, 4
      %s150 = scalar_lea.vmem %s0, %s149
      %p151 = pneg %p36
      %p152 = pneg %p33
      %p153 = pneg %p57
      %p154 = pneg %p54
      %p155 = pneg %p83
      %p156 = pneg %p80
      %p157 = scmp.lt.s32.totalorder %s15, 1
      %s158 = scalar_select %p157, %s15, 1
      %s159 = smul.addr %s158, 8
      %s160 = smul.addr %s159, 4
      %s161 = scalar_lea.vmem %s2, %s160
      %p162 = pneg %p109
      %p163 = pneg %p106
      %p164 = scmp.lt.s32.totalorder %s15, 1
      %s165 = scalar_select %p164, %s15, 1
      %s166 = smul.addr %s165, 8
      %s167 = scalar_lea.vmem %s3, %s166
      %p168 = scmp.lt.s32.totalorder %s15, 1
      %s169 = scalar_select %p168, %s15, 1
      %s170 = smul.addr %s169, 72
      %s171 = smul.addr %s170, 4
      %s172 = scalar_lea.vmem %s0, %s171
      %p173 = scmp.lt.s32.totalorder %s15, 1
      %s174 = scalar_select %p173, %s15, 1
      %s175 = smul.addr %s174, 8
      %s176 = smul.addr %s175, 4
      %s177 = scalar_lea.vmem %s2, %s176
      %p178 = scmp.lt.s32.totalorder %s15, 1
      %s179 = scalar_select %p178, %s15, 1
      %s180 = smul.addr %s179, 8
      %s181 = scalar_lea.vmem %s3, %s180
      %v183 = vld [vmem:[%s172] sm:$0xf]
      %v184 = vld [vmem:[%s172 + $0x8] sm:$0xf]
      %v185 = vld [vmem:[%s172 + $0x10] sm:$0xf]
      %v186 = vld [vmem:[%s172 + $0x18] sm:$0xf]
      %v187 = vld [vmem:[%s172 + $0x20] sm:$0xf]
      %v188 = vld [vmem:[%s172 + $0x28] sm:$0xf]
      %v189 = vld [vmem:[%s172 + $0x30] sm:$0xf]
      %v190 = vld [vmem:[%s172 + $0x38] sm:$0xf]
      %s191 = scalar_lea.vmem %s172, 72
      %v192 = vld [vmem:[%s191] sm:$0xf]
      %v193 = vld [vmem:[%s191 + $0x8] sm:$0xf]
      %v194 = vld [vmem:[%s191 + $0x10] sm:$0xf]
      %v195 = vld [vmem:[%s191 + $0x18] sm:$0xf]
      %v196 = vld [vmem:[%s191 + $0x20] sm:$0xf]
      %v197 = vld [vmem:[%s191 + $0x28] sm:$0xf]
      %v198 = vld [vmem:[%s191 + $0x30] sm:$0xf]
      %v199 = vld [vmem:[%s191 + $0x38] sm:$0xf]
      %v200 = vld [vmem:[%s172 + $0x4] sm:$0x1]
      %v201 = vld [vmem:[%s172 + $0xc] sm:$0x1]
      %v202 = vld [vmem:[%s172 + $0x14] sm:$0x1]
      %v203 = vld [vmem:[%s172 + $0x1c] sm:$0x1]
      %v204 = vld [vmem:[%s172 + $0x24] sm:$0x1]
      %v205 = vld [vmem:[%s172 + $0x2c] sm:$0x1]
      %v206 = vld [vmem:[%s172 + $0x34] sm:$0x1]
      %v207 = vld [vmem:[%s172 + $0x3c] sm:$0x1]
      %vm208 = vsmask.f32 3328
      %vm209 = vsmask.f32 7440
      %vm210 = vmor %vm208, %vm209
      %v212 = vshrl.u32 %v183, 16
      %v214 = vrot.slane %v212, 4
      %v215 = vshll.u32 %v183, 16
      %v217 = vrot.slane %v215, 5
      %v218 = vor.u32 %v214, %v217
      %v219 = vrot.slane %v218, 4
      %v221 = vshll.u32 %v200, 16
      %v223 = vrot.slane %v221, 5
      %v224 = vsel %vm210, %v219, %v223
      %v226 = vshrl.u32 %v184, 16
      %v228 = vrot.slane %v226, 4
      %v229 = vshll.u32 %v184, 16
      %v231 = vrot.slane %v229, 5
      %v232 = vor.u32 %v228, %v231
      %v233 = vrot.slane %v232, 4
      %v235 = vshll.u32 %v201, 16
      %v237 = vrot.slane %v235, 5
      %v238 = vsel %vm210, %v233, %v237
      %v240 = vshrl.u32 %v185, 16
      %v242 = vrot.slane %v240, 4
      %v243 = vshll.u32 %v185, 16
      %v245 = vrot.slane %v243, 5
      %v246 = vor.u32 %v242, %v245
      %v247 = vrot.slane %v246, 4
      %v249 = vshll.u32 %v202, 16
      %v251 = vrot.slane %v249, 5
      %v252 = vsel %vm210, %v247, %v251
      %v254 = vshrl.u32 %v186, 16
      %v256 = vrot.slane %v254, 4
      %v257 = vshll.u32 %v186, 16
      %v259 = vrot.slane %v257, 5
      %v260 = vor.u32 %v256, %v259
      %v261 = vrot.slane %v260, 4
      %v263 = vshll.u32 %v203, 16
      %v265 = vrot.slane %v263, 5
      %v266 = vsel %vm210, %v261, %v265
      %v268 = vshrl.u32 %v187, 16
      %v270 = vrot.slane %v268, 4
      %v271 = vshll.u32 %v187, 16
      %v273 = vrot.slane %v271, 5
      %v274 = vor.u32 %v270, %v273
      %v275 = vrot.slane %v274, 4
      %v277 = vshll.u32 %v204, 16
      %v279 = vrot.slane %v277, 5
      %v280 = vsel %vm210, %v275, %v279
      %v282 = vshrl.u32 %v188, 16
      %v284 = vrot.slane %v282, 4
      %v285 = vshll.u32 %v188, 16
      %v287 = vrot.slane %v285, 5
      %v288 = vor.u32 %v284, %v287
      %v289 = vrot.slane %v288, 4
      %v291 = vshll.u32 %v205, 16
      %v293 = vrot.slane %v291, 5
      %v294 = vsel %vm210, %v289, %v293
      %v296 = vshrl.u32 %v189, 16
      %v298 = vrot.slane %v296, 4
      %v299 = vshll.u32 %v189, 16
      %v301 = vrot.slane %v299, 5
      %v302 = vor.u32 %v298, %v301
      %v303 = vrot.slane %v302, 4
      %v305 = vshll.u32 %v206, 16
      %v307 = vrot.slane %v305, 5
      %v308 = vsel %vm210, %v303, %v307
      %v310 = vshrl.u32 %v190, 16
      %v312 = vrot.slane %v310, 4
      %v313 = vshll.u32 %v190, 16
      %v315 = vrot.slane %v313, 5
      %v316 = vor.u32 %v312, %v315
      %v317 = vrot.slane %v316, 4
      %v319 = vshll.u32 %v207, 16
      %v321 = vrot.slane %v319, 5
      %v322 = vsel %vm210, %v317, %v321
      %s323 = scalar_lea.vmem %s172, 144
      %v324 = vld [vmem:[%s323] sm:$0xf]
      %v325 = vld [vmem:[%s323 + $0x8] sm:$0xf]
      %v326 = vld [vmem:[%s323 + $0x10] sm:$0xf]
      %v327 = vld [vmem:[%s323 + $0x18] sm:$0xf]
      %v328 = vld [vmem:[%s323 + $0x20] sm:$0xf]
      %v329 = vld [vmem:[%s323 + $0x28] sm:$0xf]
      %v330 = vld [vmem:[%s323 + $0x30] sm:$0xf]
      %v331 = vld [vmem:[%s323 + $0x38] sm:$0xf]
      %s332 = scalar_lea.vmem %s172, 216
      %v333 = vld [vmem:[%s332] sm:$0xf]
      %v334 = vld [vmem:[%s332 + $0x8] sm:$0xf]
      %v335 = vld [vmem:[%s332 + $0x10] sm:$0xf]
      %v336 = vld [vmem:[%s332 + $0x18] sm:$0xf]
      %v337 = vld [vmem:[%s332 + $0x20] sm:$0xf]
      %v338 = vld [vmem:[%s332 + $0x28] sm:$0xf]
      %v339 = vld [vmem:[%s332 + $0x30] sm:$0xf]
      %v340 = vld [vmem:[%s332 + $0x38] sm:$0xf]
      %v341 = vld [vmem:[%s323 + $0x4] sm:$0x1]
      %v342 = vld [vmem:[%s323 + $0xc] sm:$0x1]
      %v343 = vld [vmem:[%s323 + $0x14] sm:$0x1]
      %v344 = vld [vmem:[%s323 + $0x1c] sm:$0x1]
      %v345 = vld [vmem:[%s323 + $0x24] sm:$0x1]
      %v346 = vld [vmem:[%s323 + $0x2c] sm:$0x1]
      %v347 = vld [vmem:[%s323 + $0x34] sm:$0x1]
      %v348 = vld [vmem:[%s323 + $0x3c] sm:$0x1]
      %v350 = vshrl.u32 %v324, 16
      %v352 = vrot.slane %v350, 4
      %v353 = vshll.u32 %v324, 16
      %v355 = vrot.slane %v353, 5
      %v356 = vor.u32 %v352, %v355
      %v357 = vrot.slane %v356, 4
      %v359 = vshll.u32 %v341, 16
      %v361 = vrot.slane %v359, 5
      %v362 = vsel %vm210, %v357, %v361
      %v364 = vshrl.u32 %v325, 16
      %v366 = vrot.slane %v364, 4
      %v367 = vshll.u32 %v325, 16
      %v369 = vrot.slane %v367, 5
      %v370 = vor.u32 %v366, %v369
      %v371 = vrot.slane %v370, 4
      %v373 = vshll.u32 %v342, 16
      %v375 = vrot.slane %v373, 5
      %v376 = vsel %vm210, %v371, %v375
      %v378 = vshrl.u32 %v326, 16
      %v380 = vrot.slane %v378, 4
      %v381 = vshll.u32 %v326, 16
      %v383 = vrot.slane %v381, 5
      %v384 = vor.u32 %v380, %v383
      %v385 = vrot.slane %v384, 4
      %v387 = vshll.u32 %v343, 16
      %v389 = vrot.slane %v387, 5
      %v390 = vsel %vm210, %v385, %v389
      %v392 = vshrl.u32 %v327, 16
      %v394 = vrot.slane %v392, 4
      %v395 = vshll.u32 %v327, 16
      %v397 = vrot.slane %v395, 5
      %v398 = vor.u32 %v394, %v397
      %v399 = vrot.slane %v398, 4
      %v401 = vshll.u32 %v344, 16
      %v403 = vrot.slane %v401, 5
      %v404 = vsel %vm210, %v399, %v403
      %v406 = vshrl.u32 %v328, 16
      %v408 = vrot.slane %v406, 4
      %v409 = vshll.u32 %v328, 16
      %v411 = vrot.slane %v409, 5
      %v412 = vor.u32 %v408, %v411
      %v413 = vrot.slane %v412, 4
      %v415 = vshll.u32 %v345, 16
      %v417 = vrot.slane %v415, 5
      %v418 = vsel %vm210, %v413, %v417
      %v420 = vshrl.u32 %v329, 16
      %v422 = vrot.slane %v420, 4
      %v423 = vshll.u32 %v329, 16
      %v425 = vrot.slane %v423, 5
      %v426 = vor.u32 %v422, %v425
      %v427 = vrot.slane %v426, 4
      %v429 = vshll.u32 %v346, 16
      %v431 = vrot.slane %v429, 5
      %v432 = vsel %vm210, %v427, %v431
      %v434 = vshrl.u32 %v330, 16
      %v436 = vrot.slane %v434, 4
      %v437 = vshll.u32 %v330, 16
      %v439 = vrot.slane %v437, 5
      %v440 = vor.u32 %v436, %v439
      %v441 = vrot.slane %v440, 4
      %v443 = vshll.u32 %v347, 16
      %v445 = vrot.slane %v443, 5
      %v446 = vsel %vm210, %v441, %v445
      %v448 = vshrl.u32 %v331, 16
      %v450 = vrot.slane %v448, 4
      %v451 = vshll.u32 %v331, 16
      %v453 = vrot.slane %v451, 5
      %v454 = vor.u32 %v450, %v453
      %v455 = vrot.slane %v454, 4
      %v457 = vshll.u32 %v348, 16
      %v459 = vrot.slane %v457, 5
      %v460 = vsel %vm210, %v455, %v459
      %s461 = scalar_lea.vmem %s172, 8
      %v462 = vld [vmem:[%s461] sm:$0xf]
      %v463 = vld [vmem:[%s461 + $0x8] sm:$0xf]
      %v464 = vld [vmem:[%s461 + $0x10] sm:$0xf]
      %v465 = vld [vmem:[%s461 + $0x18] sm:$0xf]
      %v466 = vld [vmem:[%s461 + $0x20] sm:$0xf]
      %v467 = vld [vmem:[%s461 + $0x28] sm:$0xf]
      %v468 = vld [vmem:[%s461 + $0x30] sm:$0xf]
      %v469 = vld [vmem:[%s461 + $0x38] sm:$0xf]
      %s470 = scalar_lea.vmem %s172, 80
      %v471 = vld [vmem:[%s470] sm:$0xf]
      %v472 = vld [vmem:[%s470 + $0x8] sm:$0xf]
      %v473 = vld [vmem:[%s470 + $0x10] sm:$0xf]
      %v474 = vld [vmem:[%s470 + $0x18] sm:$0xf]
      %v475 = vld [vmem:[%s470 + $0x20] sm:$0xf]
      %v476 = vld [vmem:[%s470 + $0x28] sm:$0xf]
      %v477 = vld [vmem:[%s470 + $0x30] sm:$0xf]
      %v478 = vld [vmem:[%s470 + $0x38] sm:$0xf]
      %v479 = vld [vmem:[%s461 + $0x4] sm:$0x1]
      %v480 = vld [vmem:[%s461 + $0xc] sm:$0x1]
      %v481 = vld [vmem:[%s461 + $0x14] sm:$0x1]
      %v482 = vld [vmem:[%s461 + $0x1c] sm:$0x1]
      %v483 = vld [vmem:[%s461 + $0x24] sm:$0x1]
      %v484 = vld [vmem:[%s461 + $0x2c] sm:$0x1]
      %v485 = vld [vmem:[%s461 + $0x34] sm:$0x1]
      %v486 = vld [vmem:[%s461 + $0x3c] sm:$0x1]
      %v488 = vshrl.u32 %v462, 16
      %v490 = vrot.slane %v488, 4
      %v491 = vshll.u32 %v462, 16
      %v493 = vrot.slane %v491, 5
      %v494 = vor.u32 %v490, %v493
      %v495 = vrot.slane %v494, 4
      %v497 = vshll.u32 %v479, 16
      %v499 = vrot.slane %v497, 5
      %v500 = vsel %vm210, %v495, %v499
      %v502 = vshrl.u32 %v463, 16
      %v504 = vrot.slane %v502, 4
      %v505 = vshll.u32 %v463, 16
      %v507 = vrot.slane %v505, 5
      %v508 = vor.u32 %v504, %v507
      %v509 = vrot.slane %v508, 4
      %v511 = vshll.u32 %v480, 16
      %v513 = vrot.slane %v511, 5
      %v514 = vsel %vm210, %v509, %v513
      %v516 = vshrl.u32 %v464, 16
      %v518 = vrot.slane %v516, 4
      %v519 = vshll.u32 %v464, 16
      %v521 = vrot.slane %v519, 5
      %v522 = vor.u32 %v518, %v521
      %v523 = vrot.slane %v522, 4
      %v525 = vshll.u32 %v481, 16
      %v527 = vrot.slane %v525, 5
      %v528 = vsel %vm210, %v523, %v527
      %v530 = vshrl.u32 %v465, 16
      %v532 = vrot.slane %v530, 4
      %v533 = vshll.u32 %v465, 16
      %v535 = vrot.slane %v533, 5
      %v536 = vor.u32 %v532, %v535
      %v537 = vrot.slane %v536, 4
      %v539 = vshll.u32 %v482, 16
      %v541 = vrot.slane %v539, 5
      %v542 = vsel %vm210, %v537, %v541
      %v544 = vshrl.u32 %v466, 16
      %v546 = vrot.slane %v544, 4
      %v547 = vshll.u32 %v466, 16
      %v549 = vrot.slane %v547, 5
      %v550 = vor.u32 %v546, %v549
      %v551 = vrot.slane %v550, 4
      %v553 = vshll.u32 %v483, 16
      %v555 = vrot.slane %v553, 5
      %v556 = vsel %vm210, %v551, %v555
      %v558 = vshrl.u32 %v467, 16
      %v560 = vrot.slane %v558, 4
      %v561 = vshll.u32 %v467, 16
      %v563 = vrot.slane %v561, 5
      %v564 = vor.u32 %v560, %v563
      %v565 = vrot.slane %v564, 4
      %v567 = vshll.u32 %v484, 16
      %v569 = vrot.slane %v567, 5
      %v570 = vsel %vm210, %v565, %v569
      %v572 = vshrl.u32 %v468, 16
      %v574 = vrot.slane %v572, 4
      %v575 = vshll.u32 %v468, 16
      %v577 = vrot.slane %v575, 5
      %v578 = vor.u32 %v574, %v577
      %v579 = vrot.slane %v578, 4
      %v581 = vshll.u32 %v485, 16
      %v583 = vrot.slane %v581, 5
      %v584 = vsel %vm210, %v579, %v583
      %v586 = vshrl.u32 %v469, 16
      %v588 = vrot.slane %v586, 4
      %v589 = vshll.u32 %v469, 16
      %v591 = vrot.slane %v589, 5
      %v592 = vor.u32 %v588, %v591
      %v593 = vrot.slane %v592, 4
      %v595 = vshll.u32 %v486, 16
      %v597 = vrot.slane %v595, 5
      %v598 = vsel %vm210, %v593, %v597
      %v607 = vunpack.c.l.b16 %v183
      %v608 = vunpack.c.l.b16 %v184
      %v609 = vunpack.c.l.b16 %v185
      %v610 = vunpack.c.l.b16 %v186
      %v611 = vunpack.c.l.b16 %v187
      %v612 = vunpack.c.l.b16 %v188
      %v613 = vunpack.c.l.b16 %v189
      %v614 = vunpack.c.l.b16 %v190
      %v615 = vpack.c.b16 %v608, %v607
      %v616 = vpack.c.b16 %v610, %v609
      %v617 = vpack.c.b16 %v612, %v611
      %v618 = vpack.c.b16 %v614, %v613
      %v631 = vunpack.c.l.b16 %v192
      %v632 = vunpack.c.l.b16 %v193
      %v633 = vunpack.c.l.b16 %v194
      %v634 = vunpack.c.l.b16 %v195
      %v635 = vunpack.c.l.b16 %v196
      %v636 = vunpack.c.l.b16 %v197
      %v637 = vunpack.c.l.b16 %v198
      %v638 = vunpack.c.l.b16 %v199
      %v639 = vpack.c.b16 %v632, %v631
      %v640 = vpack.c.b16 %v634, %v633
      %v641 = vpack.c.b16 %v636, %v635
      %v642 = vpack.c.b16 %v638, %v637
      %v647 = vunpack.c.l.b16 %v224
      %v648 = vunpack.c.l.b16 %v238
      %v649 = vunpack.c.l.b16 %v252
      %v650 = vunpack.c.l.b16 %v266
      %v651 = vunpack.c.l.b16 %v280
      %v652 = vunpack.c.l.b16 %v294
      %v653 = vunpack.c.l.b16 %v308
      %v654 = vunpack.c.l.b16 %v322
      %v655 = vpack.c.b16 %v648, %v647
      %v656 = vpack.c.b16 %v650, %v649
      %v657 = vpack.c.b16 %v652, %v651
      %v658 = vpack.c.b16 %v654, %v653
      %v671 = vunpack.c.l.b16 %v324
      %v672 = vunpack.c.l.b16 %v325
      %v673 = vunpack.c.l.b16 %v326
      %v674 = vunpack.c.l.b16 %v327
      %v675 = vunpack.c.l.b16 %v328
      %v676 = vunpack.c.l.b16 %v329
      %v677 = vunpack.c.l.b16 %v330
      %v678 = vunpack.c.l.b16 %v331
      %v679 = vpack.c.b16 %v672, %v671
      %v680 = vpack.c.b16 %v674, %v673
      %v681 = vpack.c.b16 %v676, %v675
      %v682 = vpack.c.b16 %v678, %v677
      %v695 = vunpack.c.l.b16 %v333
      %v696 = vunpack.c.l.b16 %v334
      %v697 = vunpack.c.l.b16 %v335
      %v698 = vunpack.c.l.b16 %v336
      %v699 = vunpack.c.l.b16 %v337
      %v700 = vunpack.c.l.b16 %v338
      %v701 = vunpack.c.l.b16 %v339
      %v702 = vunpack.c.l.b16 %v340
      %v703 = vpack.c.b16 %v696, %v695
      %v704 = vpack.c.b16 %v698, %v697
      %v705 = vpack.c.b16 %v700, %v699
      %v706 = vpack.c.b16 %v702, %v701
      %v711 = vunpack.c.l.b16 %v362
      %v712 = vunpack.c.l.b16 %v376
      %v713 = vunpack.c.l.b16 %v390
      %v714 = vunpack.c.l.b16 %v404
      %v715 = vunpack.c.l.b16 %v418
      %v716 = vunpack.c.l.b16 %v432
      %v717 = vunpack.c.l.b16 %v446
      %v718 = vunpack.c.l.b16 %v460
      %v719 = vpack.c.b16 %v712, %v711
      %v720 = vpack.c.b16 %v714, %v713
      %v721 = vpack.c.b16 %v716, %v715
      %v722 = vpack.c.b16 %v718, %v717
      %v735 = vunpack.c.l.b16 %v462
      %v736 = vunpack.c.l.b16 %v463
      %v737 = vunpack.c.l.b16 %v464
      %v738 = vunpack.c.l.b16 %v465
      %v739 = vunpack.c.l.b16 %v466
      %v740 = vunpack.c.l.b16 %v467
      %v741 = vunpack.c.l.b16 %v468
      %v742 = vunpack.c.l.b16 %v469
      %v743 = vpack.c.b16 %v736, %v735
      %v744 = vpack.c.b16 %v738, %v737
      %v745 = vpack.c.b16 %v740, %v739
      %v746 = vpack.c.b16 %v742, %v741
      %v759 = vunpack.c.l.b16 %v471
      %v760 = vunpack.c.l.b16 %v472
      %v761 = vunpack.c.l.b16 %v473
      %v762 = vunpack.c.l.b16 %v474
      %v763 = vunpack.c.l.b16 %v475
      %v764 = vunpack.c.l.b16 %v476
      %v765 = vunpack.c.l.b16 %v477
      %v766 = vunpack.c.l.b16 %v478
      %v767 = vpack.c.b16 %v760, %v759
      %v768 = vpack.c.b16 %v762, %v761
      %v769 = vpack.c.b16 %v764, %v763
      %v770 = vpack.c.b16 %v766, %v765
      %v775 = vunpack.c.l.b16 %v500
      %v776 = vunpack.c.l.b16 %v514
      %v777 = vunpack.c.l.b16 %v528
      %v778 = vunpack.c.l.b16 %v542
      %v779 = vunpack.c.l.b16 %v556
      %v780 = vunpack.c.l.b16 %v570
      %v781 = vunpack.c.l.b16 %v584
      %v782 = vunpack.c.l.b16 %v598
      %v783 = vpack.c.b16 %v776, %v775
      %v784 = vpack.c.b16 %v778, %v777
      %v785 = vpack.c.b16 %v780, %v779
      %v786 = vpack.c.b16 %v782, %v781
      %v791 = vld [vmem:[%s1] sm:$0xf]
      %v792 = vld [vmem:[%s1 + $0x4] sm:$0xf]
      %v793 = vld [vmem:[%s1 + $0x8] sm:$0xf]
      %v794 = vld [vmem:[%s1 + $0xc] sm:$0xf]
      %v795 = vld [vmem:[%s1 + $0x10] sm:$0xf]
      %v796 = vld [vmem:[%s1 + $0x14] sm:$0xf]
      %v797 = vld [vmem:[%s1 + $0x18] sm:$0xf]
      %v798 = vld [vmem:[%s1 + $0x1c] sm:$0xf]
      %v799 = vld [vmem:[%s1 + $0x20] sm:$0xf]
      %v800 = vld [vmem:[%s1 + $0x24] sm:$0xf]
      %v801 = vld [vmem:[%s1 + $0x28] sm:$0xf]
      %v802 = vld [vmem:[%s1 + $0x2c] sm:$0xf]
      %v803 = vld [vmem:[%s1 + $0x30] sm:$0xf]
      %v804 = vld [vmem:[%s1 + $0x34] sm:$0xf]
      %v805 = vld [vmem:[%s1 + $0x38] sm:$0xf]
      %v806 = vld [vmem:[%s1 + $0x3c] sm:$0xf]
      %v807 = vld [vmem:[%s1 + $0x40] sm:$0xf]
      %v808 = vld [vmem:[%s1 + $0x44] sm:$0xf]
      %v809 = vld [vmem:[%s1 + $0x48] sm:$0xf]
      %v810 = vld [vmem:[%s1 + $0x4c] sm:$0xf]
      %v811 = vld [vmem:[%s1 + $0x50] sm:$0xf]
      %v812 = vld [vmem:[%s1 + $0x54] sm:$0xf]
      %v813 = vld [vmem:[%s1 + $0x58] sm:$0xf]
      %v814 = vld [vmem:[%s1 + $0x5c] sm:$0xf]
      %v815 = vld [vmem:[%s1 + $0x60] sm:$0xf]
      %v816 = vld [vmem:[%s1 + $0x64] sm:$0xf]
      %v817 = vld [vmem:[%s1 + $0x68] sm:$0xf]
      %v818 = vld [vmem:[%s1 + $0x6c] sm:$0xf]
      %v819 = vld [vmem:[%s1 + $0x70] sm:$0xf]
      %v820 = vld [vmem:[%s1 + $0x74] sm:$0xf]
      %v821 = vld [vmem:[%s1 + $0x78] sm:$0xf]
      %v822 = vld [vmem:[%s1 + $0x7c] sm:$0xf]
      %v823 = vld [vmem:[%s1 + $0x80] sm:$0xf]
      %v824 = vld [vmem:[%s1 + $0x84] sm:$0xf]
      %v825 = vld [vmem:[%s1 + $0x88] sm:$0xf]
      %v826 = vld [vmem:[%s1 + $0x8c] sm:$0xf]
      %v827 = vld [vmem:[%s1 + $0x90] sm:$0xf]
      %v828 = vld [vmem:[%s1 + $0x94] sm:$0xf]
      %v829 = vld [vmem:[%s1 + $0x98] sm:$0xf]
      %v830 = vld [vmem:[%s1 + $0x9c] sm:$0xf]
      %v831 = vld [vmem:[%s1 + $0xa0] sm:$0xf]
      %v832 = vld [vmem:[%s1 + $0xa4] sm:$0xf]
      %v833 = vld [vmem:[%s1 + $0xa8] sm:$0xf]
      %v834 = vld [vmem:[%s1 + $0xac] sm:$0xf]
      %v835 = vld [vmem:[%s1 + $0xb0] sm:$0xf]
      %v836 = vld [vmem:[%s1 + $0xb4] sm:$0xf]
      %v837 = vld [vmem:[%s1 + $0xb8] sm:$0xf]
      %v838 = vld [vmem:[%s1 + $0xbc] sm:$0xf]
      %v839 = vld [vmem:[%s1 + $0xc0] sm:$0xf]
      %v840 = vld [vmem:[%s1 + $0xc4] sm:$0xf]
      %v841 = vld [vmem:[%s1 + $0xc8] sm:$0xf]
      %v842 = vld [vmem:[%s1 + $0xcc] sm:$0xf]
      %v843 = vld [vmem:[%s1 + $0xd0] sm:$0xf]
      %v844 = vld [vmem:[%s1 + $0xd4] sm:$0xf]
      %v845 = vld [vmem:[%s1 + $0xd8] sm:$0xf]
      %v846 = vld [vmem:[%s1 + $0xdc] sm:$0xf]
      %v847 = vld [vmem:[%s1 + $0xe0] sm:$0xf]
      %v848 = vld [vmem:[%s1 + $0xe4] sm:$0xf]
      %v849 = vld [vmem:[%s1 + $0xe8] sm:$0xf]
      %v850 = vld [vmem:[%s1 + $0xec] sm:$0xf]
      %v851 = vld [vmem:[%s1 + $0xf0] sm:$0xf]
      %v852 = vld [vmem:[%s1 + $0xf4] sm:$0xf]
      %v853 = vld [vmem:[%s1 + $0xf8] sm:$0xf]
      %v854 = vld [vmem:[%s1 + $0xfc] sm:$0xf]
      %v855 = vld [vmem:[%s1 + $0x100] sm:$0xf]
      %v856 = vld [vmem:[%s1 + $0x104] sm:$0xf]
      %v857 = vld [vmem:[%s1 + $0x108] sm:$0xf]
      %v858 = vld [vmem:[%s1 + $0x10c] sm:$0xf]
      %v859 = vld [vmem:[%s1 + $0x110] sm:$0xf]
      %v860 = vld [vmem:[%s1 + $0x114] sm:$0xf]
      %v861 = vld [vmem:[%s1 + $0x118] sm:$0xf]
      %v862 = vld [vmem:[%s1 + $0x11c] sm:$0xf]
      %v863 = vld [vmem:[%s1 + $0x120] sm:$0xf]
      %v864 = vld [vmem:[%s1 + $0x124] sm:$0xf]
      %v865 = vld [vmem:[%s1 + $0x128] sm:$0xf]
      %v866 = vld [vmem:[%s1 + $0x12c] sm:$0xf]
      %v867 = vld [vmem:[%s1 + $0x130] sm:$0xf]
      %v868 = vld [vmem:[%s1 + $0x134] sm:$0xf]
      %v869 = vld [vmem:[%s1 + $0x138] sm:$0xf]
      %v870 = vld [vmem:[%s1 + $0x13c] sm:$0xf]
      %v871 = vld [vmem:[%s1 + $0x140] sm:$0xf]
      %v872 = vld [vmem:[%s1 + $0x144] sm:$0xf]
      %v873 = vld [vmem:[%s1 + $0x148] sm:$0xf]
      %v874 = vld [vmem:[%s1 + $0x14c] sm:$0xf]
      %v875 = vld [vmem:[%s1 + $0x150] sm:$0xf]
      %v876 = vld [vmem:[%s1 + $0x154] sm:$0xf]
      %v877 = vld [vmem:[%s1 + $0x158] sm:$0xf]
      %v878 = vld [vmem:[%s1 + $0x15c] sm:$0xf]
      %v879 = vld [vmem:[%s1 + $0x160] sm:$0xf]
      %v880 = vld [vmem:[%s1 + $0x164] sm:$0xf]
      %v881 = vld [vmem:[%s1 + $0x168] sm:$0xf]
      %v882 = vld [vmem:[%s1 + $0x16c] sm:$0xf]
      %v883 = vld [vmem:[%s1 + $0x170] sm:$0xf]
      %v884 = vld [vmem:[%s1 + $0x174] sm:$0xf]
      %v885 = vld [vmem:[%s1 + $0x178] sm:$0xf]
      %v886 = vld [vmem:[%s1 + $0x17c] sm:$0xf]
      %v887 = vld [vmem:[%s1 + $0x180] sm:$0xf]
      %v888 = vld [vmem:[%s1 + $0x184] sm:$0xf]
      %v889 = vld [vmem:[%s1 + $0x188] sm:$0xf]
      %v890 = vld [vmem:[%s1 + $0x18c] sm:$0xf]
      %v891 = vld [vmem:[%s1 + $0x190] sm:$0xf]
      %v892 = vld [vmem:[%s1 + $0x194] sm:$0xf]
      %v893 = vld [vmem:[%s1 + $0x198] sm:$0xf]
      %v894 = vld [vmem:[%s1 + $0x19c] sm:$0xf]
      %v895 = vld [vmem:[%s1 + $0x1a0] sm:$0xf]
      %v896 = vld [vmem:[%s1 + $0x1a4] sm:$0xf]
      %v897 = vld [vmem:[%s1 + $0x1a8] sm:$0xf]
      %v898 = vld [vmem:[%s1 + $0x1ac] sm:$0xf]
      %v899 = vld [vmem:[%s1 + $0x1b0] sm:$0xf]
      %v900 = vld [vmem:[%s1 + $0x1b4] sm:$0xf]
      %v901 = vld [vmem:[%s1 + $0x1b8] sm:$0xf]
      %v902 = vld [vmem:[%s1 + $0x1bc] sm:$0xf]
      %v903 = vld [vmem:[%s1 + $0x1c0] sm:$0xf]
      %v904 = vld [vmem:[%s1 + $0x1c4] sm:$0xf]
      %v905 = vld [vmem:[%s1 + $0x1c8] sm:$0xf]
      %v906 = vld [vmem:[%s1 + $0x1cc] sm:$0xf]
      %v907 = vld [vmem:[%s1 + $0x1d0] sm:$0xf]
      %v908 = vld [vmem:[%s1 + $0x1d4] sm:$0xf]
      %v909 = vld [vmem:[%s1 + $0x1d8] sm:$0xf]
      %v910 = vld [vmem:[%s1 + $0x1dc] sm:$0xf]
      %v911 = vld [vmem:[%s1 + $0x1e0] sm:$0xf]
      %v912 = vld [vmem:[%s1 + $0x1e4] sm:$0xf]
      %v913 = vld [vmem:[%s1 + $0x1e8] sm:$0xf]
      %v914 = vld [vmem:[%s1 + $0x1ec] sm:$0xf]
      %v915 = vld [vmem:[%s1 + $0x1f0] sm:$0xf]
      %v916 = vld [vmem:[%s1 + $0x1f4] sm:$0xf]
      %v917 = vld [vmem:[%s1 + $0x1f8] sm:$0xf]
      %v918 = vld [vmem:[%s1 + $0x1fc] sm:$0xf]
      %v919 = vld [vmem:[%s1 + $0x200] sm:$0xf]
      %v920 = vld [vmem:[%s1 + $0x204] sm:$0xf]
      %v921 = vld [vmem:[%s1 + $0x208] sm:$0xf]
      %v922 = vld [vmem:[%s1 + $0x20c] sm:$0xf]
      %v923 = vld [vmem:[%s1 + $0x210] sm:$0xf]
      %v924 = vld [vmem:[%s1 + $0x214] sm:$0xf]
      %v925 = vld [vmem:[%s1 + $0x218] sm:$0xf]
      %v926 = vld [vmem:[%s1 + $0x21c] sm:$0xf]
      %v927 = vld [vmem:[%s1 + $0x220] sm:$0xf]
      %v928 = vld [vmem:[%s1 + $0x224] sm:$0xf]
      %v929 = vld [vmem:[%s1 + $0x228] sm:$0xf]
      %v930 = vld [vmem:[%s1 + $0x22c] sm:$0xf]
      %v931 = vld [vmem:[%s1 + $0x230] sm:$0xf]
      %v932 = vld [vmem:[%s1 + $0x234] sm:$0xf]
      %v933 = vld [vmem:[%s1 + $0x238] sm:$0xf]
      %v934 = vld [vmem:[%s1 + $0x23c] sm:$0xf]
      %v1079 = vunpack.c.l.b16 %v791
      %v1080 = vunpack.c.l.b16 %v792
      %v1081 = vunpack.c.l.b16 %v793
      %v1082 = vunpack.c.l.b16 %v794
      %v1083 = vunpack.c.l.b16 %v795
      %v1084 = vunpack.c.l.b16 %v796
      %v1085 = vunpack.c.l.b16 %v797
      %v1086 = vunpack.c.l.b16 %v798
      %v1087 = vunpack.c.l.b16 %v799
      %v1088 = vunpack.c.l.b16 %v800
      %v1089 = vunpack.c.l.b16 %v801
      %v1090 = vunpack.c.l.b16 %v802
      %v1091 = vunpack.c.l.b16 %v803
      %v1092 = vunpack.c.l.b16 %v804
      %v1093 = vunpack.c.l.b16 %v805
      %v1094 = vunpack.c.l.b16 %v806
      %v1095 = vunpack.c.l.b16 %v807
      %v1096 = vunpack.c.l.b16 %v808
      %v1097 = vunpack.c.l.b16 %v809
      %v1098 = vunpack.c.l.b16 %v810
      %v1099 = vunpack.c.l.b16 %v811
      %v1100 = vunpack.c.l.b16 %v812
      %v1101 = vunpack.c.l.b16 %v813
      %v1102 = vunpack.c.l.b16 %v814
      %v1103 = vunpack.c.l.b16 %v815
      %v1104 = vunpack.c.l.b16 %v816
      %v1105 = vunpack.c.l.b16 %v817
      %v1106 = vunpack.c.l.b16 %v818
      %v1107 = vunpack.c.l.b16 %v819
      %v1108 = vunpack.c.l.b16 %v820
      %v1109 = vunpack.c.l.b16 %v821
      %v1110 = vunpack.c.l.b16 %v822
      %v1111 = vunpack.c.l.b16 %v823
      %v1112 = vunpack.c.l.b16 %v824
      %v1113 = vunpack.c.l.b16 %v825
      %v1114 = vunpack.c.l.b16 %v826
      %v1115 = vunpack.c.l.b16 %v827
      %v1116 = vunpack.c.l.b16 %v828
      %v1117 = vunpack.c.l.b16 %v829
      %v1118 = vunpack.c.l.b16 %v830
      %v1119 = vunpack.c.l.b16 %v831
      %v1120 = vunpack.c.l.b16 %v832
      %v1121 = vunpack.c.l.b16 %v833
      %v1122 = vunpack.c.l.b16 %v834
      %v1123 = vunpack.c.l.b16 %v835
      %v1124 = vunpack.c.l.b16 %v836
      %v1125 = vunpack.c.l.b16 %v837
      %v1126 = vunpack.c.l.b16 %v838
      %v1127 = vunpack.c.l.b16 %v839
      %v1128 = vunpack.c.l.b16 %v840
      %v1129 = vunpack.c.l.b16 %v841
      %v1130 = vunpack.c.l.b16 %v842
      %v1131 = vunpack.c.l.b16 %v843
      %v1132 = vunpack.c.l.b16 %v844
      %v1133 = vunpack.c.l.b16 %v845
      %v1134 = vunpack.c.l.b16 %v846
      %v1135 = vunpack.c.l.b16 %v847
      %v1136 = vunpack.c.l.b16 %v848
      %v1137 = vunpack.c.l.b16 %v849
      %v1138 = vunpack.c.l.b16 %v850
      %v1139 = vunpack.c.l.b16 %v851
      %v1140 = vunpack.c.l.b16 %v852
      %v1141 = vunpack.c.l.b16 %v853
      %v1142 = vunpack.c.l.b16 %v854
      %v1143 = vunpack.c.l.b16 %v855
      %v1144 = vunpack.c.l.b16 %v856
      %v1145 = vunpack.c.l.b16 %v857
      %v1146 = vunpack.c.l.b16 %v858
      %v1147 = vunpack.c.l.b16 %v859
      %v1148 = vunpack.c.l.b16 %v860
      %v1149 = vunpack.c.l.b16 %v861
      %v1150 = vunpack.c.l.b16 %v862
      %v1151 = vunpack.c.l.b16 %v863
      %v1152 = vunpack.c.l.b16 %v864
      %v1153 = vunpack.c.l.b16 %v865
      %v1154 = vunpack.c.l.b16 %v866
      %v1155 = vunpack.c.l.b16 %v867
      %v1156 = vunpack.c.l.b16 %v868
      %v1157 = vunpack.c.l.b16 %v869
      %v1158 = vunpack.c.l.b16 %v870
      %v1159 = vunpack.c.l.b16 %v871
      %v1160 = vunpack.c.l.b16 %v872
      %v1161 = vunpack.c.l.b16 %v873
      %v1162 = vunpack.c.l.b16 %v874
      %v1163 = vunpack.c.l.b16 %v875
      %v1164 = vunpack.c.l.b16 %v876
      %v1165 = vunpack.c.l.b16 %v877
      %v1166 = vunpack.c.l.b16 %v878
      %v1167 = vunpack.c.l.b16 %v879
      %v1168 = vunpack.c.l.b16 %v880
      %v1169 = vunpack.c.l.b16 %v881
      %v1170 = vunpack.c.l.b16 %v882
      %v1171 = vunpack.c.l.b16 %v883
      %v1172 = vunpack.c.l.b16 %v884
      %v1173 = vunpack.c.l.b16 %v885
      %v1174 = vunpack.c.l.b16 %v886
      %v1175 = vunpack.c.l.b16 %v887
      %v1176 = vunpack.c.l.b16 %v888
      %v1177 = vunpack.c.l.b16 %v889
      %v1178 = vunpack.c.l.b16 %v890
      %v1179 = vunpack.c.l.b16 %v891
      %v1180 = vunpack.c.l.b16 %v892
      %v1181 = vunpack.c.l.b16 %v893
      %v1182 = vunpack.c.l.b16 %v894
      %v1183 = vunpack.c.l.b16 %v895
      %v1184 = vunpack.c.l.b16 %v896
      %v1185 = vunpack.c.l.b16 %v897
      %v1186 = vunpack.c.l.b16 %v898
      %v1187 = vunpack.c.l.b16 %v899
      %v1188 = vunpack.c.l.b16 %v900
      %v1189 = vunpack.c.l.b16 %v901
      %v1190 = vunpack.c.l.b16 %v902
      %v1191 = vunpack.c.l.b16 %v903
      %v1192 = vunpack.c.l.b16 %v904
      %v1193 = vunpack.c.l.b16 %v905
      %v1194 = vunpack.c.l.b16 %v906
      %v1195 = vunpack.c.l.b16 %v907
      %v1196 = vunpack.c.l.b16 %v908
      %v1197 = vunpack.c.l.b16 %v909
      %v1198 = vunpack.c.l.b16 %v910
      %v1199 = vunpack.c.l.b16 %v911
      %v1200 = vunpack.c.l.b16 %v912
      %v1201 = vunpack.c.l.b16 %v913
      %v1202 = vunpack.c.l.b16 %v914
      %v1203 = vunpack.c.l.b16 %v915
      %v1204 = vunpack.c.l.b16 %v916
      %v1205 = vunpack.c.l.b16 %v917
      %v1206 = vunpack.c.l.b16 %v918
      %v1207 = vunpack.c.l.b16 %v919
      %v1208 = vunpack.c.l.b16 %v920
      %v1209 = vunpack.c.l.b16 %v921
      %v1210 = vunpack.c.l.b16 %v922
      %v1211 = vunpack.c.l.b16 %v923
      %v1212 = vunpack.c.l.b16 %v924
      %v1213 = vunpack.c.l.b16 %v925
      %v1214 = vunpack.c.l.b16 %v926
      %v1215 = vunpack.c.l.b16 %v927
      %v1216 = vunpack.c.l.b16 %v928
      %v1217 = vunpack.c.l.b16 %v929
      %v1218 = vunpack.c.l.b16 %v930
      %v1219 = vunpack.c.l.b16 %v931
      %v1220 = vunpack.c.l.b16 %v932
      %v1221 = vunpack.c.l.b16 %v933
      %v1222 = vunpack.c.l.b16 %v934
      %v1223 = vpack.c.b16 %v1080, %v1079
      %v1224 = vpack.c.b16 %v1082, %v1081
      %v1225 = vpack.c.b16 %v1084, %v1083
      %v1226 = vpack.c.b16 %v1086, %v1085
      %v1227 = vpack.c.b16 %v1088, %v1087
      %v1228 = vpack.c.b16 %v1090, %v1089
      %v1229 = vpack.c.b16 %v1092, %v1091
      %v1230 = vpack.c.b16 %v1094, %v1093
      %v1231 = vpack.c.b16 %v1096, %v1095
      %v1232 = vpack.c.b16 %v1098, %v1097
      %v1233 = vpack.c.b16 %v1100, %v1099
      %v1234 = vpack.c.b16 %v1102, %v1101
      %v1235 = vpack.c.b16 %v1104, %v1103
      %v1236 = vpack.c.b16 %v1106, %v1105
      %v1237 = vpack.c.b16 %v1108, %v1107
      %v1238 = vpack.c.b16 %v1110, %v1109
      %v1239 = vpack.c.b16 %v1112, %v1111
      %v1240 = vpack.c.b16 %v1114, %v1113
      %v1241 = vpack.c.b16 %v1116, %v1115
      %v1242 = vpack.c.b16 %v1118, %v1117
      %v1243 = vpack.c.b16 %v1120, %v1119
      %v1244 = vpack.c.b16 %v1122, %v1121
      %v1245 = vpack.c.b16 %v1124, %v1123
      %v1246 = vpack.c.b16 %v1126, %v1125
      %v1247 = vpack.c.b16 %v1128, %v1127
      %v1248 = vpack.c.b16 %v1130, %v1129
      %v1249 = vpack.c.b16 %v1132, %v1131
      %v1250 = vpack.c.b16 %v1134, %v1133
      %v1251 = vpack.c.b16 %v1136, %v1135
      %v1252 = vpack.c.b16 %v1138, %v1137
      %v1253 = vpack.c.b16 %v1140, %v1139
      %v1254 = vpack.c.b16 %v1142, %v1141
      %v1255 = vpack.c.b16 %v1144, %v1143
      %v1256 = vpack.c.b16 %v1146, %v1145
      %v1257 = vpack.c.b16 %v1148, %v1147
      %v1258 = vpack.c.b16 %v1150, %v1149
      %v1259 = vpack.c.b16 %v1152, %v1151
      %v1260 = vpack.c.b16 %v1154, %v1153
      %v1261 = vpack.c.b16 %v1156, %v1155
      %v1262 = vpack.c.b16 %v1158, %v1157
      %v1263 = vpack.c.b16 %v1160, %v1159
      %v1264 = vpack.c.b16 %v1162, %v1161
      %v1265 = vpack.c.b16 %v1164, %v1163
      %v1266 = vpack.c.b16 %v1166, %v1165
      %v1267 = vpack.c.b16 %v1168, %v1167
      %v1268 = vpack.c.b16 %v1170, %v1169
      %v1269 = vpack.c.b16 %v1172, %v1171
      %v1270 = vpack.c.b16 %v1174, %v1173
      %v1271 = vpack.c.b16 %v1176, %v1175
      %v1272 = vpack.c.b16 %v1178, %v1177
      %v1273 = vpack.c.b16 %v1180, %v1179
      %v1274 = vpack.c.b16 %v1182, %v1181
      %v1275 = vpack.c.b16 %v1184, %v1183
      %v1276 = vpack.c.b16 %v1186, %v1185
      %v1277 = vpack.c.b16 %v1188, %v1187
      %v1278 = vpack.c.b16 %v1190, %v1189
      %v1279 = vpack.c.b16 %v1192, %v1191
      %v1280 = vpack.c.b16 %v1194, %v1193
      %v1281 = vpack.c.b16 %v1196, %v1195
      %v1282 = vpack.c.b16 %v1198, %v1197
      %v1283 = vpack.c.b16 %v1200, %v1199
      %v1284 = vpack.c.b16 %v1202, %v1201
      %v1285 = vpack.c.b16 %v1204, %v1203
      %v1286 = vpack.c.b16 %v1206, %v1205
      %v1287 = vpack.c.b16 %v1208, %v1207
      %v1288 = vpack.c.b16 %v1210, %v1209
      %v1289 = vpack.c.b16 %v1212, %v1211
      %v1290 = vpack.c.b16 %v1214, %v1213
      %v1291 = vpack.c.b16 %v1216, %v1215
      %v1292 = vpack.c.b16 %v1218, %v1217
      %v1293 = vpack.c.b16 %v1220, %v1219
      %v1294 = vpack.c.b16 %v1222, %v1221
      %1367 = vmatprep.subr.bf16.mxu0 0
      %1368 = vmatpush1.bf16.msra.mxu0 %v1223
      %1369 = vmatprep.subr.bf16.mxu0 0
      %1370 = vmatpush1.bf16.msra.mxu0 %v1224
      %1371 = vmatprep.subr.bf16.mxu0 0
      %1372 = vmatpush1.bf16.msra.mxu0 %v1225
      %1373 = vmatprep.subr.bf16.mxu0 0
      %1374 = vmatpush1.bf16.msra.mxu0 %v1226
      %1375 = vmatprep.subr.bf16.mxu0 0
      %1376 = vmatpush1.bf16.msra.mxu0 %v1227
      %1377 = vmatprep.subr.bf16.mxu0 0
      %1378 = vmatpush1.bf16.msra.mxu0 %v1228
      %1379 = vmatprep.subr.bf16.mxu0 0
      %1380 = vmatpush1.bf16.msra.mxu0 %v1229
      %1381 = vmatprep.subr.bf16.mxu0 0
      %1382 = vmatpush1.bf16.msra.mxu0 %v1230
      %1383 = vmatprep.subr.bf16.mxu0 0
      %1384 = vmatpush1.bf16.msra.mxu0 %v1231
      %1385 = vmatprep.subr.bf16.mxu0 0
      %1386 = vmatpush1.bf16.msra.mxu0 %v1232
      %1387 = vmatprep.subr.bf16.mxu0 0
      %1388 = vmatpush1.bf16.msra.mxu0 %v1233
      %1389 = vmatprep.subr.bf16.mxu0 0
      %1390 = vmatpush1.bf16.msra.mxu0 %v1234
      %1391 = vmatprep.subr.bf16.mxu0 0
      %1392 = vmatpush1.bf16.msra.mxu0 %v1235
      %1393 = vmatprep.subr.bf16.mxu0 0
      %1394 = vmatpush1.bf16.msra.mxu0 %v1236
      %1395 = vmatprep.subr.bf16.mxu0 0
      %1396 = vmatpush1.bf16.msra.mxu0 %v1237
      %1397 = vmatprep.subr.bf16.mxu0 0
      %1398 = vmatpush1.bf16.msra.mxu0 %v1238
      %1399 = vmatprep.mubr.bf16.mxu0 %v639
      %1400 = vmatmul.mubr.bf16.gmra.mrb[0].mxu0 %v615
      %v1401 = vpop.f32.mrb[0].mxu0
      %v1402 = vadd.f32 0.0, %v1401
      %v1403 = vpop.f32.mrb[0].mxu0
      %v1404 = vpop.f32.mrb[0].mxu0
      %v1405 = vadd.f32 0.0, %v1404
      %v1406 = vpop.f32.mrb[0].mxu0
      %1407 = vmatprep.mubr.bf16.mxu0 %v640
      %1408 = vmatmul.mubr.bf16.gmra.mrb[0].mxu0 %v616
      %v1409 = vpop.f32.mrb[0].mxu0
      %v1410 = vadd.f32 0.0, %v1409
      %v1411 = vpop.f32.mrb[0].mxu0
      %v1412 = vpop.f32.mrb[0].mxu0
      %v1413 = vadd.f32 0.0, %v1412
      %v1414 = vpop.f32.mrb[0].mxu0
      %1415 = vmatprep.mubr.bf16.mxu0 %v641
      %1416 = vmatmul.mubr.bf16.gmra.mrb[0].mxu0 %v617
      %v1417 = vpop.f32.mrb[0].mxu0
      %v1418 = vadd.f32 0.0, %v1417
      %v1419 = vpop.f32.mrb[0].mxu0
      %v1420 = vpop.f32.mrb[0].mxu0
      %v1421 = vadd.f32 0.0, %v1420
      %v1422 = vpop.f32.mrb[0].mxu0
      %1423 = vmatprep.mubr.bf16.mxu0 %v642
      %1424 = vmatmul.mubr.bf16.gmra.mrb[0].mxu0 %v618
      %v1425 = vpop.f32.mrb[0].mxu0
      %v1426 = vadd.f32 0.0, %v1425
      %v1427 = vpop.f32.mrb[0].mxu0
      %v1428 = vpop.f32.mrb[0].mxu0
      %v1429 = vadd.f32 0.0, %v1428
      %v1430 = vpop.f32.mrb[0].mxu0
      %1431 = vdwg.mxu0
      %1432 = vmatprep.subr.bf16.mxu0 0
      %1433 = vmatpush1.bf16.msra.mxu0 %v1239
      %1434 = vmatprep.subr.bf16.mxu0 0
      %1435 = vmatpush1.bf16.msra.mxu0 %v1240
      %1436 = vmatprep.subr.bf16.mxu0 0
      %1437 = vmatpush1.bf16.msra.mxu0 %v1241
      %1438 = vmatprep.subr.bf16.mxu0 0
      %1439 = vmatpush1.bf16.msra.mxu0 %v1242
      %1440 = vmatprep.subr.bf16.mxu0 0
      %1441 = vmatpush1.bf16.msra.mxu0 %v1243
      %1442 = vmatprep.subr.bf16.mxu0 0
      %1443 = vmatpush1.bf16.msra.mxu0 %v1244
      %1444 = vmatprep.subr.bf16.mxu0 0
      %1445 = vmatpush1.bf16.msra.mxu0 %v1245
      %1446 = vmatprep.subr.bf16.mxu0 0
      %1447 = vmatpush1.bf16.msra.mxu0 %v1246
      %1448 = vmatprep.subr.bf16.mxu0 0
      %1449 = vmatpush1.bf16.msra.mxu0 %v1247
      %1450 = vmatprep.subr.bf16.mxu0 0
      %1451 = vmatpush1.bf16.msra.mxu0 %v1248
      %1452 = vmatprep.subr.bf16.mxu0 0
      %1453 = vmatpush1.bf16.msra.mxu0 %v1249
      %1454 = vmatprep.subr.bf16.mxu0 0
      %1455 = vmatpush1.bf16.msra.mxu0 %v1250
      %1456 = vmatprep.subr.bf16.mxu0 0
      %1457 = vmatpush1.bf16.msra.mxu0 %v1251
      %1458 = vmatprep.subr.bf16.mxu0 0
      %1459 = vmatpush1.bf16.msra.mxu0 %v1252
      %1460 = vmatprep.subr.bf16.mxu0 0
      %1461 = vmatpush1.bf16.msra.mxu0 %v1253
      %1462 = vmatprep.subr.bf16.mxu0 0
      %1463 = vmatpush1.bf16.msra.mxu0 %v1254
      %1464 = vmatprep.mubr.bf16.mxu0 %v679
      %1465 = vmatmul.mubr.bf16.gmra.mrb[0].mxu0 %v655
      %v1466 = vpop.f32.mrb[0].mxu0
      %v1467 = vadd.f32 %v1402, %v1466
      %v1468 = vpop.f32.mrb[0].mxu0
      %v1469 = vpop.f32.mrb[0].mxu0
      %v1470 = vadd.f32 %v1405, %v1469
      %v1471 = vpop.f32.mrb[0].mxu0
      %1472 = vmatprep.mubr.bf16.mxu0 %v680
      %1473 = vmatmul.mubr.bf16.gmra.mrb[0].mxu0 %v656
      %v1474 = vpop.f32.mrb[0].mxu0
      %v1475 = vadd.f32 %v1410, %v1474
      %v1476 = vpop.f32.mrb[0].mxu0
      %v1477 = vpop.f32.mrb[0].mxu0
      %v1478 = vadd.f32 %v1413, %v1477
      %v1479 = vpop.f32.mrb[0].mxu0
      %1480 = vmatprep.mubr.bf16.mxu0 %v681
      %1481 = vmatmul.mubr.bf16.gmra.mrb[0].mxu0 %v657
      %v1482 = vpop.f32.mrb[0].mxu0
      %v1483 = vadd.f32 %v1418, %v1482
      %v1484 = vpop.f32.mrb[0].mxu0
      %v1485 = vpop.f32.mrb[0].mxu0
      %v1486 = vadd.f32 %v1421, %v1485
      %v1487 = vpop.f32.mrb[0].mxu0
      %1488 = vmatprep.mubr.bf16.mxu0 %v682
      %1489 = vmatmul.mubr.bf16.gmra.mrb[0].mxu0 %v658
      %v1490 = vpop.f32.mrb[0].mxu0
      %v1491 = vadd.f32 %v1426, %v1490
      %v1492 = vpop.f32.mrb[0].mxu0
      %v1493 = vpop.f32.mrb[0].mxu0
      %v1494 = vadd.f32 %v1429, %v1493
      %v1495 = vpop.f32.mrb[0].mxu0
      %1496 = vdwg.mxu0
      %1497 = vmatprep.subr.bf16.mxu0 0
      %1498 = vmatpush1.bf16.msra.mxu0 %v1255
      %1499 = vmatprep.subr.bf16.mxu0 0
      %1500 = vmatpush1.bf16.msra.mxu0 %v1256
      %1501 = vmatprep.subr.bf16.mxu0 0
      %1502 = vmatpush1.bf16.msra.mxu0 %v1257
      %1503 = vmatprep.subr.bf16.mxu0 0
      %1504 = vmatpush1.bf16.msra.mxu0 %v1258
      %1505 = vmatprep.subr.bf16.mxu0 0
      %1506 = vmatpush1.bf16.msra.mxu0 %v1259
      %1507 = vmatprep.subr.bf16.mxu0 0
      %1508 = vmatpush1.bf16.msra.mxu0 %v1260
      %1509 = vmatprep.subr.bf16.mxu0 0
      %1510 = vmatpush1.bf16.msra.mxu0 %v1261
      %1511 = vmatprep.subr.bf16.mxu0 0
      %1512 = vmatpush1.bf16.msra.mxu0 %v1262
      %1513 = vmatprep.subr.bf16.mxu0 0
      %1514 = vmatpush1.bf16.msra.mxu0 %v1263
      %1515 = vmatprep.subr.bf16.mxu0 0
      %1516 = vmatpush1.bf16.msra.mxu0 %v1264
      %1517 = vmatprep.subr.bf16.mxu0 0
      %1518 = vmatpush1.bf16.msra.mxu0 %v1265
      %1519 = vmatprep.subr.bf16.mxu0 0
      %1520 = vmatpush1.bf16.msra.mxu0 %v1266
      %1521 = vmatprep.subr.bf16.mxu0 0
      %1522 = vmatpush1.bf16.msra.mxu0 %v1267
      %1523 = vmatprep.subr.bf16.mxu0 0
      %1524 = vmatpush1.bf16.msra.mxu0 %v1268
      %1525 = vmatprep.subr.bf16.mxu0 0
      %1526 = vmatpush1.bf16.msra.mxu0 %v1269
      %1527 = vmatprep.subr.bf16.mxu0 0
      %1528 = vmatpush1.bf16.msra.mxu0 %v1270
      %1529 = vmatprep.mubr.bf16.mxu0 %v719
      %1530 = vmatmul.mubr.bf16.gmra.mrb[0].mxu0 %v703
      %v1531 = vpop.f32.mrb[0].mxu0
      %v1532 = vadd.f32 %v1467, %v1531
      %v1533 = vpop.f32.mrb[0].mxu0
      %v1534 = vpop.f32.mrb[0].mxu0
      %v1535 = vadd.f32 %v1470, %v1534
      %v1536 = vpop.f32.mrb[0].mxu0
      %1537 = vmatprep.mubr.bf16.mxu0 %v720
      %1538 = vmatmul.mubr.bf16.gmra.mrb[0].mxu0 %v704
      %v1539 = vpop.f32.mrb[0].mxu0
      %v1540 = vadd.f32 %v1475, %v1539
      %v1541 = vpop.f32.mrb[0].mxu0
      %v1542 = vpop.f32.mrb[0].mxu0
      %v1543 = vadd.f32 %v1478, %v1542
      %v1544 = vpop.f32.mrb[0].mxu0
      %1545 = vmatprep.mubr.bf16.mxu0 %v721
      %1546 = vmatmul.mubr.bf16.gmra.mrb[0].mxu0 %v705
      %v1547 = vpop.f32.mrb[0].mxu0
      %v1548 = vadd.f32 %v1483, %v1547
      %v1549 = vpop.f32.mrb[0].mxu0
      %v1550 = vpop.f32.mrb[0].mxu0
      %v1551 = vadd.f32 %v1486, %v1550
      %v1552 = vpop.f32.mrb[0].mxu0
      %1553 = vmatprep.mubr.bf16.mxu0 %v722
      %1554 = vmatmul.mubr.bf16.gmra.mrb[0].mxu0 %v706
      %v1555 = vpop.f32.mrb[0].mxu0
      %v1556 = vadd.f32 %v1491, %v1555
      %v1557 = vpop.f32.mrb[0].mxu0
      %v1558 = vpop.f32.mrb[0].mxu0
      %v1559 = vadd.f32 %v1494, %v1558
      %v1560 = vpop.f32.mrb[0].mxu0
      %1561 = vdwg.mxu0
      %1562 = vmatprep.subr.bf16.mxu0 0
      %1563 = vmatpush1.bf16.msra.mxu0 %v1271
      %1564 = vmatprep.subr.bf16.mxu0 0
      %1565 = vmatpush1.bf16.msra.mxu0 %v1272
      %1566 = vmatprep.subr.bf16.mxu0 0
      %1567 = vmatpush1.bf16.msra.mxu0 %v1273
      %1568 = vmatprep.subr.bf16.mxu0 0
      %1569 = vmatpush1.bf16.msra.mxu0 %v1274
      %1570 = vmatprep.subr.bf16.mxu0 0
      %1571 = vmatpush1.bf16.msra.mxu0 %v1275
      %1572 = vmatprep.subr.bf16.mxu0 0
      %1573 = vmatpush1.bf16.msra.mxu0 %v1276
      %1574 = vmatprep.subr.bf16.mxu0 0
      %1575 = vmatpush1.bf16.msra.mxu0 %v1277
      %1576 = vmatprep.subr.bf16.mxu0 0
      %1577 = vmatpush1.bf16.msra.mxu0 %v1278
      %1578 = vmatprep.subr.bf16.mxu0 0
      %1579 = vmatpush1.bf16.msra.mxu0 %v1279
      %1580 = vmatprep.subr.bf16.mxu0 0
      %1581 = vmatpush1.bf16.msra.mxu0 %v1280
      %1582 = vmatprep.subr.bf16.mxu0 0
      %1583 = vmatpush1.bf16.msra.mxu0 %v1281
      %1584 = vmatprep.subr.bf16.mxu0 0
      %1585 = vmatpush1.bf16.msra.mxu0 %v1282
      %1586 = vmatprep.subr.bf16.mxu0 0
      %1587 = vmatpush1.bf16.msra.mxu0 %v1283
      %1588 = vmatprep.subr.bf16.mxu0 0
      %1589 = vmatpush1.bf16.msra.mxu0 %v1284
      %1590 = vmatprep.subr.bf16.mxu0 0
      %1591 = vmatpush1.bf16.msra.mxu0 %v1285
      %1592 = vmatprep.subr.bf16.mxu0 0
      %1593 = vmatpush1.bf16.msra.mxu0 %v1286
      %1594 = vmatprep.mubr.bf16.mxu0 %v767
      %1595 = vmatmul.mubr.bf16.gmra.mrb[0].mxu0 %v743
      %v1596 = vpop.f32.mrb[0].mxu0
      %v1597 = vadd.f32 %v1532, %v1596
      %v1598 = vpop.f32.mrb[0].mxu0
      %v1599 = vpop.f32.mrb[0].mxu0
      %v1600 = vadd.f32 %v1535, %v1599
      %v1601 = vpop.f32.mrb[0].mxu0
      %1602 = vmatprep.mubr.bf16.mxu0 %v768
      %1603 = vmatmul.mubr.bf16.gmra.mrb[0].mxu0 %v744
      %v1604 = vpop.f32.mrb[0].mxu0
      %v1605 = vadd.f32 %v1540, %v1604
      %v1606 = vpop.f32.mrb[0].mxu0
      %v1607 = vpop.f32.mrb[0].mxu0
      %v1608 = vadd.f32 %v1543, %v1607
      %v1609 = vpop.f32.mrb[0].mxu0
      %1610 = vmatprep.mubr.bf16.mxu0 %v769
      %1611 = vmatmul.mubr.bf16.gmra.mrb[0].mxu0 %v745
      %v1612 = vpop.f32.mrb[0].mxu0
      %v1613 = vadd.f32 %v1548, %v1612
      %v1614 = vpop.f32.mrb[0].mxu0
      %v1615 = vpop.f32.mrb[0].mxu0
      %v1616 = vadd.f32 %v1551, %v1615
      %v1617 = vpop.f32.mrb[0].mxu0
      %1618 = vmatprep.mubr.bf16.mxu0 %v770
      %1619 = vmatmul.mubr.bf16.gmra.mrb[0].mxu0 %v746
      %v1620 = vpop.f32.mrb[0].mxu0
      %v1621 = vadd.f32 %v1556, %v1620
      %v1622 = vpop.f32.mrb[0].mxu0
      %v1623 = vpop.f32.mrb[0].mxu0
      %v1624 = vadd.f32 %v1559, %v1623
      %v1625 = vpop.f32.mrb[0].mxu0
      %1626 = vdwg.mxu0
      %1627 = vmatprep.subr.bf16.mxu0 0
      %1628 = vmatpush1.bf16.msra.mxu0 %v1287
      %1629 = vmatprep.subr.bf16.mxu0 0
      %1630 = vmatpush1.bf16.msra.mxu0 %v1288
      %1631 = vmatprep.subr.bf16.mxu0 0
      %1632 = vmatpush1.bf16.msra.mxu0 %v1289
      %1633 = vmatprep.subr.bf16.mxu0 0
      %1634 = vmatpush1.bf16.msra.mxu0 %v1290
      %1635 = vmatprep.subr.bf16.mxu0 0
      %1636 = vmatpush1.bf16.msra.mxu0 %v1291
      %1637 = vmatprep.subr.bf16.mxu0 0
      %1638 = vmatpush1.bf16.msra.mxu0 %v1292
      %1639 = vmatprep.subr.bf16.mxu0 0
      %1640 = vmatpush1.bf16.msra.mxu0 %v1293
      %1641 = vmatprep.subr.bf16.mxu0 0
      %1642 = vmatpush1.bf16.msra.mxu0 %v1294
      %1643 = vmatprep.subr.bf16.mxu0 0
      %1644 = vmatpush1.bf16.msra.mxu0 0
      %1645 = vmatprep.subr.bf16.mxu0 0
      %1646 = vmatpush1.bf16.msra.mxu0 0
      %1647 = vmatprep.subr.bf16.mxu0 0
      %1648 = vmatpush1.bf16.msra.mxu0 0
      %1649 = vmatprep.subr.bf16.mxu0 0
      %1650 = vmatpush1.bf16.msra.mxu0 0
      %1651 = vmatprep.subr.bf16.mxu0 0
      %1652 = vmatpush1.bf16.msra.mxu0 0
      %1653 = vmatprep.subr.bf16.mxu0 0
      %1654 = vmatpush1.bf16.msra.mxu0 0
      %1655 = vmatprep.subr.bf16.mxu0 0
      %1656 = vmatpush1.bf16.msra.mxu0 0
      %1657 = vmatprep.subr.bf16.mxu0 0
      %1658 = vmatpush1.bf16.msra.mxu0 0
      %1659 = vmatprep.mubr.bf16.mxu0 0
      %1660 = vmatmul.mubr.bf16.gmra.mrb[0].mxu0 %v783
      %v1661 = vpop.f32.mrb[0].mxu0
      %v1662 = vadd.f32 %v1597, %v1661
      %v1663 = vpop.f32.mrb[0].mxu0
      %v1664 = vpop.f32.mrb[0].mxu0
      %v1665 = vadd.f32 %v1600, %v1664
      %v1666 = vpop.f32.mrb[0].mxu0
      %1667 = vmatprep.mubr.bf16.mxu0 0
      %1668 = vmatmul.mubr.bf16.gmra.mrb[0].mxu0 %v784
      %v1669 = vpop.f32.mrb[0].mxu0
      %v1670 = vadd.f32 %v1605, %v1669
      %v1671 = vpop.f32.mrb[0].mxu0
      %v1672 = vpop.f32.mrb[0].mxu0
      %v1673 = vadd.f32 %v1608, %v1672
      %v1674 = vpop.f32.mrb[0].mxu0
      %1675 = vmatprep.mubr.bf16.mxu0 0
      %1676 = vmatmul.mubr.bf16.gmra.mrb[0].mxu0 %v785
      %v1677 = vpop.f32.mrb[0].mxu0
      %v1678 = vadd.f32 %v1613, %v1677
      %v1679 = vpop.f32.mrb[0].mxu0
      %v1680 = vpop.f32.mrb[0].mxu0
      %v1681 = vadd.f32 %v1616, %v1680
      %v1682 = vpop.f32.mrb[0].mxu0
      %1683 = vmatprep.mubr.bf16.mxu0 0
      %1684 = vmatmul.mubr.bf16.gmra.mrb[0].mxu0 %v786
      %v1685 = vpop.f32.mrb[0].mxu0
      %v1686 = vadd.f32 %v1621, %v1685
      %v1687 = vpop.f32.mrb[0].mxu0
      %v1688 = vpop.f32.mrb[0].mxu0
      %v1689 = vadd.f32 %v1624, %v1688
      %v1690 = vpop.f32.mrb[0].mxu0
      %1691 = vdwg.mxu0
      %v1692 = vpack.c.bf16 %v1662, %v1662
      %v1693 = vpack.c.bf16 %v1665, %v1665
      %v1694 = vpack.c.bf16 %v1670, %v1670
      %v1695 = vpack.c.bf16 %v1673, %v1673
      %v1696 = vpack.c.bf16 %v1678, %v1678
      %v1697 = vpack.c.bf16 %v1681, %v1681
      %v1698 = vpack.c.bf16 %v1686, %v1686
      %v1699 = vpack.c.bf16 %v1689, %v1689
      %1700 = vst [vmem:[%s177] sm:$0xf] %v1692
      %1701 = vst [vmem:[%s177 + $0x4] sm:$0xf] %v1693
      %1702 = vst [vmem:[%s177 + $0x8] sm:$0xf] %v1694
      %1703 = vst [vmem:[%s177 + $0xc] sm:$0xf] %v1695
      %1704 = vst [vmem:[%s177 + $0x10] sm:$0xf] %v1696
      %1705 = vst [vmem:[%s177 + $0x14] sm:$0xf] %v1697
      %1706 = vst [vmem:[%s177 + $0x18] sm:$0xf] %v1698
      %1707 = vst [vmem:[%s177 + $0x1c] sm:$0xf] %v1699
      %v1708 = vadd.f32 %v1662, %v1665
      %v1709 = vadd.f32 %v1708, %v1670
      %v1710 = vadd.f32 %v1709, %v1673
      %v1711 = vadd.f32 %v1710, %v1678
      %v1712 = vadd.f32 %v1711, %v1681
      %v1713 = vadd.f32 %v1712, %v1686
      %v1714 = vadd.f32 %v1713, %v1689
      %v1715 = vrot.slane %v1714, 4
      %v1716 = vadd.f32 %v1714, %v1715
      %v1717 = vrot.slane %v1716, 2
      %v1718 = vadd.f32 %v1716, %v1717
      %v1719 = vrot.slane %v1718, 1
      %v1720 = vadd.f32 %v1718, %v1719
      %v1721 = vmul.f32 %v1720, 0.015625
      %v1722 = vsub.f32 %v1662, %v1721
      %v1723 = vsub.f32 %v1665, %v1721
      %v1724 = vsub.f32 %v1670, %v1721
      %v1725 = vsub.f32 %v1673, %v1721
      %v1726 = vsub.f32 %v1678, %v1721
      %v1727 = vsub.f32 %v1681, %v1721
      %v1728 = vsub.f32 %v1686, %v1721
      %v1729 = vsub.f32 %v1689, %v1721
      %v1730 = vmul.f32 %v1722, %v1722
      %v1731 = vmul.f32 %v1723, %v1723
      %v1732 = vmul.f32 %v1724, %v1724
      %v1733 = vmul.f32 %v1725, %v1725
      %v1734 = vmul.f32 %v1726, %v1726
      %v1735 = vmul.f32 %v1727, %v1727
      %v1736 = vmul.f32 %v1728, %v1728
      %v1737 = vmul.f32 %v1729, %v1729
      %v1738 = vadd.f32 %v1730, %v1731
      %v1739 = vadd.f32 %v1738, %v1732
      %v1740 = vadd.f32 %v1739, %v1733
      %v1741 = vadd.f32 %v1740, %v1734
      %v1742 = vadd.f32 %v1741, %v1735
      %v1743 = vadd.f32 %v1742, %v1736
      %v1744 = vadd.f32 %v1743, %v1737
      %v1745 = vrot.slane %v1744, 4
      %v1746 = vadd.f32 %v1744, %v1745
      %v1747 = vrot.slane %v1746, 2
      %v1748 = vadd.f32 %v1746, %v1747
      %v1749 = vrot.slane %v1748, 1
      %v1750 = vadd.f32 %v1748, %v1749
      %vm1751 = vcmask 1040384
      %v1752 = vsel %vm1751, %v1720, %v1750
      %vm1753 = vcmask 1041408
      %v1754 = vsel %vm1753, %v1752, 0.0
      %1755 = vst [vmem:[%s181] sm:$0xff] %v1754
      %p1756 = scmp.lt.s32.totalorder %s15, 1
      %s1757 = scalar_select %p1756, %s15, 1
      %s1758 = smul.addr %s1757, 8
      %s1759 = smul.addr %s1758, 4
      %s1760 = scalar_lea.vmem %s2, %s1759
      %p1761 = scmp.lt.s32.totalorder %s15, 1
      %s1762 = scalar_select %p1761, %s15, 1
      %s1763 = smul.addr %s1762, 8
      %s1764 = scalar_lea.vmem %s3, %s1763
      // Predicated region
      $region29: #{basic_block_forward.4} parent=27 // pred_check
        %p1765 = pneg %p80
      $region30: #{basic_block_forward.4} parent=27 // pred_check_branch
        %1767 = sbr.rel (%p1765) target = $region32
      $region31: #{basic_block_forward.4} parent=27 // pred_region
        _
      $region32: #{basic_block_forward.4} parent=27 // pred_fallthru
        _
      // Predicated region
      $region33: #{basic_block_forward.4} parent=27 // pred_check
        %p1768 = pneg %p106
      $region34: #{basic_block_forward.4} parent=27 // pred_check_branch
        %1770 = sbr.rel (%p1768) target = $region36
      $region35: #{basic_block_forward.4} parent=27 // pred_region
        _
      $region36: #{basic_block_forward.4} parent=27 // pred_fallthru
        _
    $region28: #{basic_block_forward.4} parent=5 // pred_fallthru
      _
    %p1771 = scmp.le.s32.totalorder 2, %s10
    // Predicated region
    $region37: #{basic_block_forward.4} parent=5 // pred_check
      %p1772 = pneg %p1771
    $region38: #{basic_block_forward.4} parent=5 // pred_check_branch
      %1774 = sbr.rel (%p1772) target = $region40
    $region39: #{basic_block_forward.4} parent=5 // pred_region
      %s1775 = ssub.s32 %s10, 2
      // Predicated region
      $region41: #{basic_block_forward.4} parent=39 // pred_check
        %p1776 = pneg %p86
      $region42: #{basic_block_forward.4} parent=39 // pred_check_branch
        %1778 = sbr.rel (%p1776) target = $region44
      $region43: #{basic_block_forward.4} parent=39 // pred_region
        %p1779 = scmp.lt.s32.totalorder %s16, 1
        %s1780 = scalar_select %p1779, %s16, 1
        %s1781 = smul.addr %s1780, 8
        %s1782 = smul.addr %s1781, 4
        %s1783 = scalar_lea.vmem %s2, %s1782
      $region44: #{basic_block_forward.4} parent=39 // pred_fallthru
        _
      // Predicated region
      $region45: #{basic_block_forward.4} parent=39 // pred_check
        %p1784 = pneg %p112
      $region46: #{basic_block_forward.4} parent=39 // pred_check_branch
        %1786 = sbr.rel (%p1784) target = $region48
      $region47: #{basic_block_forward.4} parent=39 // pred_region
        %p1787 = scmp.lt.s32.totalorder %s16, 1
        %s1788 = scalar_select %p1787, %s16, 1
        %s1789 = smul.addr %s1788, 8
        %s1790 = scalar_lea.vmem %s3, %s1789
      $region48: #{basic_block_forward.4} parent=39 // pred_fallthru
        _
    $region40: #{basic_block_forward.4} parent=5 // pred_fallthru
      _
  $region6: #{basic_block_forward.4} parent=0 // loop_footer
    %s14 = sadd.s32 1, %s10
  $region7: #{basic_block_forward.4} parent=0 // loop_footer_branch
    %9 = sbr.rel target = $region3
  $region8: #{basic_block_forward.4} parent=0 // loop_exit
    _

// kernel: basic_block_forward.7
$region0: #{basic_block_forward.7}
  #allocation0 [shape = 'u32[]', space=smem, size = 0x4, offset = 0x4, fixed_abs, tag = 'smem constant byte address 0x4 - core index']
  #allocation1 [shape = 'u32[144,128]{1,0:T(1,128)}', space=vmem, size = 0x12000, scoped, tag = 'internal scratch']
  %s0 = inlined_call_operand.vmem [shape: bf16[2,8,8,128], index: 0, kind: input, shape index: {}]
  %s1 = inlined_call_operand.vmem [shape: bf16[2,8,8,128], index: 1, kind: input, shape index: {}]
  %s2 = inlined_call_operand.vmem [shape: f32[8,128], index: 2, kind: input, shape index: {}]
  %s3 = inlined_call_operand.vmem [shape: bf16[2,8,8,128], index: 3, kind: output, shape index: {}]
  %s4 = sld [smem:[#allocation0]]
  $region45: #{basic_block_forward.7} parent=0
    _
  %s6 = ssub.s32 1, %s4
  %s7 = scalar_select 0, %s6, %s4
  loop: start=0, step=1, limit=4
  $region2: #{basic_block_forward.7} parent=0 // loop_pre_header
    _
  $region3: #{basic_block_forward.7} parent=0 // loop_header
    %s9 = sphi 0, %s13
    %p10 = scmp.ge.s32.totalorder %s9, 4
    %s19 = sphi 0, %s21
    %s22 = sphi 0, %s19
    %s23 = sphi 0, %s22
    %s39 = sphi 0, %s23
    %s45 = sphi 0, %s47
    %s48 = sphi 0, %s45
    %s49 = sphi 0, %s48
    %s65 = sphi 0, %s49
    %s69 = sphi 0, %s69
    %s71 = sphi 0, %s69
    %s72 = sphi 0, %s71
    %s86 = sphi 0, %s72
    %s92 = sphi 0, %s94
    %s95 = sphi 0, %s92
    %s96 = sphi 0, %s95
    %s112 = sphi 0, %s96
  $region4: #{basic_block_forward.7} parent=0 // loop_header_branch
    %12 = sbr.rel (%p10) target = $region8
  $region5: #{basic_block_forward.7} parent=0 // loop_body
    %s14 = ssub.s32 %s9, 1
    %s15 = ssub.s32 %s9, 2
    %s16 = sadd.s32 %s9, 1
    %s17 = ssub.s32 %s9, %s16
    %p18 = scmp.eq.s32.totalorder %s17, 0
    %s20 = sadd.s32 %s19, 1
    %s21 = scalar_select %p18, %s19, %s20
    %p24 = pneg %p18
    %p25 = scmp.eq.s32.totalorder %s9, 1
    %p26 = por %p24, %p25
    %p27 = scmp.ne.s32.totalorder %s19, %s22
    %p28 = scmp.eq.s32.totalorder %s9, 0
    %p29 = por %p27, %p28
    %p30 = scmp.ne.s32.totalorder %s19, %s22
    %p31 = scmp.eq.s32.totalorder %s14, 1
    %p32 = por %p30, %p31
    %p33 = scmp.ne.s32.totalorder %s22, %s23
    %p34 = scmp.eq.s32.totalorder %s14, 0
    %p35 = por %p33, %p34
    %p36 = scmp.ne.s32.totalorder %s22, %s23
    %p37 = scmp.eq.s32.totalorder %s15, 1
    %p38 = por %p36, %p37
    %p40 = scmp.ne.s32.totalorder %s23, %s39
    %p41 = scmp.eq.s32.totalorder %s15, 0
    %p42 = por %p40, %p41
    %s43 = ssub.s32 %s9, %s16
    %p44 = scmp.eq.s32.totalorder %s43, 0
    %s46 = sadd.s32 %s45, 1
    %s47 = scalar_select %p44, %s45, %s46
    %p50 = pneg %p44
    %p51 = scmp.eq.s32.totalorder %s9, 1
    %p52 = por %p50, %p51
    %p53 = scmp.ne.s32.totalorder %s45, %s48
    %p54 = scmp.eq.s32.totalorder %s9, 0
    %p55 = por %p53, %p54
    %p56 = scmp.ne.s32.totalorder %s45, %s48
    %p57 = scmp.eq.s32.totalorder %s14, 1
    %p58 = por %p56, %p57
    %p59 = scmp.ne.s32.totalorder %s48, %s49
    %p60 = scmp.eq.s32.totalorder %s14, 0
    %p61 = por %p59, %p60
    %p62 = scmp.ne.s32.totalorder %s48, %s49
    %p63 = scmp.eq.s32.totalorder %s15, 1
    %p64 = por %p62, %p63
    %p66 = scmp.ne.s32.totalorder %s49, %s65
    %p67 = scmp.eq.s32.totalorder %s15, 0
    %p68 = por %p66, %p67
    %s70 = sadd.s32 %s69, 1
    %p73 = scmp.eq.s32.totalorder %s9, 1
    %p74 = scmp.ne.s32.totalorder %s69, %s71
    %p75 = scmp.eq.s32.totalorder %s9, 0
    %p76 = por %p74, %p75
    %p77 = scmp.ne.s32.totalorder %s69, %s71
    %p78 = scmp.eq.s32.totalorder %s14, 1
    %p79 = por %p77, %p78
    %p80 = scmp.ne.s32.totalorder %s71, %s72
    %p81 = scmp.eq.s32.totalorder %s14, 0
    %p82 = por %p80, %p81
    %p83 = scmp.ne.s32.totalorder %s71, %s72
    %p84 = scmp.eq.s32.totalorder %s15, 1
    %p85 = por %p83, %p84
    %p87 = scmp.ne.s32.totalorder %s72, %s86
    %p88 = scmp.eq.s32.totalorder %s15, 0
    %p89 = por %p87, %p88
    %s90 = ssub.s32 %s9, %s16
    %p91 = scmp.eq.s32.totalorder %s90, 0
    %s93 = sadd.s32 %s92, 1
    %s94 = scalar_select %p91, %s92, %s93
    %p97 = pneg %p91
    %p98 = scmp.eq.s32.totalorder %s9, 1
    %p99 = por %p97, %p98
    %p100 = scmp.ne.s32.totalorder %s92, %s95
    %p101 = scmp.eq.s32.totalorder %s9, 0
    %p102 = por %p100, %p101
    %p103 = scmp.ne.s32.totalorder %s92, %s95
    %p104 = scmp.eq.s32.totalorder %s14, 1
    %p105 = por %p103, %p104
    %p106 = scmp.ne.s32.totalorder %s95, %s96
    %p107 = scmp.eq.s32.totalorder %s14, 0
    %p108 = por %p106, %p107
    %p109 = scmp.ne.s32.totalorder %s95, %s96
    %p110 = scmp.eq.s32.totalorder %s15, 1
    %p111 = por %p109, %p110
    %p113 = scmp.ne.s32.totalorder %s96, %s112
    %p114 = scmp.eq.s32.totalorder %s15, 0
    %p115 = por %p113, %p114
    %p116 = scmp.le.s32.totalorder 1, %s9
    %p117 = scmp.lt.s32.totalorder %s9, 3
    %p118 = pnand %p116, %p117
    %p119 = pneg %p118
    // Predicated region
    $region9: #{basic_block_forward.7} parent=5 // pred_check
      _
    $region10: #{basic_block_forward.7} parent=5 // pred_check_branch
      %121 = sbr.rel (%p118) target = $region12
    $region11: #{basic_block_forward.7} parent=5 // pred_region
      %s122 = ssub.s32 %s9, 1
      // Predicated region
      $region13: #{basic_block_forward.7} parent=11 // pred_check
        %p123 = pneg %p82
      $region14: #{basic_block_forward.7} parent=11 // pred_check_branch
        %125 = sbr.rel (%p123) target = $region16
      $region15: #{basic_block_forward.7} parent=11 // pred_region
        _
      $region16: #{basic_block_forward.7} parent=11 // pred_fallthru
        _
    $region12: #{basic_block_forward.7} parent=5 // pred_fallthru
      _
    %p126 = scmp.lt.s32.totalorder %s9, 2
    // Predicated region
    $region17: #{basic_block_forward.7} parent=5 // pred_check
      %p127 = pneg %p126
    $region18: #{basic_block_forward.7} parent=5 // pred_check_branch
      %129 = sbr.rel (%p127) target = $region20
    $region19: #{basic_block_forward.7} parent=5 // pred_region
      // Predicated region
      $region21: #{basic_block_forward.7} parent=19 // pred_check
        %p130 = pneg %p29
      $region22: #{basic_block_forward.7} parent=19 // pred_check_branch
        %132 = sbr.rel (%p130) target = $region24
      $region23: #{basic_block_forward.7} parent=19 // pred_region
        %p133 = scmp.lt.s32.totalorder %s9, 1
        %s134 = scalar_select %p133, %s9, 1
        %s135 = smul.addr %s134, 8
        %s136 = smul.addr %s135, 4
        %s137 = scalar_lea.vmem %s0, %s136
      $region24: #{basic_block_forward.7} parent=19 // pred_fallthru
        _
      // Predicated region
      $region25: #{basic_block_forward.7} parent=19 // pred_check
        %p138 = pneg %p55
      $region26: #{basic_block_forward.7} parent=19 // pred_check_branch
        %140 = sbr.rel (%p138) target = $region28
      $region27: #{basic_block_forward.7} parent=19 // pred_region
        %p141 = scmp.lt.s32.totalorder %s9, 1
        %s142 = scalar_select %p141, %s9, 1
        %s143 = smul.addr %s142, 8
        %s144 = smul.addr %s143, 4
        %s145 = scalar_lea.vmem %s1, %s144
      $region28: #{basic_block_forward.7} parent=19 // pred_fallthru
        _
    $region20: #{basic_block_forward.7} parent=5 // pred_fallthru
      _
    %p146 = scmp.le.s32.totalorder 1, %s9
    %p147 = scmp.lt.s32.totalorder %s9, 3
    %p148 = pnand %p146, %p147
    %p149 = pneg %p148
    // Predicated region
    $region29: #{basic_block_forward.7} parent=5 // pred_check
      _
    $region30: #{basic_block_forward.7} parent=5 // pred_check_branch
      %151 = sbr.rel (%p148) target = $region32
    $region31: #{basic_block_forward.7} parent=5 // pred_region
      %s152 = ssub.s32 %s9, 1
      %p153 = scmp.lt.s32.totalorder %s14, 1
      %s154 = scalar_select %p153, %s14, 1
      %s155 = smul.addr %s154, 8
      %s156 = smul.addr %s155, 4
      %s157 = scalar_lea.vmem %s0, %s156
      %p158 = pneg %p35
      %p159 = pneg %p32
      %p160 = scmp.lt.s32.totalorder %s14, 1
      %s161 = scalar_select %p160, %s14, 1
      %s162 = smul.addr %s161, 8
      %s163 = smul.addr %s162, 4
      %s164 = scalar_lea.vmem %s1, %s163
      %p165 = pneg %p61
      %p166 = pneg %p58
      %p167 = pneg %p82
      %p168 = pneg %p79
      %p169 = pneg %p108
      %p170 = pneg %p105
      %p171 = scmp.lt.s32.totalorder %s14, 1
      %s172 = scalar_select %p171, %s14, 1
      %s173 = smul.addr %s172, 8
      %s174 = smul.addr %s173, 4
      %s175 = scalar_lea.vmem %s3, %s174
      %p176 = scmp.lt.s32.totalorder %s14, 1
      %s177 = scalar_select %p176, %s14, 1
      %s178 = smul.addr %s177, 8
      %s179 = smul.addr %s178, 4
      %s180 = scalar_lea.vmem %s0, %s179
      %p181 = scmp.lt.s32.totalorder %s14, 1
      %s182 = scalar_select %p181, %s14, 1
      %s183 = smul.addr %s182, 8
      %s184 = smul.addr %s183, 4
      %s185 = scalar_lea.vmem %s1, %s184
      %p186 = scmp.lt.s32.totalorder %s14, 1
      %s187 = scalar_select %p186, %s14, 1
      %s188 = smul.addr %s187, 8
      %s189 = smul.addr %s188, 4
      %s190 = scalar_lea.vmem %s3, %s189
      %v191 = vld [vmem:[%s2] sm:$0xff]
      %v192 = vld [vmem:[%s180] sm:$0xf]
      %v193 = vld [vmem:[%s180 + $0x4] sm:$0xf]
      %v194 = vld [vmem:[%s180 + $0x8] sm:$0xf]
      %v195 = vld [vmem:[%s180 + $0xc] sm:$0xf]
      %v196 = vld [vmem:[%s180 + $0x10] sm:$0xf]
      %v197 = vld [vmem:[%s180 + $0x14] sm:$0xf]
      %v198 = vld [vmem:[%s180 + $0x18] sm:$0xf]
      %v199 = vld [vmem:[%s180 + $0x1c] sm:$0xf]
      %v200 = vunpack.c.l.bf16 %v192
      %v201 = vunpack.c.l.bf16 %v193
      %v202 = vunpack.c.l.bf16 %v194
      %v203 = vunpack.c.l.bf16 %v195
      %v204 = vunpack.c.l.bf16 %v196
      %v205 = vunpack.c.l.bf16 %v197
      %v206 = vunpack.c.l.bf16 %v198
      %v207 = vunpack.c.l.bf16 %v199
      %v208 = vlaneseq
      %v209 = vshrl.u32 %v208, 7
      %v210 = vsub.s32 0, %v209
      %v211 = vrot.slane %v191, %v210
      %v212 = vmul.f32 %v200, %v211
      %v213 = vmul.f32 %v201, %v211
      %v214 = vmul.f32 %v202, %v211
      %v215 = vmul.f32 %v203, %v211
      %v216 = vmul.f32 %v204, %v211
      %v217 = vmul.f32 %v205, %v211
      %v218 = vmul.f32 %v206, %v211
      %v219 = vmul.f32 %v207, %v211
      %v220 = vlaneseq
      %v221 = vshrl.u32 %v220, 7
      %v222 = vsub.s32 1, %v221
      %v223 = vrot.slane %v191, %v222
      %v224 = vadd.f32 %v212, %v223
      %v225 = vadd.f32 %v213, %v223
      %v226 = vadd.f32 %v214, %v223
      %v227 = vadd.f32 %v215, %v223
      %v228 = vadd.f32 %v216, %v223
      %v229 = vadd.f32 %v217, %v223
      %v230 = vadd.f32 %v218, %v223
      %v231 = vadd.f32 %v219, %v223
      %v232 = vmax.f32 %v224, 0.0
      %v233 = vmax.f32 %v225, 0.0
      %v234 = vmax.f32 %v226, 0.0
      %v235 = vmax.f32 %v227, 0.0
      %v236 = vmax.f32 %v228, 0.0
      %v237 = vmax.f32 %v229, 0.0
      %v238 = vmax.f32 %v230, 0.0
      %v239 = vmax.f32 %v231, 0.0
      %v240 = vld [vmem:[%s185] sm:$0xf]
      %v241 = vld [vmem:[%s185 + $0x4] sm:$0xf]
      %v242 = vld [vmem:[%s185 + $0x8] sm:$0xf]
      %v243 = vld [vmem:[%s185 + $0xc] sm:$0xf]
      %v244 = vld [vmem:[%s185 + $0x10] sm:$0xf]
      %v245 = vld [vmem:[%s185 + $0x14] sm:$0xf]
      %v246 = vld [vmem:[%s185 + $0x18] sm:$0xf]
      %v247 = vld [vmem:[%s185 + $0x1c] sm:$0xf]
      %v248 = vunpack.c.l.bf16 %v240
      %v249 = vunpack.c.l.bf16 %v241
      %v250 = vunpack.c.l.bf16 %v242
      %v251 = vunpack.c.l.bf16 %v243
      %v252 = vunpack.c.l.bf16 %v244
      %v253 = vunpack.c.l.bf16 %v245
      %v254 = vunpack.c.l.bf16 %v246
      %v255 = vunpack.c.l.bf16 %v247
      %v256 = vlaneseq
      %v257 = vshrl.u32 %v256, 7
      %v258 = vsub.s32 2, %v257
      %v259 = vrot.slane %v191, %v258
      %v260 = vmul.f32 %v248, %v259
      %v261 = vmul.f32 %v249, %v259
      %v262 = vmul.f32 %v250, %v259
      %v263 = vmul.f32 %v251, %v259
      %v264 = vmul.f32 %v252, %v259
      %v265 = vmul.f32 %v253, %v259
      %v266 = vmul.f32 %v254, %v259
      %v267 = vmul.f32 %v255, %v259
      %v268 = vlaneseq
      %v269 = vshrl.u32 %v268, 7
      %v270 = vsub.s32 3, %v269
      %v271 = vrot.slane %v191, %v270
      %v272 = vadd.f32 %v260, %v271
      %v273 = vadd.f32 %v261, %v271
      %v274 = vadd.f32 %v262, %v271
      %v275 = vadd.f32 %v263, %v271
      %v276 = vadd.f32 %v264, %v271
      %v277 = vadd.f32 %v265, %v271
      %v278 = vadd.f32 %v266, %v271
      %v279 = vadd.f32 %v267, %v271
      %v280 = vmax.f32 %v272, 0.0
      %v281 = vmax.f32 %v273, 0.0
      %v282 = vmax.f32 %v274, 0.0
      %v283 = vmax.f32 %v275, 0.0
      %v284 = vmax.f32 %v276, 0.0
      %v285 = vmax.f32 %v277, 0.0
      %v286 = vmax.f32 %v278, 0.0
      %v287 = vmax.f32 %v279, 0.0
      %v288 = vadd.f32 %v232, %v280
      %v289 = vadd.f32 %v233, %v281
      %v290 = vadd.f32 %v234, %v282
      %v291 = vadd.f32 %v235, %v283
      %v292 = vadd.f32 %v236, %v284
      %v293 = vadd.f32 %v237, %v285
      %v294 = vadd.f32 %v238, %v286
      %v295 = vadd.f32 %v239, %v287
      %v296 = vpack.c.bf16 %v288, %v288
      %v297 = vpack.c.bf16 %v289, %v289
      %v298 = vpack.c.bf16 %v290, %v290
      %v299 = vpack.c.bf16 %v291, %v291
      %v300 = vpack.c.bf16 %v292, %v292
      %v301 = vpack.c.bf16 %v293, %v293
      %v302 = vpack.c.bf16 %v294, %v294
      %v303 = vpack.c.bf16 %v295, %v295
      %304 = vst [vmem:[%s190] sm:$0xf] %v296
      %305 = vst [vmem:[%s190 + $0x4] sm:$0xf] %v297
      %306 = vst [vmem:[%s190 + $0x8] sm:$0xf] %v298
      %307 = vst [vmem:[%s190 + $0xc] sm:$0xf] %v299
      %308 = vst [vmem:[%s190 + $0x10] sm:$0xf] %v300
      %309 = vst [vmem:[%s190 + $0x14] sm:$0xf] %v301
      %310 = vst [vmem:[%s190 + $0x18] sm:$0xf] %v302
      %311 = vst [vmem:[%s190 + $0x1c] sm:$0xf] %v303
      %p312 = scmp.lt.s32.totalorder %s14, 1
      %s313 = scalar_select %p312, %s14, 1
      %s314 = smul.addr %s313, 8
      %s315 = smul.addr %s314, 4
      %s316 = scalar_lea.vmem %s3, %s315
      // Predicated region
      $region33: #{basic_block_forward.7} parent=31 // pred_check
        %p317 = pneg %p105
      $region34: #{basic_block_forward.7} parent=31 // pred_check_branch
        %319 = sbr.rel (%p317) target = $region36
      $region35: #{basic_block_forward.7} parent=31 // pred_region
        _
      $region36: #{basic_block_forward.7} parent=31 // pred_fallthru
        _
    $region32: #{basic_block_forward.7} parent=5 // pred_fallthru
      _
    %p320 = scmp.le.s32.totalorder 2, %s9
    // Predicated region
    $region37: #{basic_block_forward.7} parent=5 // pred_check
      %p321 = pneg %p320
    $region38: #{basic_block_forward.7} parent=5 // pred_check_branch
      %323 = sbr.rel (%p321) target = $region40
    $region39: #{basic_block_forward.7} parent=5 // pred_region
      %s324 = ssub.s32 %s9, 2
      // Predicated region
      $region41: #{basic_block_forward.7} parent=39 // pred_check
        %p325 = pneg %p111
      $region42: #{basic_block_forward.7} parent=39 // pred_check_branch
        %327 = sbr.rel (%p325) target = $region44
      $region43: #{basic_block_forward.7} parent=39 // pred_region
        %p328 = scmp.lt.s32.totalorder %s15, 1
        %s329 = scalar_select %p328, %s15, 1
        %s330 = smul.addr %s329, 8
        %s331 = smul.addr %s330, 4
        %s332 = scalar_lea.vmem %s3, %s331
      $region44: #{basic_block_forward.7} parent=39 // pred_fallthru
        _
    $region40: #{basic_block_forward.7} parent=5 // pred_fallthru
      _
  $region6: #{basic_block_forward.7} parent=0 // loop_footer
    %s13 = sadd.s32 1, %s9
  $region7: #{basic_block_forward.7} parent=0 // loop_footer_branch
    %8 = sbr.rel target = $region3
  $region8: #{basic_block_forward.7} parent=0 // loop_exit
    _

// kernel: basic_block_forward.6
$region0: #{basic_block_forward.6}
  #allocation0 [shape = 'u32[]', space=smem, size = 0x4, offset = 0x4, fixed_abs, tag = 'smem constant byte address 0x4 - core index']
  #allocation1 [shape = 'u32[144,128]{1,0:T(1,128)}', space=vmem, size = 0x12000, scoped, tag = 'internal scratch']
  %s0 = inlined_call_operand.vmem [shape: bf16[2,10,10,128], index: 0, kind: input, shape index: {}]
  %s1 = inlined_call_operand.vmem [shape: bf16[1152,128], index: 1, kind: input, shape index: {}]
  %s2 = inlined_call_operand.vmem [shape: bf16[2,8,8,128], index: 2, kind: input, shape index: {}]
  %s3 = inlined_call_operand.vmem [shape: bf16[128,128], index: 3, kind: input, shape index: {}]
  %s4 = inlined_call_operand.vmem [shape: bf16[2,8,8,128], index: 4, kind: output, shape index: {0}]
  %s5 = inlined_call_operand.vmem [shape: bf16[2,8,8,128], index: 5, kind: output, shape index: {1}]
  %s6 = inlined_call_operand.vmem [shape: f32[2,8,128], index: 6, kind: output, shape index: {2}]
  %7 = xla_tuple %s4, %s5, %s6
  %s8 = sld [smem:[#allocation0]]
  $region65: #{basic_block_forward.6} parent=0
    _
  %s10 = ssub.s32 1, %s8
  %s11 = scalar_select 0, %s10, %s8
  loop: start=0, step=1, limit=4
  $region2: #{basic_block_forward.6} parent=0 // loop_pre_header
    _
  $region3: #{basic_block_forward.6} parent=0 // loop_header
    %s13 = sphi 0, %s17
    %p14 = scmp.ge.s32.totalorder %s13, 4
    %s23 = sphi 0, %s25
    %s26 = sphi 0, %s23
    %s27 = sphi 0, %s26
    %s43 = sphi 0, %s27
    %s47 = sphi 0, %s47
    %s49 = sphi 0, %s47
    %s50 = sphi 0, %s49
    %s64 = sphi 0, %s50
    %s70 = sphi 0, %s72
    %s73 = sphi 0, %s70
    %s74 = sphi 0, %s73
    %s90 = sphi 0, %s74
    %s94 = sphi 0, %s94
    %s96 = sphi 0, %s94
    %s97 = sphi 0, %s96
    %s111 = sphi 0, %s97
    %s117 = sphi 0, %s119
    %s120 = sphi 0, %s117
    %s121 = sphi 0, %s120
    %s137 = sphi 0, %s121
    %s143 = sphi 0, %s145
    %s146 = sphi 0, %s143
    %s147 = sphi 0, %s146
    %s163 = sphi 0, %s147
    %s169 = sphi 0, %s171
    %s172 = sphi 0, %s169
    %s173 = sphi 0, %s172
    %s189 = sphi 0, %s173
  $region4: #{basic_block_forward.6} parent=0 // loop_header_branch
    %16 = sbr.rel (%p14) target = $region8
  $region5: #{basic_block_forward.6} parent=0 // loop_body
    %s18 = ssub.s32 %s13, 1
    %s19 = ssub.s32 %s13, 2
    %s20 = sadd.s32 %s13, 1
    %s21 = ssub.s32 %s13, %s20
    %p22 = scmp.eq.s32.totalorder %s21, 0
    %s24 = sadd.s32 %s23, 1
    %s25 = scalar_select %p22, %s23, %s24
    %p28 = pneg %p22
    %p29 = scmp.eq.s32.totalorder %s13, 1
    %p30 = por %p28, %p29
    %p31 = scmp.ne.s32.totalorder %s23, %s26
    %p32 = scmp.eq.s32.totalorder %s13, 0
    %p33 = por %p31, %p32
    %p34 = scmp.ne.s32.totalorder %s23, %s26
    %p35 = scmp.eq.s32.totalorder %s18, 1
    %p36 = por %p34, %p35
    %p37 = scmp.ne.s32.totalorder %s26, %s27
    %p38 = scmp.eq.s32.totalorder %s18, 0
    %p39 = por %p37, %p38
    %p40 = scmp.ne.s32.totalorder %s26, %s27
    %p41 = scmp.eq.s32.totalorder %s19, 1
    %p42 = por %p40, %p41
    %p44 = scmp.ne.s32.totalorder %s27, %s43
    %p45 = scmp.eq.s32.totalorder %s19, 0
    %p46 = por %p44, %p45
    %s48 = sadd.s32 %s47, 1
    %p51 = scmp.eq.s32.totalorder %s13, 1
    %p52 = scmp.ne.s32.totalorder %s47, %s49
    %p53 = scmp.eq.s32.totalorder %s13, 0
    %p54 = por %p52, %p53
    %p55 = scmp.ne.s32.totalorder %s47, %s49
    %p56 = scmp.eq.s32.totalorder %s18, 1
    %p57 = por %p55, %p56
    %p58 = scmp.ne.s32.totalorder %s49, %s50
    %p59 = scmp.eq.s32.totalorder %s18, 0
    %p60 = por %p58, %p59
    %p61 = scmp.ne.s32.totalorder %s49, %s50
    %p62 = scmp.eq.s32.totalorder %s19, 1
    %p63 = por %p61, %p62
    %p65 = scmp.ne.s32.totalorder %s50, %s64
    %p66 = scmp.eq.s32.totalorder %s19, 0
    %p67 = por %p65, %p66
    %s68 = ssub.s32 %s13, %s20
    %p69 = scmp.eq.s32.totalorder %s68, 0
    %s71 = sadd.s32 %s70, 1
    %s72 = scalar_select %p69, %s70, %s71
    %p75 = pneg %p69
    %p76 = scmp.eq.s32.totalorder %s13, 1
    %p77 = por %p75, %p76
    %p78 = scmp.ne.s32.totalorder %s70, %s73
    %p79 = scmp.eq.s32.totalorder %s13, 0
    %p80 = por %p78, %p79
    %p81 = scmp.ne.s32.totalorder %s70, %s73
    %p82 = scmp.eq.s32.totalorder %s18, 1
    %p83 = por %p81, %p82
    %p84 = scmp.ne.s32.totalorder %s73, %s74
    %p85 = scmp.eq.s32.totalorder %s18, 0
    %p86 = por %p84, %p85
    %p87 = scmp.ne.s32.totalorder %s73, %s74
    %p88 = scmp.eq.s32.totalorder %s19, 1
    %p89 = por %p87, %p88
    %p91 = scmp.ne.s32.totalorder %s74, %s90
    %p92 = scmp.eq.s32.totalorder %s19, 0
    %p93 = por %p91, %p92
    %s95 = sadd.s32 %s94, 1
    %p98 = scmp.eq.s32.totalorder %s13, 1
    %p99 = scmp.ne.s32.totalorder %s94, %s96
    %p100 = scmp.eq.s32.totalorder %s13, 0
    %p101 = por %p99, %p100
    %p102 = scmp.ne.s32.totalorder %s94, %s96
    %p103 = scmp.eq.s32.totalorder %s18, 1
    %p104 = por %p102, %p103
    %p105 = scmp.ne.s32.totalorder %s96, %s97
    %p106 = scmp.eq.s32.totalorder %s18, 0
    %p107 = por %p105, %p106
    %p108 = scmp.ne.s32.totalorder %s96, %s97
    %p109 = scmp.eq.s32.totalorder %s19, 1
    %p110 = por %p108, %p109
    %p112 = scmp.ne.s32.totalorder %s97, %s111
    %p113 = scmp.eq.s32.totalorder %s19, 0
    %p114 = por %p112, %p113
    %s115 = ssub.s32 %s13, %s20
    %p116 = scmp.eq.s32.totalorder %s115, 0
    %s118 = sadd.s32 %s117, 1
    %s119 = scalar_select %p116, %s117, %s118
    %p122 = pneg %p116
    %p123 = scmp.eq.s32.totalorder %s13, 1
    %p124 = por %p122, %p123
    %p125 = scmp.ne.s32.totalorder %s117, %s120
    %p126 = scmp.eq.s32.totalorder %s13, 0
    %p127 = por %p125, %p126
    %p128 = scmp.ne.s32.totalorder %s117, %s120
    %p129 = scmp.eq.s32.totalorder %s18, 1
    %p130 = por %p128, %p129
    %p131 = scmp.ne.s32.totalorder %s120, %s121
    %p132 = scmp.eq.s32.totalorder %s18, 0
    %p133 = por %p131, %p132
    %p134 = scmp.ne.s32.totalorder %s120, %s121
    %p135 = scmp.eq.s32.totalorder %s19, 1
    %p136 = por %p134, %p135
    %p138 = scmp.ne.s32.totalorder %s121, %s137
    %p139 = scmp.eq.s32.totalorder %s19, 0
    %p140 = por %p138, %p139
    %s141 = ssub.s32 %s13, %s20
    %p142 = scmp.eq.s32.totalorder %s141, 0
    %s144 = sadd.s32 %s143, 1
    %s145 = scalar_select %p142, %s143, %s144
    %p148 = pneg %p142
    %p149 = scmp.eq.s32.totalorder %s13, 1
    %p150 = por %p148, %p149
    %p151 = scmp.ne.s32.totalorder %s143, %s146
    %p152 = scmp.eq.s32.totalorder %s13, 0
    %p153 = por %p151, %p152
    %p154 = scmp.ne.s32.totalorder %s143, %s146
    %p155 = scmp.eq.s32.totalorder %s18, 1
    %p156 = por %p154, %p155
    %p157 = scmp.ne.s32.totalorder %s146, %s147
    %p158 = scmp.eq.s32.totalorder %s18, 0
    %p159 = por %p157, %p158
    %p160 = scmp.ne.s32.totalorder %s146, %s147
    %p161 = scmp.eq.s32.totalorder %s19, 1
    %p162 = por %p160, %p161
    %p164 = scmp.ne.s32.totalorder %s147, %s163
    %p165 = scmp.eq.s32.totalorder %s19, 0
    %p166 = por %p164, %p165
    %s167 = ssub.s32 %s13, %s20
    %p168 = scmp.eq.s32.totalorder %s167, 0
    %s170 = sadd.s32 %s169, 1
    %s171 = scalar_select %p168, %s169, %s170
    %p174 = pneg %p168
    %p175 = scmp.eq.s32.totalorder %s13, 1
    %p176 = por %p174, %p175
    %p177 = scmp.ne.s32.totalorder %s169, %s172
    %p178 = scmp.eq.s32.totalorder %s13, 0
    %p179 = por %p177, %p178
    %p180 = scmp.ne.s32.totalorder %s169, %s172
    %p181 = scmp.eq.s32.totalorder %s18, 1
    %p182 = por %p180, %p181
    %p183 = scmp.ne.s32.totalorder %s172, %s173
    %p184 = scmp.eq.s32.totalorder %s18, 0
    %p185 = por %p183, %p184
    %p186 = scmp.ne.s32.totalorder %s172, %s173
    %p187 = scmp.eq.s32.totalorder %s19, 1
    %p188 = por %p186, %p187
    %p190 = scmp.ne.s32.totalorder %s173, %s189
    %p191 = scmp.eq.s32.totalorder %s19, 0
    %p192 = por %p190, %p191
    %p193 = scmp.le.s32.totalorder 1, %s13
    %p194 = scmp.lt.s32.totalorder %s13, 3
    %p195 = pnand %p193, %p194
    %p196 = pneg %p195
    // Predicated region
    $region9: #{basic_block_forward.6} parent=5 // pred_check
      _
    $region10: #{basic_block_forward.6} parent=5 // pred_check_branch
      %198 = sbr.rel (%p195) target = $region12
    $region11: #{basic_block_forward.6} parent=5 // pred_region
      %s199 = ssub.s32 %s13, 1
      // Predicated region
      $region13: #{basic_block_forward.6} parent=11 // pred_check
        %p200 = pneg %p60
      $region14: #{basic_block_forward.6} parent=11 // pred_check_branch
        %202 = sbr.rel (%p200) target = $region16
      $region15: #{basic_block_forward.6} parent=11 // pred_region
        _
      $region16: #{basic_block_forward.6} parent=11 // pred_fallthru
        _
      // Predicated region
      $region17: #{basic_block_forward.6} parent=11 // pred_check
        %p203 = pneg %p107
      $region18: #{basic_block_forward.6} parent=11 // pred_check_branch
        %205 = sbr.rel (%p203) target = $region20
      $region19: #{basic_block_forward.6} parent=11 // pred_region
        _
      $region20: #{basic_block_forward.6} parent=11 // pred_fallthru
        _
    $region12: #{basic_block_forward.6} parent=5 // pred_fallthru
      _
    %p206 = scmp.lt.s32.totalorder %s13, 2
    // Predicated region
    $region21: #{basic_block_forward.6} parent=5 // pred_check
      %p207 = pneg %p206
    $region22: #{basic_block_forward.6} parent=5 // pred_check_branch
      %209 = sbr.rel (%p207) target = $region24
    $region23: #{basic_block_forward.6} parent=5 // pred_region
      // Predicated region
      $region25: #{basic_block_forward.6} parent=23 // pred_check
        %p210 = pneg %p33
      $region26: #{basic_block_forward.6} parent=23 // pred_check_branch
        %212 = sbr.rel (%p210) target = $region28
      $region27: #{basic_block_forward.6} parent=23 // pred_region
        %p213 = scmp.lt.s32.totalorder %s13, 1
        %s214 = scalar_select %p213, %s13, 1
        %s215 = smul.addr %s214, 20
        %s216 = smul.addr %s215, 4
        %s217 = scalar_lea.vmem %s0, %s216
      $region28: #{basic_block_forward.6} parent=23 // pred_fallthru
        _
      // Predicated region
      $region29: #{basic_block_forward.6} parent=23 // pred_check
        %p218 = pneg %p80
      $region30: #{basic_block_forward.6} parent=23 // pred_check_branch
        %220 = sbr.rel (%p218) target = $region32
      $region31: #{basic_block_forward.6} parent=23 // pred_region
        %p221 = scmp.lt.s32.totalorder %s13, 1
        %s222 = scalar_select %p221, %s13, 1
        %s223 = smul.addr %s222, 8
        %s224 = smul.addr %s223, 4
        %s225 = scalar_lea.vmem %s2, %s224
      $region32: #{basic_block_forward.6} parent=23 // pred_fallthru
        _
    $region24: #{basic_block_forward.6} parent=5 // pred_fallthru
      _
    %p226 = scmp.le.s32.totalorder 1, %s13
    %p227 = scmp.lt.s32.totalorder %s13, 3
    %p228 = pnand %p226, %p227
    %p229 = pneg %p228
    // Predicated region
    $region33: #{basic_block_forward.6} parent=5 // pred_check
      _
    $region34: #{basic_block_forward.6} parent=5 // pred_check_branch
      %231 = sbr.rel (%p228) target = $region36
    $region35: #{basic_block_forward.6} parent=5 // pred_region
      %s232 = ssub.s32 %s13, 1
      %p233 = scmp.lt.s32.totalorder %s18, 1
      %s234 = scalar_select %p233, %s18, 1
      %s235 = smul.addr %s234, 20
      %s236 = smul.addr %s235, 4
      %s237 = scalar_lea.vmem %s0, %s236
      %p238 = pneg %p39
      %p239 = pneg %p36
      %p240 = pneg %p60
      %p241 = pneg %p57
      %p242 = scmp.lt.s32.totalorder %s18, 1
      %s243 = scalar_select %p242, %s18, 1
      %s244 = smul.addr %s243, 8
      %s245 = smul.addr %s244, 4
      %s246 = scalar_lea.vmem %s2, %s245
      %p247 = pneg %p86
      %p248 = pneg %p83
      %p249 = pneg %p107
      %p250 = pneg %p104
      %p251 = pneg %p133
      %p252 = pneg %p130
      %p253 = scmp.lt.s32.totalorder %s18, 1
      %s254 = scalar_select %p253, %s18, 1
      %s255 = smul.addr %s254, 8
      %s256 = smul.addr %s255, 4
      %s257 = scalar_lea.vmem %s4, %s256
      %p258 = pneg %p159
      %p259 = pneg %p156
      %p260 = scmp.lt.s32.totalorder %s18, 1
      %s261 = scalar_select %p260, %s18, 1
      %s262 = smul.addr %s261, 8
      %s263 = smul.addr %s262, 4
      %s264 = scalar_lea.vmem %s5, %s263
      %p265 = pneg %p185
      %p266 = pneg %p182
      %p267 = scmp.lt.s32.totalorder %s18, 1
      %s268 = scalar_select %p267, %s18, 1
      %s269 = smul.addr %s268, 8
      %s270 = scalar_lea.vmem %s6, %s269
      %p271 = scmp.lt.s32.totalorder %s18, 1
      %s272 = scalar_select %p271, %s18, 1
      %s273 = smul.addr %s272, 20
      %s274 = smul.addr %s273, 4
      %s275 = scalar_lea.vmem %s0, %s274
      %p276 = scmp.lt.s32.totalorder %s18, 1
      %s277 = scalar_select %p276, %s18, 1
      %s278 = smul.addr %s277, 8
      %s279 = smul.addr %s278, 4
      %s280 = scalar_lea.vmem %s2, %s279
      %p281 = scmp.lt.s32.totalorder %s18, 1
      %s282 = scalar_select %p281, %s18, 1
      %s283 = smul.addr %s282, 8
      %s284 = smul.addr %s283, 4
      %s285 = scalar_lea.vmem %s4, %s284
      %p286 = scmp.lt.s32.totalorder %s18, 1
      %s287 = scalar_select %p286, %s18, 1
      %s288 = smul.addr %s287, 8
      %s289 = smul.addr %s288, 4
      %s290 = scalar_lea.vmem %s5, %s289
      %p291 = scmp.lt.s32.totalorder %s18, 1
      %s292 = scalar_select %p291, %s18, 1
      %s293 = smul.addr %s292, 8
      %s294 = scalar_lea.vmem %s6, %s293
      %v296 = vld [vmem:[%s275] sm:$0xf]
      %v297 = vld [vmem:[%s275 + $0x8] sm:$0xf]
      %v298 = vld [vmem:[%s275 + $0x10] sm:$0xf]
      %v299 = vld [vmem:[%s275 + $0x18] sm:$0xf]
      %v300 = vld [vmem:[%s275 + $0x20] sm:$0xf]
      %v301 = vld [vmem:[%s275 + $0x28] sm:$0xf]
      %v302 = vld [vmem:[%s275 + $0x30] sm:$0xf]
      %v303 = vld [vmem:[%s275 + $0x38] sm:$0xf]
      %v304 = vld [vmem:[%s275 + $0x4] sm:$0x1]
      %v305 = vld [vmem:[%s275 + $0xc] sm:$0x1]
      %v306 = vld [vmem:[%s275 + $0x14] sm:$0x1]
      %v307 = vld [vmem:[%s275 + $0x1c] sm:$0x1]
      %v308 = vld [vmem:[%s275 + $0x24] sm:$0x1]
      %v309 = vld [vmem:[%s275 + $0x2c] sm:$0x1]
      %v310 = vld [vmem:[%s275 + $0x34] sm:$0x1]
      %v311 = vld [vmem:[%s275 + $0x3c] sm:$0x1]
      %vm312 = vsmask.f32 3328
      %vm313 = vsmask.f32 7440
      %vm314 = vmor %vm312, %vm313
      %v316 = vshrl.u32 %v296, 16
      %v318 = vrot.slane %v316, 4
      %v319 = vshll.u32 %v296, 16
      %v321 = vrot.slane %v319, 5
      %v322 = vor.u32 %v318, %v321
      %v323 = vrot.slane %v322, 4
      %v325 = vshll.u32 %v304, 16
      %v327 = vrot.slane %v325, 5
      %v328 = vsel %vm314, %v323, %v327
      %v330 = vshrl.u32 %v297, 16
      %v332 = vrot.slane %v330, 4
      %v333 = vshll.u32 %v297, 16
      %v335 = vrot.slane %v333, 5
      %v336 = vor.u32 %v332, %v335
      %v337 = vrot.slane %v336, 4
      %v339 = vshll.u32 %v305, 16
      %v341 = vrot.slane %v339, 5
      %v342 = vsel %vm314, %v337, %v341
      %v344 = vshrl.u32 %v298, 16
      %v346 = vrot.slane %v344, 4
      %v347 = vshll.u32 %v298, 16
      %v349 = vrot.slane %v347, 5
      %v350 = vor.u32 %v346, %v349
      %v351 = vrot.slane %v350, 4
      %v353 = vshll.u32 %v306, 16
      %v355 = vrot.slane %v353, 5
      %v356 = vsel %vm314, %v351, %v355
      %v358 = vshrl.u32 %v299, 16
      %v360 = vrot.slane %v358, 4
      %v361 = vshll.u32 %v299, 16
      %v363 = vrot.slane %v361, 5
      %v364 = vor.u32 %v360, %v363
      %v365 = vrot.slane %v364, 4
      %v367 = vshll.u32 %v307, 16
      %v369 = vrot.slane %v367, 5
      %v370 = vsel %vm314, %v365, %v369
      %v372 = vshrl.u32 %v300, 16
      %v374 = vrot.slane %v372, 4
      %v375 = vshll.u32 %v300, 16
      %v377 = vrot.slane %v375, 5
      %v378 = vor.u32 %v374, %v377
      %v379 = vrot.slane %v378, 4
      %v381 = vshll.u32 %v308, 16
      %v383 = vrot.slane %v381, 5
      %v384 = vsel %vm314, %v379, %v383
      %v386 = vshrl.u32 %v301, 16
      %v388 = vrot.slane %v386, 4
      %v389 = vshll.u32 %v301, 16
      %v391 = vrot.slane %v389, 5
      %v392 = vor.u32 %v388, %v391
      %v393 = vrot.slane %v392, 4
      %v395 = vshll.u32 %v309, 16
      %v397 = vrot.slane %v395, 5
      %v398 = vsel %vm314, %v393, %v397
      %v400 = vshrl.u32 %v302, 16
      %v402 = vrot.slane %v400, 4
      %v403 = vshll.u32 %v302, 16
      %v405 = vrot.slane %v403, 5
      %v406 = vor.u32 %v402, %v405
      %v407 = vrot.slane %v406, 4
      %v409 = vshll.u32 %v310, 16
      %v411 = vrot.slane %v409, 5
      %v412 = vsel %vm314, %v407, %v411
      %v414 = vshrl.u32 %v303, 16
      %v416 = vrot.slane %v414, 4
      %v417 = vshll.u32 %v303, 16
      %v419 = vrot.slane %v417, 5
      %v420 = vor.u32 %v416, %v419
      %v421 = vrot.slane %v420, 4
      %v423 = vshll.u32 %v311, 16
      %v425 = vrot.slane %v423, 5
      %v426 = vsel %vm314, %v421, %v425
      %v427 = vld [vmem:[%s275] sm:$0xe]
      %v428 = vld [vmem:[%s275 + $0x8] sm:$0xe]
      %v429 = vld [vmem:[%s275 + $0x10] sm:$0xe]
      %v430 = vld [vmem:[%s275 + $0x18] sm:$0xe]
      %v431 = vld [vmem:[%s275 + $0x20] sm:$0xe]
      %v432 = vld [vmem:[%s275 + $0x28] sm:$0xe]
      %v433 = vld [vmem:[%s275 + $0x30] sm:$0xe]
      %v434 = vld [vmem:[%s275 + $0x38] sm:$0xe]
      %vm451 = vcmask 1042432
      %vm452 = vcmask 1046532
      %vm453 = vmor %vm451, %vm452
      %v454 = vrot.slane %v427, 5
      %v455 = vrot.slane %v454, 4
      %v456 = vrot.slane %v304, 5
      %v457 = vsel %vm453, %v455, %v456
      %v458 = vrot.slane %v428, 5
      %v459 = vrot.slane %v458, 4
      %v460 = vrot.slane %v305, 5
      %v461 = vsel %vm453, %v459, %v460
      %v462 = vrot.slane %v429, 5
      %v463 = vrot.slane %v462, 4
      %v464 = vrot.slane %v306, 5
      %v465 = vsel %vm453, %v463, %v464
      %v466 = vrot.slane %v430, 5
      %v467 = vrot.slane %v466, 4
      %v468 = vrot.slane %v307, 5
      %v469 = vsel %vm453, %v467, %v468
      %v470 = vrot.slane %v431, 5
      %v471 = vrot.slane %v470, 4
      %v472 = vrot.slane %v308, 5
      %v473 = vsel %vm453, %v471, %v472
      %v474 = vrot.slane %v432, 5
      %v475 = vrot.slane %v474, 4
      %v476 = vrot.slane %v309, 5
      %v477 = vsel %vm453, %v475, %v476
      %v478 = vrot.slane %v433, 5
      %v479 = vrot.slane %v478, 4
      %v480 = vrot.slane %v310, 5
      %v481 = vsel %vm453, %v479, %v480
      %v482 = vrot.slane %v434, 5
      %v483 = vrot.slane %v482, 4
      %v484 = vrot.slane %v311, 5
      %v485 = vsel %vm453, %v483, %v484
      %s486 = scalar_lea.vmem %s275, 8
      %v487 = vld [vmem:[%s486] sm:$0xf]
      %v488 = vld [vmem:[%s486 + $0x8] sm:$0xf]
      %v489 = vld [vmem:[%s486 + $0x10] sm:$0xf]
      %v490 = vld [vmem:[%s486 + $0x18] sm:$0xf]
      %v491 = vld [vmem:[%s486 + $0x20] sm:$0xf]
      %v492 = vld [vmem:[%s486 + $0x28] sm:$0xf]
      %v493 = vld [vmem:[%s486 + $0x30] sm:$0xf]
      %v494 = vld [vmem:[%s486 + $0x38] sm:$0xf]
      %v495 = vld [vmem:[%s486 + $0x4] sm:$0x1]
      %v496 = vld [vmem:[%s486 + $0xc] sm:$0x1]
      %v497 = vld [vmem:[%s486 + $0x14] sm:$0x1]
      %v498 = vld [vmem:[%s486 + $0x1c] sm:$0x1]
      %v499 = vld [vmem:[%s486 + $0x24] sm:$0x1]
      %v500 = vld [vmem:[%s486 + $0x2c] sm:$0x1]
      %v501 = vld [vmem:[%s486 + $0x34] sm:$0x1]
      %v502 = vld [vmem:[%s486 + $0x3c] sm:$0x1]
      %v504 = vshrl.u32 %v487, 16
      %v506 = vrot.slane %v504, 4
      %v507 = vshll.u32 %v487, 16
      %v509 = vrot.slane %v507, 5
      %v510 = vor.u32 %v506, %v509
      %v511 = vrot.slane %v510, 4
      %v513 = vshll.u32 %v495, 16
      %v515 = vrot.slane %v513, 5
      %v516 = vsel %vm314, %v511, %v515
      %v518 = vshrl.u32 %v488, 16
      %v520 = vrot.slane %v518, 4
      %v521 = vshll.u32 %v488, 16
      %v523 = vrot.slane %v521, 5
      %v524 = vor.u32 %v520, %v523
      %v525 = vrot.slane %v524, 4
      %v527 = vshll.u32 %v496, 16
      %v529 = vrot.slane %v527, 5
      %v530 = vsel %vm314, %v525, %v529
      %v532 = vshrl.u32 %v489, 16
      %v534 = vrot.slane %v532, 4
      %v535 = vshll.u32 %v489, 16
      %v537 = vrot.slane %v535, 5
      %v538 = vor.u32 %v534, %v537
      %v539 = vrot.slane %v538, 4
      %v541 = vshll.u32 %v497, 16
      %v543 = vrot.slane %v541, 5
      %v544 = vsel %vm314, %v539, %v543
      %v546 = vshrl.u32 %v490, 16
      %v548 = vrot.slane %v546, 4
      %v549 = vshll.u32 %v490, 16
      %v551 = vrot.slane %v549, 5
      %v552 = vor.u32 %v548, %v551
      %v553 = vrot.slane %v552, 4
      %v555 = vshll.u32 %v498, 16
      %v557 = vrot.slane %v555, 5
      %v558 = vsel %vm314, %v553, %v557
      %v560 = vshrl.u32 %v491, 16
      %v562 = vrot.slane %v560, 4
      %v563 = vshll.u32 %v491, 16
      %v565 = vrot.slane %v563, 5
      %v566 = vor.u32 %v562, %v565
      %v567 = vrot.slane %v566, 4
      %v569 = vshll.u32 %v499, 16
      %v571 = vrot.slane %v569, 5
      %v572 = vsel %vm314, %v567, %v571
      %v574 = vshrl.u32 %v492, 16
      %v576 = vrot.slane %v574, 4
      %v577 = vshll.u32 %v492, 16
      %v579 = vrot.slane %v577, 5
      %v580 = vor.u32 %v576, %v579
      %v581 = vrot.slane %v580, 4
      %v583 = vshll.u32 %v500, 16
      %v585 = vrot.slane %v583, 5
      %v586 = vsel %vm314, %v581, %v585
      %v588 = vshrl.u32 %v493, 16
      %v590 = vrot.slane %v588, 4
      %v591 = vshll.u32 %v493, 16
      %v593 = vrot.slane %v591, 5
      %v594 = vor.u32 %v590, %v593
      %v595 = vrot.slane %v594, 4
      %v597 = vshll.u32 %v501, 16
      %v599 = vrot.slane %v597, 5
      %v600 = vsel %vm314, %v595, %v599
      %v602 = vshrl.u32 %v494, 16
      %v604 = vrot.slane %v602, 4
      %v605 = vshll.u32 %v494, 16
      %v607 = vrot.slane %v605, 5
      %v608 = vor.u32 %v604, %v607
      %v609 = vrot.slane %v608, 4
      %v611 = vshll.u32 %v502, 16
      %v613 = vrot.slane %v611, 5
      %v614 = vsel %vm314, %v609, %v613
      %v615 = vld [vmem:[%s486] sm:$0xe]
      %v616 = vld [vmem:[%s486 + $0x8] sm:$0xe]
      %v617 = vld [vmem:[%s486 + $0x10] sm:$0xe]
      %v618 = vld [vmem:[%s486 + $0x18] sm:$0xe]
      %v619 = vld [vmem:[%s486 + $0x20] sm:$0xe]
      %v620 = vld [vmem:[%s486 + $0x28] sm:$0xe]
      %v621 = vld [vmem:[%s486 + $0x30] sm:$0xe]
      %v622 = vld [vmem:[%s486 + $0x38] sm:$0xe]
      %v639 = vrot.slane %v615, 5
      %v640 = vrot.slane %v639, 4
      %v641 = vrot.slane %v495, 5
      %v642 = vsel %vm453, %v640, %v641
      %v643 = vrot.slane %v616, 5
      %v644 = vrot.slane %v643, 4
      %v645 = vrot.slane %v496, 5
      %v646 = vsel %vm453, %v644, %v645
      %v647 = vrot.slane %v617, 5
      %v648 = vrot.slane %v647, 4
      %v649 = vrot.slane %v497, 5
      %v650 = vsel %vm453, %v648, %v649
      %v651 = vrot.slane %v618, 5
      %v652 = vrot.slane %v651, 4
      %v653 = vrot.slane %v498, 5
      %v654 = vsel %vm453, %v652, %v653
      %v655 = vrot.slane %v619, 5
      %v656 = vrot.slane %v655, 4
      %v657 = vrot.slane %v499, 5
      %v658 = vsel %vm453, %v656, %v657
      %v659 = vrot.slane %v620, 5
      %v660 = vrot.slane %v659, 4
      %v661 = vrot.slane %v500, 5
      %v662 = vsel %vm453, %v660, %v661
      %v663 = vrot.slane %v621, 5
      %v664 = vrot.slane %v663, 4
      %v665 = vrot.slane %v501, 5
      %v666 = vsel %vm453, %v664, %v665
      %v667 = vrot.slane %v622, 5
      %v668 = vrot.slane %v667, 4
      %v669 = vrot.slane %v502, 5
      %v670 = vsel %vm453, %v668, %v669
      %s671 = scalar_lea.vmem %s275, 16
      %v672 = vld [vmem:[%s671] sm:$0xf]
      %v673 = vld [vmem:[%s671 + $0x8] sm:$0xf]
      %v674 = vld [vmem:[%s671 + $0x10] sm:$0xf]
      %v675 = vld [vmem:[%s671 + $0x18] sm:$0xf]
      %v676 = vld [vmem:[%s671 + $0x20] sm:$0xf]
      %v677 = vld [vmem:[%s671 + $0x28] sm:$0xf]
      %v678 = vld [vmem:[%s671 + $0x30] sm:$0xf]
      %v679 = vld [vmem:[%s671 + $0x38] sm:$0xf]
      %v680 = vld [vmem:[%s671 + $0x4] sm:$0x1]
      %v681 = vld [vmem:[%s671 + $0xc] sm:$0x1]
      %v682 = vld [vmem:[%s671 + $0x14] sm:$0x1]
      %v683 = vld [vmem:[%s671 + $0x1c] sm:$0x1]
      %v684 = vld [vmem:[%s671 + $0x24] sm:$0x1]
      %v685 = vld [vmem:[%s671 + $0x2c] sm:$0x1]
      %v686 = vld [vmem:[%s671 + $0x34] sm:$0x1]
      %v687 = vld [vmem:[%s671 + $0x3c] sm:$0x1]
      %v689 = vshrl.u32 %v672, 16
      %v691 = vrot.slane %v689, 4
      %v692 = vshll.u32 %v672, 16
      %v694 = vrot.slane %v692, 5
      %v695 = vor.u32 %v691, %v694
      %v696 = vrot.slane %v695, 4
      %v698 = vshll.u32 %v680, 16
      %v700 = vrot.slane %v698, 5
      %v701 = vsel %vm314, %v696, %v700
      %v703 = vshrl.u32 %v673, 16
      %v705 = vrot.slane %v703, 4
      %v706 = vshll.u32 %v673, 16
      %v708 = vrot.slane %v706, 5
      %v709 = vor.u32 %v705, %v708
      %v710 = vrot.slane %v709, 4
      %v712 = vshll.u32 %v681, 16
      %v714 = vrot.slane %v712, 5
      %v715 = vsel %vm314, %v710, %v714
      %v717 = vshrl.u32 %v674, 16
      %v719 = vrot.slane %v717, 4
      %v720 = vshll.u32 %v674, 16
      %v722 = vrot.slane %v720, 5
      %v723 = vor.u32 %v719, %v722
      %v724 = vrot.slane %v723, 4
      %v726 = vshll.u32 %v682, 16
      %v728 = vrot.slane %v726, 5
      %v729 = vsel %vm314, %v724, %v728
      %v731 = vshrl.u32 %v675, 16
      %v733 = vrot.slane %v731, 4
      %v734 = vshll.u32 %v675, 16
      %v736 = vrot.slane %v734, 5
      %v737 = vor.u32 %v733, %v736
      %v738 = vrot.slane %v737, 4
      %v740 = vshll.u32 %v683, 16
      %v742 = vrot.slane %v740, 5
      %v743 = vsel %vm314, %v738, %v742
      %v745 = vshrl.u32 %v676, 16
      %v747 = vrot.slane %v745, 4
      %v748 = vshll.u32 %v676, 16
      %v750 = vrot.slane %v748, 5
      %v751 = vor.u32 %v747, %v750
      %v752 = vrot.slane %v751, 4
      %v754 = vshll.u32 %v684, 16
      %v756 = vrot.slane %v754, 5
      %v757 = vsel %vm314, %v752, %v756
      %v759 = vshrl.u32 %v677, 16
      %v761 = vrot.slane %v759, 4
      %v762 = vshll.u32 %v677, 16
      %v764 = vrot.slane %v762, 5
      %v765 = vor.u32 %v761, %v764
      %v766 = vrot.slane %v765, 4
      %v768 = vshll.u32 %v685, 16
      %v770 = vrot.slane %v768, 5
      %v771 = vsel %vm314, %v766, %v770
      %v773 = vshrl.u32 %v678, 16
      %v775 = vrot.slane %v773, 4
      %v776 = vshll.u32 %v678, 16
      %v778 = vrot.slane %v776, 5
      %v779 = vor.u32 %v775, %v778
      %v780 = vrot.slane %v779, 4
      %v782 = vshll.u32 %v686, 16
      %v784 = vrot.slane %v782, 5
      %v785 = vsel %vm314, %v780, %v784
      %v787 = vshrl.u32 %v679, 16
      %v789 = vrot.slane %v787, 4
      %v790 = vshll.u32 %v679, 16
      %v792 = vrot.slane %v790, 5
      %v793 = vor.u32 %v789, %v792
      %v794 = vrot.slane %v793, 4
      %v796 = vshll.u32 %v687, 16
      %v798 = vrot.slane %v796, 5
      %v799 = vsel %vm314, %v794, %v798
      %v800 = vld [vmem:[%s671] sm:$0xe]
      %v801 = vld [vmem:[%s671 + $0x8] sm:$0xe]
      %v802 = vld [vmem:[%s671 + $0x10] sm:$0xe]
      %v803 = vld [vmem:[%s671 + $0x18] sm:$0xe]
      %v804 = vld [vmem:[%s671 + $0x20] sm:$0xe]
      %v805 = vld [vmem:[%s671 + $0x28] sm:$0xe]
      %v806 = vld [vmem:[%s671 + $0x30] sm:$0xe]
      %v807 = vld [vmem:[%s671 + $0x38] sm:$0xe]
      %v824 = vrot.slane %v800, 5
      %v825 = vrot.slane %v824, 4
      %v826 = vrot.slane %v680, 5
      %v827 = vsel %vm453, %v825, %v826
      %v828 = vrot.slane %v801, 5
      %v829 = vrot.slane %v828, 4
      %v830 = vrot.slane %v681, 5
      %v831 = vsel %vm453, %v829, %v830
      %v832 = vrot.slane %v802, 5
      %v833 = vrot.slane %v832, 4
      %v834 = vrot.slane %v682, 5
      %v835 = vsel %vm453, %v833, %v834
      %v836 = vrot.slane %v803, 5
      %v837 = vrot.slane %v836, 4
      %v838 = vrot.slane %v683, 5
      %v839 = vsel %vm453, %v837, %v838
      %v840 = vrot.slane %v804, 5
      %v841 = vrot.slane %v840, 4
      %v842 = vrot.slane %v684, 5
      %v843 = vsel %vm453, %v841, %v842
      %v844 = vrot.slane %v805, 5
      %v845 = vrot.slane %v844, 4
      %v846 = vrot.slane %v685, 5
      %v847 = vsel %vm453, %v845, %v846
      %v848 = vrot.slane %v806, 5
      %v849 = vrot.slane %v848, 4
      %v850 = vrot.slane %v686, 5
      %v851 = vsel %vm453, %v849, %v850
      %v852 = vrot.slane %v807, 5
      %v853 = vrot.slane %v852, 4
      %v854 = vrot.slane %v687, 5
      %v855 = vsel %vm453, %v853, %v854
      %v864 = vunpack.c.l.b16 %v296
      %v865 = vunpack.c.l.b16 %v297
      %v866 = vunpack.c.l.b16 %v298
      %v867 = vunpack.c.l.b16 %v299
      %v868 = vunpack.c.l.b16 %v300
      %v869 = vunpack.c.l.b16 %v301
      %v870 = vunpack.c.l.b16 %v302
      %v871 = vunpack.c.l.b16 %v303
      %v872 = vpack.c.b16 %v865, %v864
      %v873 = vpack.c.b16 %v867, %v866
      %v874 = vpack.c.b16 %v869, %v868
      %v875 = vpack.c.b16 %v871, %v870
      %v880 = vunpack.c.l.b16 %v328
      %v881 = vunpack.c.l.b16 %v342
      %v882 = vunpack.c.l.b16 %v356
      %v883 = vunpack.c.l.b16 %v370
      %v884 = vunpack.c.l.b16 %v384
      %v885 = vunpack.c.l.b16 %v398
      %v886 = vunpack.c.l.b16 %v412
      %v887 = vunpack.c.l.b16 %v426
      %v888 = vpack.c.b16 %v881, %v880
      %v889 = vpack.c.b16 %v883, %v882
      %v890 = vpack.c.b16 %v885, %v884
      %v891 = vpack.c.b16 %v887, %v886
      %v896 = vunpack.c.l.b16 %v457
      %v897 = vunpack.c.l.b16 %v461
      %v898 = vunpack.c.l.b16 %v465
      %v899 = vunpack.c.l.b16 %v469
      %v900 = vunpack.c.l.b16 %v473
      %v901 = vunpack.c.l.b16 %v477
      %v902 = vunpack.c.l.b16 %v481
      %v903 = vunpack.c.l.b16 %v485
      %v904 = vpack.c.b16 %v897, %v896
      %v905 = vpack.c.b16 %v899, %v898
      %v906 = vpack.c.b16 %v901, %v900
      %v907 = vpack.c.b16 %v903, %v902
      %v920 = vunpack.c.l.b16 %v487
      %v921 = vunpack.c.l.b16 %v488
      %v922 = vunpack.c.l.b16 %v489
      %v923 = vunpack.c.l.b16 %v490
      %v924 = vunpack.c.l.b16 %v491
      %v925 = vunpack.c.l.b16 %v492
      %v926 = vunpack.c.l.b16 %v493
      %v927 = vunpack.c.l.b16 %v494
      %v928 = vpack.c.b16 %v921, %v920
      %v929 = vpack.c.b16 %v923, %v922
      %v930 = vpack.c.b16 %v925, %v924
      %v931 = vpack.c.b16 %v927, %v926
      %v936 = vunpack.c.l.b16 %v516
      %v937 = vunpack.c.l.b16 %v530
      %v938 = vunpack.c.l.b16 %v544
      %v939 = vunpack.c.l.b16 %v558
      %v940 = vunpack.c.l.b16 %v572
      %v941 = vunpack.c.l.b16 %v586
      %v942 = vunpack.c.l.b16 %v600
      %v943 = vunpack.c.l.b16 %v614
      %v944 = vpack.c.b16 %v937, %v936
      %v945 = vpack.c.b16 %v939, %v938
      %v946 = vpack.c.b16 %v941, %v940
      %v947 = vpack.c.b16 %v943, %v942
      %v952 = vunpack.c.l.b16 %v642
      %v953 = vunpack.c.l.b16 %v646
      %v954 = vunpack.c.l.b16 %v650
      %v955 = vunpack.c.l.b16 %v654
      %v956 = vunpack.c.l.b16 %v658
      %v957 = vunpack.c.l.b16 %v662
      %v958 = vunpack.c.l.b16 %v666
      %v959 = vunpack.c.l.b16 %v670
      %v960 = vpack.c.b16 %v953, %v952
      %v961 = vpack.c.b16 %v955, %v954
      %v962 = vpack.c.b16 %v957, %v956
      %v963 = vpack.c.b16 %v959, %v958
      %v976 = vunpack.c.l.b16 %v672
      %v977 = vunpack.c.l.b16 %v673
      %v978 = vunpack.c.l.b16 %v674
      %v979 = vunpack.c.l.b16 %v675
      %v980 = vunpack.c.l.b16 %v676
      %v981 = vunpack.c.l.b16 %v677
      %v982 = vunpack.c.l.b16 %v678
      %v983 = vunpack.c.l.b16 %v679
      %v984 = vpack.c.b16 %v977, %v976
      %v985 = vpack.c.b16 %v979, %v978
      %v986 = vpack.c.b16 %v981, %v980
      %v987 = vpack.c.b16 %v983, %v982
      %v992 = vunpack.c.l.b16 %v701
      %v993 = vunpack.c.l.b16 %v715
      %v994 = vunpack.c.l.b16 %v729
      %v995 = vunpack.c.l.b16 %v743
      %v996 = vunpack.c.l.b16 %v757
      %v997 = vunpack.c.l.b16 %v771
      %v998 = vunpack.c.l.b16 %v785
      %v999 = vunpack.c.l.b16 %v799
      %v1000 = vpack.c.b16 %v993, %v992
      %v1001 = vpack.c.b16 %v995, %v994
      %v1002 = vpack.c.b16 %v997, %v996
      %v1003 = vpack.c.b16 %v999, %v998
      %v1008 = vunpack.c.l.b16 %v827
      %v1009 = vunpack.c.l.b16 %v831
      %v1010 = vunpack.c.l.b16 %v835
      %v1011 = vunpack.c.l.b16 %v839
      %v1012 = vunpack.c.l.b16 %v843
      %v1013 = vunpack.c.l.b16 %v847
      %v1014 = vunpack.c.l.b16 %v851
      %v1015 = vunpack.c.l.b16 %v855
      %v1016 = vpack.c.b16 %v1009, %v1008
      %v1017 = vpack.c.b16 %v1011, %v1010
      %v1018 = vpack.c.b16 %v1013, %v1012
      %v1019 = vpack.c.b16 %v1015, %v1014
      %v1024 = vld [vmem:[%s1] sm:$0xf]
      %v1025 = vld [vmem:[%s1 + $0x4] sm:$0xf]
      %v1026 = vld [vmem:[%s1 + $0x8] sm:$0xf]
      %v1027 = vld [vmem:[%s1 + $0xc] sm:$0xf]
      %v1028 = vld [vmem:[%s1 + $0x10] sm:$0xf]
      %v1029 = vld [vmem:[%s1 + $0x14] sm:$0xf]
      %v1030 = vld [vmem:[%s1 + $0x18] sm:$0xf]
      %v1031 = vld [vmem:[%s1 + $0x1c] sm:$0xf]
      %v1032 = vld [vmem:[%s1 + $0x20] sm:$0xf]
      %v1033 = vld [vmem:[%s1 + $0x24] sm:$0xf]
      %v1034 = vld [vmem:[%s1 + $0x28] sm:$0xf]
      %v1035 = vld [vmem:[%s1 + $0x2c] sm:$0xf]
      %v1036 = vld [vmem:[%s1 + $0x30] sm:$0xf]
      %v1037 = vld [vmem:[%s1 + $0x34] sm:$0xf]
      %v1038 = vld [vmem:[%s1 + $0x38] sm:$0xf]
      %v1039 = vld [vmem:[%s1 + $0x3c] sm:$0xf]
      %v1040 = vld [vmem:[%s1 + $0x40] sm:$0xf]
      %v1041 = vld [vmem:[%s1 + $0x44] sm:$0xf]
      %v1042 = vld [vmem:[%s1 + $0x48] sm:$0xf]
      %v1043 = vld [vmem:[%s1 + $0x4c] sm:$0xf]
      %v1044 = vld [vmem:[%s1 + $0x50] sm:$0xf]
      %v1045 = vld [vmem:[%s1 + $0x54] sm:$0xf]
      %v1046 = vld [vmem:[%s1 + $0x58] sm:$0xf]
      %v1047 = vld [vmem:[%s1 + $0x5c] sm:$0xf]
      %v1048 = vld [vmem:[%s1 + $0x60] sm:$0xf]
      %v1049 = vld [vmem:[%s1 + $0x64] sm:$0xf]
      %v1050 = vld [vmem:[%s1 + $0x68] sm:$0xf]
      %v1051 = vld [vmem:[%s1 + $0x6c] sm:$0xf]
      %v1052 = vld [vmem:[%s1 + $0x70] sm:$0xf]
      %v1053 = vld [vmem:[%s1 + $0x74] sm:$0xf]
      %v1054 = vld [vmem:[%s1 + $0x78] sm:$0xf]
      %v1055 = vld [vmem:[%s1 + $0x7c] sm:$0xf]
      %v1056 = vld [vmem:[%s1 + $0x80] sm:$0xf]
      %v1057 = vld [vmem:[%s1 + $0x84] sm:$0xf]
      %v1058 = vld [vmem:[%s1 + $0x88] sm:$0xf]
      %v1059 = vld [vmem:[%s1 + $0x8c] sm:$0xf]
      %v1060 = vld [vmem:[%s1 + $0x90] sm:$0xf]
      %v1061 = vld [vmem:[%s1 + $0x94] sm:$0xf]
      %v1062 = vld [vmem:[%s1 + $0x98] sm:$0xf]
      %v1063 = vld [vmem:[%s1 + $0x9c] sm:$0xf]
      %v1064 = vld [vmem:[%s1 + $0xa0] sm:$0xf]
      %v1065 = vld [vmem:[%s1 + $0xa4] sm:$0xf]
      %v1066 = vld [vmem:[%s1 + $0xa8] sm:$0xf]
      %v1067 = vld [vmem:[%s1 + $0xac] sm:$0xf]
      %v1068 = vld [vmem:[%s1 + $0xb0] sm:$0xf]
      %v1069 = vld [vmem:[%s1 + $0xb4] sm:$0xf]
      %v1070 = vld [vmem:[%s1 + $0xb8] sm:$0xf]
      %v1071 = vld [vmem:[%s1 + $0xbc] sm:$0xf]
      %v1072 = vld [vmem:[%s1 + $0xc0] sm:$0xf]
      %v1073 = vld [vmem:[%s1 + $0xc4] sm:$0xf]
      %v1074 = vld [vmem:[%s1 + $0xc8] sm:$0xf]
      %v1075 = vld [vmem:[%s1 + $0xcc] sm:$0xf]
      %v1076 = vld [vmem:[%s1 + $0xd0] sm:$0xf]
      %v1077 = vld [vmem:[%s1 + $0xd4] sm:$0xf]
      %v1078 = vld [vmem:[%s1 + $0xd8] sm:$0xf]
      %v1079 = vld [vmem:[%s1 + $0xdc] sm:$0xf]
      %v1080 = vld [vmem:[%s1 + $0xe0] sm:$0xf]
      %v1081 = vld [vmem:[%s1 + $0xe4] sm:$0xf]
      %v1082 = vld [vmem:[%s1 + $0xe8] sm:$0xf]
      %v1083 = vld [vmem:[%s1 + $0xec] sm:$0xf]
      %v1084 = vld [vmem:[%s1 + $0xf0] sm:$0xf]
      %v1085 = vld [vmem:[%s1 + $0xf4] sm:$0xf]
      %v1086 = vld [vmem:[%s1 + $0xf8] sm:$0xf]
      %v1087 = vld [vmem:[%s1 + $0xfc] sm:$0xf]
      %v1088 = vld [vmem:[%s1 + $0x100] sm:$0xf]
      %v1089 = vld [vmem:[%s1 + $0x104] sm:$0xf]
      %v1090 = vld [vmem:[%s1 + $0x108] sm:$0xf]
      %v1091 = vld [vmem:[%s1 + $0x10c] sm:$0xf]
      %v1092 = vld [vmem:[%s1 + $0x110] sm:$0xf]
      %v1093 = vld [vmem:[%s1 + $0x114] sm:$0xf]
      %v1094 = vld [vmem:[%s1 + $0x118] sm:$0xf]
      %v1095 = vld [vmem:[%s1 + $0x11c] sm:$0xf]
      %v1096 = vld [vmem:[%s1 + $0x120] sm:$0xf]
      %v1097 = vld [vmem:[%s1 + $0x124] sm:$0xf]
      %v1098 = vld [vmem:[%s1 + $0x128] sm:$0xf]
      %v1099 = vld [vmem:[%s1 + $0x12c] sm:$0xf]
      %v1100 = vld [vmem:[%s1 + $0x130] sm:$0xf]
      %v1101 = vld [vmem:[%s1 + $0x134] sm:$0xf]
      %v1102 = vld [vmem:[%s1 + $0x138] sm:$0xf]
      %v1103 = vld [vmem:[%s1 + $0x13c] sm:$0xf]
      %v1104 = vld [vmem:[%s1 + $0x140] sm:$0xf]
      %v1105 = vld [vmem:[%s1 + $0x144] sm:$0xf]
      %v1106 = vld [vmem:[%s1 + $0x148] sm:$0xf]
      %v1107 = vld [vmem:[%s1 + $0x14c] sm:$0xf]
      %v1108 = vld [vmem:[%s1 + $0x150] sm:$0xf]
      %v1109 = vld [vmem:[%s1 + $0x154] sm:$0xf]
      %v1110 = vld [vmem:[%s1 + $0x158] sm:$0xf]
      %v1111 = vld [vmem:[%s1 + $0x15c] sm:$0xf]
      %v1112 = vld [vmem:[%s1 + $0x160] sm:$0xf]
      %v1113 = vld [vmem:[%s1 + $0x164] sm:$0xf]
      %v1114 = vld [vmem:[%s1 + $0x168] sm:$0xf]
      %v1115 = vld [vmem:[%s1 + $0x16c] sm:$0xf]
      %v1116 = vld [vmem:[%s1 + $0x170] sm:$0xf]
      %v1117 = vld [vmem:[%s1 + $0x174] sm:$0xf]
      %v1118 = vld [vmem:[%s1 + $0x178] sm:$0xf]
      %v1119 = vld [vmem:[%s1 + $0x17c] sm:$0xf]
      %v1120 = vld [vmem:[%s1 + $0x180] sm:$0xf]
      %v1121 = vld [vmem:[%s1 + $0x184] sm:$0xf]
      %v1122 = vld [vmem:[%s1 + $0x188] sm:$0xf]
      %v1123 = vld [vmem:[%s1 + $0x18c] sm:$0xf]
      %v1124 = vld [vmem:[%s1 + $0x190] sm:$0xf]
      %v1125 = vld [vmem:[%s1 + $0x194] sm:$0xf]
      %v1126 = vld [vmem:[%s1 + $0x198] sm:$0xf]
      %v1127 = vld [vmem:[%s1 + $0x19c] sm:$0xf]
      %v1128 = vld [vmem:[%s1 + $0x1a0] sm:$0xf]
      %v1129 = vld [vmem:[%s1 + $0x1a4] sm:$0xf]
      %v1130 = vld [vmem:[%s1 + $0x1a8] sm:$0xf]
      %v1131 = vld [vmem:[%s1 + $0x1ac] sm:$0xf]
      %v1132 = vld [vmem:[%s1 + $0x1b0] sm:$0xf]
      %v1133 = vld [vmem:[%s1 + $0x1b4] sm:$0xf]
      %v1134 = vld [vmem:[%s1 + $0x1b8] sm:$0xf]
      %v1135 = vld [vmem:[%s1 + $0x1bc] sm:$0xf]
      %v1136 = vld [vmem:[%s1 + $0x1c0] sm:$0xf]
      %v1137 = vld [vmem:[%s1 + $0x1c4] sm:$0xf]
      %v1138 = vld [vmem:[%s1 + $0x1c8] sm:$0xf]
      %v1139 = vld [vmem:[%s1 + $0x1cc] sm:$0xf]
      %v1140 = vld [vmem:[%s1 + $0x1d0] sm:$0xf]
      %v1141 = vld [vmem:[%s1 + $0x1d4] sm:$0xf]
      %v1142 = vld [vmem:[%s1 + $0x1d8] sm:$0xf]
      %v1143 = vld [vmem:[%s1 + $0x1dc] sm:$0xf]
      %v1144 = vld [vmem:[%s1 + $0x1e0] sm:$0xf]
      %v1145 = vld [vmem:[%s1 + $0x1e4] sm:$0xf]
      %v1146 = vld [vmem:[%s1 + $0x1e8] sm:$0xf]
      %v1147 = vld [vmem:[%s1 + $0x1ec] sm:$0xf]
      %v1148 = vld [vmem:[%s1 + $0x1f0] sm:$0xf]
      %v1149 = vld [vmem:[%s1 + $0x1f4] sm:$0xf]
      %v1150 = vld [vmem:[%s1 + $0x1f8] sm:$0xf]
      %v1151 = vld [vmem:[%s1 + $0x1fc] sm:$0xf]
      %v1152 = vld [vmem:[%s1 + $0x200] sm:$0xf]
      %v1153 = vld [vmem:[%s1 + $0x204] sm:$0xf]
      %v1154 = vld [vmem:[%s1 + $0x208] sm:$0xf]
      %v1155 = vld [vmem:[%s1 + $0x20c] sm:$0xf]
      %v1156 = vld [vmem:[%s1 + $0x210] sm:$0xf]
      %v1157 = vld [vmem:[%s1 + $0x214] sm:$0xf]
      %v1158 = vld [vmem:[%s1 + $0x218] sm:$0xf]
      %v1159 = vld [vmem:[%s1 + $0x21c] sm:$0xf]
      %v1160 = vld [vmem:[%s1 + $0x220] sm:$0xf]
      %v1161 = vld [vmem:[%s1 + $0x224] sm:$0xf]
      %v1162 = vld [vmem:[%s1 + $0x228] sm:$0xf]
      %v1163 = vld [vmem:[%s1 + $0x22c] sm:$0xf]
      %v1164 = vld [vmem:[%s1 + $0x230] sm:$0xf]
      %v1165 = vld [vmem:[%s1 + $0x234] sm:$0xf]
      %v1166 = vld [vmem:[%s1 + $0x238] sm:$0xf]
      %v1167 = vld [vmem:[%s1 + $0x23c] sm:$0xf]
      %v1312 = vunpack.c.l.b16 %v1024
      %v1313 = vunpack.c.l.b16 %v1025
      %v1314 = vunpack.c.l.b16 %v1026
      %v1315 = vunpack.c.l.b16 %v1027
      %v1316 = vunpack.c.l.b16 %v1028
      %v1317 = vunpack.c.l.b16 %v1029
      %v1318 = vunpack.c.l.b16 %v1030
      %v1319 = vunpack.c.l.b16 %v1031
      %v1320 = vunpack.c.l.b16 %v1032
      %v1321 = vunpack.c.l.b16 %v1033
      %v1322 = vunpack.c.l.b16 %v1034
      %v1323 = vunpack.c.l.b16 %v1035
      %v1324 = vunpack.c.l.b16 %v1036
      %v1325 = vunpack.c.l.b16 %v1037
      %v1326 = vunpack.c.l.b16 %v1038
      %v1327 = vunpack.c.l.b16 %v1039
      %v1328 = vunpack.c.l.b16 %v1040
      %v1329 = vunpack.c.l.b16 %v1041
      %v1330 = vunpack.c.l.b16 %v1042
      %v1331 = vunpack.c.l.b16 %v1043
      %v1332 = vunpack.c.l.b16 %v1044
      %v1333 = vunpack.c.l.b16 %v1045
      %v1334 = vunpack.c.l.b16 %v1046
      %v1335 = vunpack.c.l.b16 %v1047
      %v1336 = vunpack.c.l.b16 %v1048
      %v1337 = vunpack.c.l.b16 %v1049
      %v1338 = vunpack.c.l.b16 %v1050
      %v1339 = vunpack.c.l.b16 %v1051
      %v1340 = vunpack.c.l.b16 %v1052
      %v1341 = vunpack.c.l.b16 %v1053
      %v1342 = vunpack.c.l.b16 %v1054
      %v1343 = vunpack.c.l.b16 %v1055
      %v1344 = vunpack.c.l.b16 %v1056
      %v1345 = vunpack.c.l.b16 %v1057
      %v1346 = vunpack.c.l.b16 %v1058
      %v1347 = vunpack.c.l.b16 %v1059
      %v1348 = vunpack.c.l.b16 %v1060
      %v1349 = vunpack.c.l.b16 %v1061
      %v1350 = vunpack.c.l.b16 %v1062
      %v1351 = vunpack.c.l.b16 %v1063
      %v1352 = vunpack.c.l.b16 %v1064
      %v1353 = vunpack.c.l.b16 %v1065
      %v1354 = vunpack.c.l.b16 %v1066
      %v1355 = vunpack.c.l.b16 %v1067
      %v1356 = vunpack.c.l.b16 %v1068
      %v1357 = vunpack.c.l.b16 %v1069
      %v1358 = vunpack.c.l.b16 %v1070
      %v1359 = vunpack.c.l.b16 %v1071
      %v1360 = vunpack.c.l.b16 %v1072
      %v1361 = vunpack.c.l.b16 %v1073
      %v1362 = vunpack.c.l.b16 %v1074
      %v1363 = vunpack.c.l.b16 %v1075
      %v1364 = vunpack.c.l.b16 %v1076
      %v1365 = vunpack.c.l.b16 %v1077
      %v1366 = vunpack.c.l.b16 %v1078
      %v1367 = vunpack.c.l.b16 %v1079
      %v1368 = vunpack.c.l.b16 %v1080
      %v1369 = vunpack.c.l.b16 %v1081
      %v1370 = vunpack.c.l.b16 %v1082
      %v1371 = vunpack.c.l.b16 %v1083
      %v1372 = vunpack.c.l.b16 %v1084
      %v1373 = vunpack.c.l.b16 %v1085
      %v1374 = vunpack.c.l.b16 %v1086
      %v1375 = vunpack.c.l.b16 %v1087
      %v1376 = vunpack.c.l.b16 %v1088
      %v1377 = vunpack.c.l.b16 %v1089
      %v1378 = vunpack.c.l.b16 %v1090
      %v1379 = vunpack.c.l.b16 %v1091
      %v1380 = vunpack.c.l.b16 %v1092
      %v1381 = vunpack.c.l.b16 %v1093
      %v1382 = vunpack.c.l.b16 %v1094
      %v1383 = vunpack.c.l.b16 %v1095
      %v1384 = vunpack.c.l.b16 %v1096
      %v1385 = vunpack.c.l.b16 %v1097
      %v1386 = vunpack.c.l.b16 %v1098
      %v1387 = vunpack.c.l.b16 %v1099
      %v1388 = vunpack.c.l.b16 %v1100
      %v1389 = vunpack.c.l.b16 %v1101
      %v1390 = vunpack.c.l.b16 %v1102
      %v1391 = vunpack.c.l.b16 %v1103
      %v1392 = vunpack.c.l.b16 %v1104
      %v1393 = vunpack.c.l.b16 %v1105
      %v1394 = vunpack.c.l.b16 %v1106
      %v1395 = vunpack.c.l.b16 %v1107
      %v1396 = vunpack.c.l.b16 %v1108
      %v1397 = vunpack.c.l.b16 %v1109
      %v1398 = vunpack.c.l.b16 %v1110
      %v1399 = vunpack.c.l.b16 %v1111
      %v1400 = vunpack.c.l.b16 %v1112
      %v1401 = vunpack.c.l.b16 %v1113
      %v1402 = vunpack.c.l.b16 %v1114
      %v1403 = vunpack.c.l.b16 %v1115
      %v1404 = vunpack.c.l.b16 %v1116
      %v1405 = vunpack.c.l.b16 %v1117
      %v1406 = vunpack.c.l.b16 %v1118
      %v1407 = vunpack.c.l.b16 %v1119
      %v1408 = vunpack.c.l.b16 %v1120
      %v1409 = vunpack.c.l.b16 %v1121
      %v1410 = vunpack.c.l.b16 %v1122
      %v1411 = vunpack.c.l.b16 %v1123
      %v1412 = vunpack.c.l.b16 %v1124
      %v1413 = vunpack.c.l.b16 %v1125
      %v1414 = vunpack.c.l.b16 %v1126
      %v1415 = vunpack.c.l.b16 %v1127
      %v1416 = vunpack.c.l.b16 %v1128
      %v1417 = vunpack.c.l.b16 %v1129
      %v1418 = vunpack.c.l.b16 %v1130
      %v1419 = vunpack.c.l.b16 %v1131
      %v1420 = vunpack.c.l.b16 %v1132
      %v1421 = vunpack.c.l.b16 %v1133
      %v1422 = vunpack.c.l.b16 %v1134
      %v1423 = vunpack.c.l.b16 %v1135
      %v1424 = vunpack.c.l.b16 %v1136
      %v1425 = vunpack.c.l.b16 %v1137
      %v1426 = vunpack.c.l.b16 %v1138
      %v1427 = vunpack.c.l.b16 %v1139
      %v1428 = vunpack.c.l.b16 %v1140
      %v1429 = vunpack.c.l.b16 %v1141
      %v1430 = vunpack.c.l.b16 %v1142
      %v1431 = vunpack.c.l.b16 %v1143
      %v1432 = vunpack.c.l.b16 %v1144
      %v1433 = vunpack.c.l.b16 %v1145
      %v1434 = vunpack.c.l.b16 %v1146
      %v1435 = vunpack.c.l.b16 %v1147
      %v1436 = vunpack.c.l.b16 %v1148
      %v1437 = vunpack.c.l.b16 %v1149
      %v1438 = vunpack.c.l.b16 %v1150
      %v1439 = vunpack.c.l.b16 %v1151
      %v1440 = vunpack.c.l.b16 %v1152
      %v1441 = vunpack.c.l.b16 %v1153
      %v1442 = vunpack.c.l.b16 %v1154
      %v1443 = vunpack.c.l.b16 %v1155
      %v1444 = vunpack.c.l.b16 %v1156
      %v1445 = vunpack.c.l.b16 %v1157
      %v1446 = vunpack.c.l.b16 %v1158
      %v1447 = vunpack.c.l.b16 %v1159
      %v1448 = vunpack.c.l.b16 %v1160
      %v1449 = vunpack.c.l.b16 %v1161
      %v1450 = vunpack.c.l.b16 %v1162
      %v1451 = vunpack.c.l.b16 %v1163
      %v1452 = vunpack.c.l.b16 %v1164
      %v1453 = vunpack.c.l.b16 %v1165
      %v1454 = vunpack.c.l.b16 %v1166
      %v1455 = vunpack.c.l.b16 %v1167
      %v1456 = vpack.c.b16 %v1313, %v1312
      %v1457 = vpack.c.b16 %v1315, %v1314
      %v1458 = vpack.c.b16 %v1317, %v1316
      %v1459 = vpack.c.b16 %v1319, %v1318
      %v1460 = vpack.c.b16 %v1321, %v1320
      %v1461 = vpack.c.b16 %v1323, %v1322
      %v1462 = vpack.c.b16 %v1325, %v1324
      %v1463 = vpack.c.b16 %v1327, %v1326
      %v1464 = vpack.c.b16 %v1329, %v1328
      %v1465 = vpack.c.b16 %v1331, %v1330
      %v1466 = vpack.c.b16 %v1333, %v1332
      %v1467 = vpack.c.b16 %v1335, %v1334
      %v1468 = vpack.c.b16 %v1337, %v1336
      %v1469 = vpack.c.b16 %v1339, %v1338
      %v1470 = vpack.c.b16 %v1341, %v1340
      %v1471 = vpack.c.b16 %v1343, %v1342
      %v1472 = vpack.c.b16 %v1345, %v1344
      %v1473 = vpack.c.b16 %v1347, %v1346
      %v1474 = vpack.c.b16 %v1349, %v1348
      %v1475 = vpack.c.b16 %v1351, %v1350
      %v1476 = vpack.c.b16 %v1353, %v1352
      %v1477 = vpack.c.b16 %v1355, %v1354
      %v1478 = vpack.c.b16 %v1357, %v1356
      %v1479 = vpack.c.b16 %v1359, %v1358
      %v1480 = vpack.c.b16 %v1361, %v1360
      %v1481 = vpack.c.b16 %v1363, %v1362
      %v1482 = vpack.c.b16 %v1365, %v1364
      %v1483 = vpack.c.b16 %v1367, %v1366
      %v1484 = vpack.c.b16 %v1369, %v1368
      %v1485 = vpack.c.b16 %v1371, %v1370
      %v1486 = vpack.c.b16 %v1373, %v1372
      %v1487 = vpack.c.b16 %v1375, %v1374
      %v1488 = vpack.c.b16 %v1377, %v1376
      %v1489 = vpack.c.b16 %v1379, %v1378
      %v1490 = vpack.c.b16 %v1381, %v1380
      %v1491 = vpack.c.b16 %v1383, %v1382
      %v1492 = vpack.c.b16 %v1385, %v1384
      %v1493 = vpack.c.b16 %v1387, %v1386
      %v1494 = vpack.c.b16 %v1389, %v1388
      %v1495 = vpack.c.b16 %v1391, %v1390
      %v1496 = vpack.c.b16 %v1393, %v1392
      %v1497 = vpack.c.b16 %v1395, %v1394
      %v1498 = vpack.c.b16 %v1397, %v1396
      %v1499 = vpack.c.b16 %v1399, %v1398
      %v1500 = vpack.c.b16 %v1401, %v1400
      %v1501 = vpack.c.b16 %v1403, %v1402
      %v1502 = vpack.c.b16 %v1405, %v1404
      %v1503 = vpack.c.b16 %v1407, %v1406
      %v1504 = vpack.c.b16 %v1409, %v1408
      %v1505 = vpack.c.b16 %v1411, %v1410
      %v1506 = vpack.c.b16 %v1413, %v1412
      %v1507 = vpack.c.b16 %v1415, %v1414
      %v1508 = vpack.c.b16 %v1417, %v1416
      %v1509 = vpack.c.b16 %v1419, %v1418
      %v1510 = vpack.c.b16 %v1421, %v1420
      %v1511 = vpack.c.b16 %v1423, %v1422
      %v1512 = vpack.c.b16 %v1425, %v1424
      %v1513 = vpack.c.b16 %v1427, %v1426
      %v1514 = vpack.c.b16 %v1429, %v1428
      %v1515 = vpack.c.b16 %v1431, %v1430
      %v1516 = vpack.c.b16 %v1433, %v1432
      %v1517 = vpack.c.b16 %v1435, %v1434
      %v1518 = vpack.c.b16 %v1437, %v1436
      %v1519 = vpack.c.b16 %v1439, %v1438
      %v1520 = vpack.c.b16 %v1441, %v1440
      %v1521 = vpack.c.b16 %v1443, %v1442
      %v1522 = vpack.c.b16 %v1445, %v1444
      %v1523 = vpack.c.b16 %v1447, %v1446
      %v1524 = vpack.c.b16 %v1449, %v1448
      %v1525 = vpack.c.b16 %v1451, %v1450
      %v1526 = vpack.c.b16 %v1453, %v1452
      %v1527 = vpack.c.b16 %v1455, %v1454
      %1600 = vmatprep.subr.bf16.mxu0 0
      %1601 = vmatpush1.bf16.msra.mxu0 %v1456
      %1602 = vmatprep.subr.bf16.mxu0 0
      %1603 = vmatpush1.bf16.msra.mxu0 %v1457
      %1604 = vmatprep.subr.bf16.mxu0 0
      %1605 = vmatpush1.bf16.msra.mxu0 %v1458
      %1606 = vmatprep.subr.bf16.mxu0 0
      %1607 = vmatpush1.bf16.msra.mxu0 %v1459
      %1608 = vmatprep.subr.bf16.mxu0 0
      %1609 = vmatpush1.bf16.msra.mxu0 %v1460
      %1610 = vmatprep.subr.bf16.mxu0 0
      %1611 = vmatpush1.bf16.msra.mxu0 %v1461
      %1612 = vmatprep.subr.bf16.mxu0 0
      %1613 = vmatpush1.bf16.msra.mxu0 %v1462
      %1614 = vmatprep.subr.bf16.mxu0 0
      %1615 = vmatpush1.bf16.msra.mxu0 %v1463
      %1616 = vmatprep.subr.bf16.mxu0 0
      %1617 = vmatpush1.bf16.msra.mxu0 %v1464
      %1618 = vmatprep.subr.bf16.mxu0 0
      %1619 = vmatpush1.bf16.msra.mxu0 %v1465
      %1620 = vmatprep.subr.bf16.mxu0 0
      %1621 = vmatpush1.bf16.msra.mxu0 %v1466
      %1622 = vmatprep.subr.bf16.mxu0 0
      %1623 = vmatpush1.bf16.msra.mxu0 %v1467
      %1624 = vmatprep.subr.bf16.mxu0 0
      %1625 = vmatpush1.bf16.msra.mxu0 %v1468
      %1626 = vmatprep.subr.bf16.mxu0 0
      %1627 = vmatpush1.bf16.msra.mxu0 %v1469
      %1628 = vmatprep.subr.bf16.mxu0 0
      %1629 = vmatpush1.bf16.msra.mxu0 %v1470
      %1630 = vmatprep.subr.bf16.mxu0 0
      %1631 = vmatpush1.bf16.msra.mxu0 %v1471
      %1632 = vmatprep.mubr.bf16.mxu0 %v888
      %1633 = vmatmul.mubr.bf16.gmra.mrb[0].mxu0 %v872
      %v1634 = vpop.f32.mrb[0].mxu0
      %v1635 = vadd.f32 0.0, %v1634
      %v1636 = vpop.f32.mrb[0].mxu0
      %v1637 = vpop.f32.mrb[0].mxu0
      %v1638 = vadd.f32 0.0, %v1637
      %v1639 = vpop.f32.mrb[0].mxu0
      %1640 = vmatprep.mubr.bf16.mxu0 %v889
      %1641 = vmatmul.mubr.bf16.gmra.mrb[0].mxu0 %v873
      %v1642 = vpop.f32.mrb[0].mxu0
      %v1643 = vadd.f32 0.0, %v1642
      %v1644 = vpop.f32.mrb[0].mxu0
      %v1645 = vpop.f32.mrb[0].mxu0
      %v1646 = vadd.f32 0.0, %v1645
      %v1647 = vpop.f32.mrb[0].mxu0
      %1648 = vmatprep.mubr.bf16.mxu0 %v890
      %1649 = vmatmul.mubr.bf16.gmra.mrb[0].mxu0 %v874
      %v1650 = vpop.f32.mrb[0].mxu0
      %v1651 = vadd.f32 0.0, %v1650
      %v1652 = vpop.f32.mrb[0].mxu0
      %v1653 = vpop.f32.mrb[0].mxu0
      %v1654 = vadd.f32 0.0, %v1653
      %v1655 = vpop.f32.mrb[0].mxu0
      %1656 = vmatprep.mubr.bf16.mxu0 %v891
      %1657 = vmatmul.mubr.bf16.gmra.mrb[0].mxu0 %v875
      %v1658 = vpop.f32.mrb[0].mxu0
      %v1659 = vadd.f32 0.0, %v1658
      %v1660 = vpop.f32.mrb[0].mxu0
      %v1661 = vpop.f32.mrb[0].mxu0
      %v1662 = vadd.f32 0.0, %v1661
      %v1663 = vpop.f32.mrb[0].mxu0
      %1664 = vdwg.mxu0
      %1665 = vmatprep.subr.bf16.mxu0 0
      %1666 = vmatpush1.bf16.msra.mxu0 %v1472
      %1667 = vmatprep.subr.bf16.mxu0 0
      %1668 = vmatpush1.bf16.msra.mxu0 %v1473
      %1669 = vmatprep.subr.bf16.mxu0 0
      %1670 = vmatpush1.bf16.msra.mxu0 %v1474
      %1671 = vmatprep.subr.bf16.mxu0 0
      %1672 = vmatpush1.bf16.msra.mxu0 %v1475
      %1673 = vmatprep.subr.bf16.mxu0 0
      %1674 = vmatpush1.bf16.msra.mxu0 %v1476
      %1675 = vmatprep.subr.bf16.mxu0 0
      %1676 = vmatpush1.bf16.msra.mxu0 %v1477
      %1677 = vmatprep.subr.bf16.mxu0 0
      %1678 = vmatpush1.bf16.msra.mxu0 %v1478
      %1679 = vmatprep.subr.bf16.mxu0 0
      %1680 = vmatpush1.bf16.msra.mxu0 %v1479
      %1681 = vmatprep.subr.bf16.mxu0 0
      %1682 = vmatpush1.bf16.msra.mxu0 %v1480
      %1683 = vmatprep.subr.bf16.mxu0 0
      %1684 = vmatpush1.bf16.msra.mxu0 %v1481
      %1685 = vmatprep.subr.bf16.mxu0 0
      %1686 = vmatpush1.bf16.msra.mxu0 %v1482
      %1687 = vmatprep.subr.bf16.mxu0 0
      %1688 = vmatpush1.bf16.msra.mxu0 %v1483
      %1689 = vmatprep.subr.bf16.mxu0 0
      %1690 = vmatpush1.bf16.msra.mxu0 %v1484
      %1691 = vmatprep.subr.bf16.mxu0 0
      %1692 = vmatpush1.bf16.msra.mxu0 %v1485
      %1693 = vmatprep.subr.bf16.mxu0 0
      %1694 = vmatpush1.bf16.msra.mxu0 %v1486
      %1695 = vmatprep.subr.bf16.mxu0 0
      %1696 = vmatpush1.bf16.msra.mxu0 %v1487
      %1697 = vmatprep.mubr.bf16.mxu0 %v928
      %1698 = vmatmul.mubr.bf16.gmra.mrb[0].mxu0 %v904
      %v1699 = vpop.f32.mrb[0].mxu0
      %v1700 = vadd.f32 %v1635, %v1699
      %v1701 = vpop.f32.mrb[0].mxu0
      %v1702 = vpop.f32.mrb[0].mxu0
      %v1703 = vadd.f32 %v1638, %v1702
      %v1704 = vpop.f32.mrb[0].mxu0
      %1705 = vmatprep.mubr.bf16.mxu0 %v929
      %1706 = vmatmul.mubr.bf16.gmra.mrb[0].mxu0 %v905
      %v1707 = vpop.f32.mrb[0].mxu0
      %v1708 = vadd.f32 %v1643, %v1707
      %v1709 = vpop.f32.mrb[0].mxu0
      %v1710 = vpop.f32.mrb[0].mxu0
      %v1711 = vadd.f32 %v1646, %v1710
      %v1712 = vpop.f32.mrb[0].mxu0
      %1713 = vmatprep.mubr.bf16.mxu0 %v930
      %1714 = vmatmul.mubr.bf16.gmra.mrb[0].mxu0 %v906
      %v1715 = vpop.f32.mrb[0].mxu0
      %v1716 = vadd.f32 %v1651, %v1715
      %v1717 = vpop.f32.mrb[0].mxu0
      %v1718 = vpop.f32.mrb[0].mxu0
      %v1719 = vadd.f32 %v1654, %v1718
      %v1720 = vpop.f32.mrb[0].mxu0
      %1721 = vmatprep.mubr.bf16.mxu0 %v931
      %1722 = vmatmul.mubr.bf16.gmra.mrb[0].mxu0 %v907
      %v1723 = vpop.f32.mrb[0].mxu0
      %v1724 = vadd.f32 %v1659, %v1723
      %v1725 = vpop.f32.mrb[0].mxu0
      %v1726 = vpop.f32.mrb[0].mxu0
      %v1727 = vadd.f32 %v1662, %v1726
      %v1728 = vpop.f32.mrb[0].mxu0
      %1729 = vdwg.mxu0
      %1730 = vmatprep.subr.bf16.mxu0 0
      %1731 = vmatpush1.bf16.msra.mxu0 %v1488
      %1732 = vmatprep.subr.bf16.mxu0 0
      %1733 = vmatpush1.bf16.msra.mxu0 %v1489
      %1734 = vmatprep.subr.bf16.mxu0 0
      %1735 = vmatpush1.bf16.msra.mxu0 %v1490
      %1736 = vmatprep.subr.bf16.mxu0 0
      %1737 = vmatpush1.bf16.msra.mxu0 %v1491
      %1738 = vmatprep.subr.bf16.mxu0 0
      %1739 = vmatpush1.bf16.msra.mxu0 %v1492
      %1740 = vmatprep.subr.bf16.mxu0 0
      %1741 = vmatpush1.bf16.msra.mxu0 %v1493
      %1742 = vmatprep.subr.bf16.mxu0 0
      %1743 = vmatpush1.bf16.msra.mxu0 %v1494
      %1744 = vmatprep.subr.bf16.mxu0 0
      %1745 = vmatpush1.bf16.msra.mxu0 %v1495
      %1746 = vmatprep.subr.bf16.mxu0 0
      %1747 = vmatpush1.bf16.msra.mxu0 %v1496
      %1748 = vmatprep.subr.bf16.mxu0 0
      %1749 = vmatpush1.bf16.msra.mxu0 %v1497
      %1750 = vmatprep.subr.bf16.mxu0 0
      %1751 = vmatpush1.bf16.msra.mxu0 %v1498
      %1752 = vmatprep.subr.bf16.mxu0 0
      %1753 = vmatpush1.bf16.msra.mxu0 %v1499
      %1754 = vmatprep.subr.bf16.mxu0 0
      %1755 = vmatpush1.bf16.msra.mxu0 %v1500
      %1756 = vmatprep.subr.bf16.mxu0 0
      %1757 = vmatpush1.bf16.msra.mxu0 %v1501
      %1758 = vmatprep.subr.bf16.mxu0 0
      %1759 = vmatpush1.bf16.msra.mxu0 %v1502
      %1760 = vmatprep.subr.bf16.mxu0 0
      %1761 = vmatpush1.bf16.msra.mxu0 %v1503
      %1762 = vmatprep.mubr.bf16.mxu0 %v960
      %1763 = vmatmul.mubr.bf16.gmra.mrb[0].mxu0 %v944
      %v1764 = vpop.f32.mrb[0].mxu0
      %v1765 = vadd.f32 %v1700, %v1764
      %v1766 = vpop.f32.mrb[0].mxu0
      %v1767 = vpop.f32.mrb[0].mxu0
      %v1768 = vadd.f32 %v1703, %v1767
      %v1769 = vpop.f32.mrb[0].mxu0
      %1770 = vmatprep.mubr.bf16.mxu0 %v961
      %1771 = vmatmul.mubr.bf16.gmra.mrb[0].mxu0 %v945
      %v1772 = vpop.f32.mrb[0].mxu0
      %v1773 = vadd.f32 %v1708, %v1772
      %v1774 = vpop.f32.mrb[0].mxu0
      %v1775 = vpop.f32.mrb[0].mxu0
      %v1776 = vadd.f32 %v1711, %v1775
      %v1777 = vpop.f32.mrb[0].mxu0
      %1778 = vmatprep.mubr.bf16.mxu0 %v962
      %1779 = vmatmul.mubr.bf16.gmra.mrb[0].mxu0 %v946
      %v1780 = vpop.f32.mrb[0].mxu0
      %v1781 = vadd.f32 %v1716, %v1780
      %v1782 = vpop.f32.mrb[0].mxu0
      %v1783 = vpop.f32.mrb[0].mxu0
      %v1784 = vadd.f32 %v1719, %v1783
      %v1785 = vpop.f32.mrb[0].mxu0
      %1786 = vmatprep.mubr.bf16.mxu0 %v963
      %1787 = vmatmul.mubr.bf16.gmra.mrb[0].mxu0 %v947
      %v1788 = vpop.f32.mrb[0].mxu0
      %v1789 = vadd.f32 %v1724, %v1788
      %v1790 = vpop.f32.mrb[0].mxu0
      %v1791 = vpop.f32.mrb[0].mxu0
      %v1792 = vadd.f32 %v1727, %v1791
      %v1793 = vpop.f32.mrb[0].mxu0
      %1794 = vdwg.mxu0
      %1795 = vmatprep.subr.bf16.mxu0 0
      %1796 = vmatpush1.bf16.msra.mxu0 %v1504
      %1797 = vmatprep.subr.bf16.mxu0 0
      %1798 = vmatpush1.bf16.msra.mxu0 %v1505
      %1799 = vmatprep.subr.bf16.mxu0 0
      %1800 = vmatpush1.bf16.msra.mxu0 %v1506
      %1801 = vmatprep.subr.bf16.mxu0 0
      %1802 = vmatpush1.bf16.msra.mxu0 %v1507
      %1803 = vmatprep.subr.bf16.mxu0 0
      %1804 = vmatpush1.bf16.msra.mxu0 %v1508
      %1805 = vmatprep.subr.bf16.mxu0 0
      %1806 = vmatpush1.bf16.msra.mxu0 %v1509
      %1807 = vmatprep.subr.bf16.mxu0 0
      %1808 = vmatpush1.bf16.msra.mxu0 %v1510
      %1809 = vmatprep.subr.bf16.mxu0 0
      %1810 = vmatpush1.bf16.msra.mxu0 %v1511
      %1811 = vmatprep.subr.bf16.mxu0 0
      %1812 = vmatpush1.bf16.msra.mxu0 %v1512
      %1813 = vmatprep.subr.bf16.mxu0 0
      %1814 = vmatpush1.bf16.msra.mxu0 %v1513
      %1815 = vmatprep.subr.bf16.mxu0 0
      %1816 = vmatpush1.bf16.msra.mxu0 %v1514
      %1817 = vmatprep.subr.bf16.mxu0 0
      %1818 = vmatpush1.bf16.msra.mxu0 %v1515
      %1819 = vmatprep.subr.bf16.mxu0 0
      %1820 = vmatpush1.bf16.msra.mxu0 %v1516
      %1821 = vmatprep.subr.bf16.mxu0 0
      %1822 = vmatpush1.bf16.msra.mxu0 %v1517
      %1823 = vmatprep.subr.bf16.mxu0 0
      %1824 = vmatpush1.bf16.msra.mxu0 %v1518
      %1825 = vmatprep.subr.bf16.mxu0 0
      %1826 = vmatpush1.bf16.msra.mxu0 %v1519
      %1827 = vmatprep.mubr.bf16.mxu0 %v1000
      %1828 = vmatmul.mubr.bf16.gmra.mrb[0].mxu0 %v984
      %v1829 = vpop.f32.mrb[0].mxu0
      %v1830 = vadd.f32 %v1765, %v1829
      %v1831 = vpop.f32.mrb[0].mxu0
      %v1832 = vpop.f32.mrb[0].mxu0
      %v1833 = vadd.f32 %v1768, %v1832
      %v1834 = vpop.f32.mrb[0].mxu0
      %1835 = vmatprep.mubr.bf16.mxu0 %v1001
      %1836 = vmatmul.mubr.bf16.gmra.mrb[0].mxu0 %v985
      %v1837 = vpop.f32.mrb[0].mxu0
      %v1838 = vadd.f32 %v1773, %v1837
      %v1839 = vpop.f32.mrb[0].mxu0
      %v1840 = vpop.f32.mrb[0].mxu0
      %v1841 = vadd.f32 %v1776, %v1840
      %v1842 = vpop.f32.mrb[0].mxu0
      %1843 = vmatprep.mubr.bf16.mxu0 %v1002
      %1844 = vmatmul.mubr.bf16.gmra.mrb[0].mxu0 %v986
      %v1845 = vpop.f32.mrb[0].mxu0
      %v1846 = vadd.f32 %v1781, %v1845
      %v1847 = vpop.f32.mrb[0].mxu0
      %v1848 = vpop.f32.mrb[0].mxu0
      %v1849 = vadd.f32 %v1784, %v1848
      %v1850 = vpop.f32.mrb[0].mxu0
      %1851 = vmatprep.mubr.bf16.mxu0 %v1003
      %1852 = vmatmul.mubr.bf16.gmra.mrb[0].mxu0 %v987
      %v1853 = vpop.f32.mrb[0].mxu0
      %v1854 = vadd.f32 %v1789, %v1853
      %v1855 = vpop.f32.mrb[0].mxu0
      %v1856 = vpop.f32.mrb[0].mxu0
      %v1857 = vadd.f32 %v1792, %v1856
      %v1858 = vpop.f32.mrb[0].mxu0
      %1859 = vdwg.mxu0
      %1860 = vmatprep.subr.bf16.mxu0 0
      %1861 = vmatpush1.bf16.msra.mxu0 %v1520
      %1862 = vmatprep.subr.bf16.mxu0 0
      %1863 = vmatpush1.bf16.msra.mxu0 %v1521
      %1864 = vmatprep.subr.bf16.mxu0 0
      %1865 = vmatpush1.bf16.msra.mxu0 %v1522
      %1866 = vmatprep.subr.bf16.mxu0 0
      %1867 = vmatpush1.bf16.msra.mxu0 %v1523
      %1868 = vmatprep.subr.bf16.mxu0 0
      %1869 = vmatpush1.bf16.msra.mxu0 %v1524
      %1870 = vmatprep.subr.bf16.mxu0 0
      %1871 = vmatpush1.bf16.msra.mxu0 %v1525
      %1872 = vmatprep.subr.bf16.mxu0 0
      %1873 = vmatpush1.bf16.msra.mxu0 %v1526
      %1874 = vmatprep.subr.bf16.mxu0 0
      %1875 = vmatpush1.bf16.msra.mxu0 %v1527
      %1876 = vmatprep.subr.bf16.mxu0 0
      %1877 = vmatpush1.bf16.msra.mxu0 0
      %1878 = vmatprep.subr.bf16.mxu0 0
      %1879 = vmatpush1.bf16.msra.mxu0 0
      %1880 = vmatprep.subr.bf16.mxu0 0
      %1881 = vmatpush1.bf16.msra.mxu0 0
      %1882 = vmatprep.subr.bf16.mxu0 0
      %1883 = vmatpush1.bf16.msra.mxu0 0
      %1884 = vmatprep.subr.bf16.mxu0 0
      %1885 = vmatpush1.bf16.msra.mxu0 0
      %1886 = vmatprep.subr.bf16.mxu0 0
      %1887 = vmatpush1.bf16.msra.mxu0 0
      %1888 = vmatprep.subr.bf16.mxu0 0
      %1889 = vmatpush1.bf16.msra.mxu0 0
      %1890 = vmatprep.subr.bf16.mxu0 0
      %1891 = vmatpush1.bf16.msra.mxu0 0
      %1892 = vmatprep.mubr.bf16.mxu0 0
      %1893 = vmatmul.mubr.bf16.gmra.mrb[0].mxu0 %v1016
      %v1894 = vpop.f32.mrb[0].mxu0
      %v1895 = vadd.f32 %v1830, %v1894
      %v1896 = vpop.f32.mrb[0].mxu0
      %v1897 = vpop.f32.mrb[0].mxu0
      %v1898 = vadd.f32 %v1833, %v1897
      %v1899 = vpop.f32.mrb[0].mxu0
      %1900 = vmatprep.mubr.bf16.mxu0 0
      %1901 = vmatmul.mubr.bf16.gmra.mrb[0].mxu0 %v1017
      %v1902 = vpop.f32.mrb[0].mxu0
      %v1903 = vadd.f32 %v1838, %v1902
      %v1904 = vpop.f32.mrb[0].mxu0
      %v1905 = vpop.f32.mrb[0].mxu0
      %v1906 = vadd.f32 %v1841, %v1905
      %v1907 = vpop.f32.mrb[0].mxu0
      %1908 = vmatprep.mubr.bf16.mxu0 0
      %1909 = vmatmul.mubr.bf16.gmra.mrb[0].mxu0 %v1018
      %v1910 = vpop.f32.mrb[0].mxu0
      %v1911 = vadd.f32 %v1846, %v1910
      %v1912 = vpop.f32.mrb[0].mxu0
      %v1913 = vpop.f32.mrb[0].mxu0
      %v1914 = vadd.f32 %v1849, %v1913
      %v1915 = vpop.f32.mrb[0].mxu0
      %1916 = vmatprep.mubr.bf16.mxu0 0
      %1917 = vmatmul.mubr.bf16.gmra.mrb[0].mxu0 %v1019
      %v1918 = vpop.f32.mrb[0].mxu0
      %v1919 = vadd.f32 %v1854, %v1918
      %v1920 = vpop.f32.mrb[0].mxu0
      %v1921 = vpop.f32.mrb[0].mxu0
      %v1922 = vadd.f32 %v1857, %v1921
      %v1923 = vpop.f32.mrb[0].mxu0
      %1924 = vdwg.mxu0
      %v1925 = vpack.c.bf16 %v1895, %v1895
      %v1926 = vpack.c.bf16 %v1898, %v1898
      %v1927 = vpack.c.bf16 %v1903, %v1903
      %v1928 = vpack.c.bf16 %v1906, %v1906
      %v1929 = vpack.c.bf16 %v1911, %v1911
      %v1930 = vpack.c.bf16 %v1914, %v1914
      %v1931 = vpack.c.bf16 %v1919, %v1919
      %v1932 = vpack.c.bf16 %v1922, %v1922
      %1933 = vst [vmem:[%s285] sm:$0xf] %v1925
      %1934 = vst [vmem:[%s285 + $0x4] sm:$0xf] %v1926
      %1935 = vst [vmem:[%s285 + $0x8] sm:$0xf] %v1927
      %1936 = vst [vmem:[%s285 + $0xc] sm:$0xf] %v1928
      %1937 = vst [vmem:[%s285 + $0x10] sm:$0xf] %v1929
      %1938 = vst [vmem:[%s285 + $0x14] sm:$0xf] %v1930
      %1939 = vst [vmem:[%s285 + $0x18] sm:$0xf] %v1931
      %1940 = vst [vmem:[%s285 + $0x1c] sm:$0xf] %v1932
      %v1941 = vadd.f32 %v1895, %v1898
      %v1942 = vadd.f32 %v1941, %v1903
      %v1943 = vadd.f32 %v1942, %v1906
      %v1944 = vadd.f32 %v1943, %v1911
      %v1945 = vadd.f32 %v1944, %v1914
      %v1946 = vadd.f32 %v1945, %v1919
      %v1947 = vadd.f32 %v1946, %v1922
      %v1948 = vrot.slane %v1947, 4
      %v1949 = vadd.f32 %v1947, %v1948
      %v1950 = vrot.slane %v1949, 2
      %v1951 = vadd.f32 %v1949, %v1950
      %v1952 = vrot.slane %v1951, 1
      %v1953 = vadd.f32 %v1951, %v1952
      %v1954 = vmul.f32 %v1953, 0.015625
      %v1955 = vsub.f32 %v1895, %v1954
      %v1956 = vsub.f32 %v1898, %v1954
      %v1957 = vsub.f32 %v1903, %v1954
      %v1958 = vsub.f32 %v1906, %v1954
      %v1959 = vsub.f32 %v1911, %v1954
      %v1960 = vsub.f32 %v1914, %v1954
      %v1961 = vsub.f32 %v1919, %v1954
      %v1962 = vsub.f32 %v1922, %v1954
      %v1963 = vmul.f32 %v1955, %v1955
      %v1964 = vmul.f32 %v1956, %v1956
      %v1965 = vmul.f32 %v1957, %v1957
      %v1966 = vmul.f32 %v1958, %v1958
      %v1967 = vmul.f32 %v1959, %v1959
      %v1968 = vmul.f32 %v1960, %v1960
      %v1969 = vmul.f32 %v1961, %v1961
      %v1970 = vmul.f32 %v1962, %v1962
      %v1971 = vadd.f32 %v1963, %v1964
      %v1972 = vadd.f32 %v1971, %v1965
      %v1973 = vadd.f32 %v1972, %v1966
      %v1974 = vadd.f32 %v1973, %v1967
      %v1975 = vadd.f32 %v1974, %v1968
      %v1976 = vadd.f32 %v1975, %v1969
      %v1977 = vadd.f32 %v1976, %v1970
      %v1978 = vrot.slane %v1977, 4
      %v1979 = vadd.f32 %v1977, %v1978
      %v1980 = vrot.slane %v1979, 2
      %v1981 = vadd.f32 %v1979, %v1980
      %v1982 = vrot.slane %v1981, 1
      %v1983 = vadd.f32 %v1981, %v1982
      %v1984 = vld [vmem:[%s280] sm:$0xf]
      %v1985 = vld [vmem:[%s280 + $0x4] sm:$0xf]
      %v1986 = vld [vmem:[%s280 + $0x8] sm:$0xf]
      %v1987 = vld [vmem:[%s280 + $0xc] sm:$0xf]
      %v1988 = vld [vmem:[%s280 + $0x10] sm:$0xf]
      %v1989 = vld [vmem:[%s280 + $0x14] sm:$0xf]
      %v1990 = vld [vmem:[%s280 + $0x18] sm:$0xf]
      %v1991 = vld [vmem:[%s280 + $0x1c] sm:$0xf]
      %v1992 = vld [vmem:[%s3] sm:$0xf]
      %v1993 = vld [vmem:[%s3 + $0x4] sm:$0xf]
      %v1994 = vld [vmem:[%s3 + $0x8] sm:$0xf]
      %v1995 = vld [vmem:[%s3 + $0xc] sm:$0xf]
      %v1996 = vld [vmem:[%s3 + $0x10] sm:$0xf]
      %v1997 = vld [vmem:[%s3 + $0x14] sm:$0xf]
      %v1998 = vld [vmem:[%s3 + $0x18] sm:$0xf]
      %v1999 = vld [vmem:[%s3 + $0x1c] sm:$0xf]
      %v2000 = vld [vmem:[%s3 + $0x20] sm:$0xf]
      %v2001 = vld [vmem:[%s3 + $0x24] sm:$0xf]
      %v2002 = vld [vmem:[%s3 + $0x28] sm:$0xf]
      %v2003 = vld [vmem:[%s3 + $0x2c] sm:$0xf]
      %v2004 = vld [vmem:[%s3 + $0x30] sm:$0xf]
      %v2005 = vld [vmem:[%s3 + $0x34] sm:$0xf]
      %v2006 = vld [vmem:[%s3 + $0x38] sm:$0xf]
      %v2007 = vld [vmem:[%s3 + $0x3c] sm:$0xf]
      %v2016 = vunpack.c.l.b16 %v1984
      %v2017 = vunpack.c.l.b16 %v1985
      %v2018 = vunpack.c.l.b16 %v1986
      %v2019 = vunpack.c.l.b16 %v1987
      %v2020 = vunpack.c.l.b16 %v1988
      %v2021 = vunpack.c.l.b16 %v1989
      %v2022 = vunpack.c.l.b16 %v1990
      %v2023 = vunpack.c.l.b16 %v1991
      %v2024 = vpack.c.b16 %v2017, %v2016
      %v2025 = vpack.c.b16 %v2019, %v2018
      %v2026 = vpack.c.b16 %v2021, %v2020
      %v2027 = vpack.c.b16 %v2023, %v2022
      %v2048 = vunpack.c.l.b16 %v1992
      %v2049 = vunpack.c.l.b16 %v1993
      %v2050 = vunpack.c.l.b16 %v1994
      %v2051 = vunpack.c.l.b16 %v1995
      %v2052 = vunpack.c.l.b16 %v1996
      %v2053 = vunpack.c.l.b16 %v1997
      %v2054 = vunpack.c.l.b16 %v1998
      %v2055 = vunpack.c.l.b16 %v1999
      %v2056 = vunpack.c.l.b16 %v2000
      %v2057 = vunpack.c.l.b16 %v2001
      %v2058 = vunpack.c.l.b16 %v2002
      %v2059 = vunpack.c.l.b16 %v2003
      %v2060 = vunpack.c.l.b16 %v2004
      %v2061 = vunpack.c.l.b16 %v2005
      %v2062 = vunpack.c.l.b16 %v2006
      %v2063 = vunpack.c.l.b16 %v2007
      %v2064 = vpack.c.b16 %v2049, %v2048
      %v2065 = vpack.c.b16 %v2051, %v2050
      %v2066 = vpack.c.b16 %v2053, %v2052
      %v2067 = vpack.c.b16 %v2055, %v2054
      %v2068 = vpack.c.b16 %v2057, %v2056
      %v2069 = vpack.c.b16 %v2059, %v2058
      %v2070 = vpack.c.b16 %v2061, %v2060
      %v2071 = vpack.c.b16 %v2063, %v2062
      %2080 = vmatprep.subr.bf16.mxu0 0
      %2081 = vmatpush1.bf16.msra.mxu0 %v2064
      %2082 = vmatprep.subr.bf16.mxu0 0
      %2083 = vmatpush1.bf16.msra.mxu0 %v2065
      %2084 = vmatprep.subr.bf16.mxu0 0
      %2085 = vmatpush1.bf16.msra.mxu0 %v2066
      %2086 = vmatprep.subr.bf16.mxu0 0
      %2087 = vmatpush1.bf16.msra.mxu0 %v2067
      %2088 = vmatprep.subr.bf16.mxu0 0
      %2089 = vmatpush1.bf16.msra.mxu0 %v2068
      %2090 = vmatprep.subr.bf16.mxu0 0
      %2091 = vmatpush1.bf16.msra.mxu0 %v2069
      %2092 = vmatprep.subr.bf16.mxu0 0
      %2093 = vmatpush1.bf16.msra.mxu0 %v2070
      %2094 = vmatprep.subr.bf16.mxu0 0
      %2095 = vmatpush1.bf16.msra.mxu0 %v2071
      %2096 = vmatprep.subr.bf16.mxu0 0
      %2097 = vmatpush1.bf16.msra.mxu0 0
      %2098 = vmatprep.subr.bf16.mxu0 0
      %2099 = vmatpush1.bf16.msra.mxu0 0
      %2100 = vmatprep.subr.bf16.mxu0 0
      %2101 = vmatpush1.bf16.msra.mxu0 0
      %2102 = vmatprep.subr.bf16.mxu0 0
      %2103 = vmatpush1.bf16.msra.mxu0 0
      %2104 = vmatprep.subr.bf16.mxu0 0
      %2105 = vmatpush1.bf16.msra.mxu0 0
      %2106 = vmatprep.subr.bf16.mxu0 0
      %2107 = vmatpush1.bf16.msra.mxu0 0
      %2108 = vmatprep.subr.bf16.mxu0 0
      %2109 = vmatpush1.bf16.msra.mxu0 0
      %2110 = vmatprep.subr.bf16.mxu0 0
      %2111 = vmatpush1.bf16.msra.mxu0 0
      %2112 = vmatprep.mubr.bf16.mxu0 0
      %2113 = vmatmul.mubr.bf16.gmra.mrb[0].mxu0 %v2024
      %v2114 = vpop.f32.mrb[0].mxu0
      %v2115 = vadd.f32 0.0, %v2114
      %v2116 = vpop.f32.mrb[0].mxu0
      %v2117 = vpop.f32.mrb[0].mxu0
      %v2118 = vadd.f32 0.0, %v2117
      %v2119 = vpop.f32.mrb[0].mxu0
      %2120 = vmatprep.mubr.bf16.mxu0 0
      %2121 = vmatmul.mubr.bf16.gmra.mrb[0].mxu0 %v2025
      %v2122 = vpop.f32.mrb[0].mxu0
      %v2123 = vadd.f32 0.0, %v2122
      %v2124 = vpop.f32.mrb[0].mxu0
      %v2125 = vpop.f32.mrb[0].mxu0
      %v2126 = vadd.f32 0.0, %v2125
      %v2127 = vpop.f32.mrb[0].mxu0
      %2128 = vmatprep.mubr.bf16.mxu0 0
      %2129 = vmatmul.mubr.bf16.gmra.mrb[0].mxu0 %v2026
      %v2130 = vpop.f32.mrb[0].mxu0
      %v2131 = vadd.f32 0.0, %v2130
      %v2132 = vpop.f32.mrb[0].mxu0
      %v2133 = vpop.f32.mrb[0].mxu0
      %v2134 = vadd.f32 0.0, %v2133
      %v2135 = vpop.f32.mrb[0].mxu0
      %2136 = vmatprep.mubr.bf16.mxu0 0
      %2137 = vmatmul.mubr.bf16.gmra.mrb[0].mxu0 %v2027
      %v2138 = vpop.f32.mrb[0].mxu0
      %v2139 = vadd.f32 0.0, %v2138
      %v2140 = vpop.f32.mrb[0].mxu0
      %v2141 = vpop.f32.mrb[0].mxu0
      %v2142 = vadd.f32 0.0, %v2141
      %v2143 = vpop.f32.mrb[0].mxu0
      %2144 = vdwg.mxu0
      %v2145 = vpack.c.bf16 %v2115, %v2115
      %v2146 = vpack.c.bf16 %v2118, %v2118
      %v2147 = vpack.c.bf16 %v2123, %v2123
      %v2148 = vpack.c.bf16 %v2126, %v2126
      %v2149 = vpack.c.bf16 %v2131, %v2131
      %v2150 = vpack.c.bf16 %v2134, %v2134
      %v2151 = vpack.c.bf16 %v2139, %v2139
      %v2152 = vpack.c.bf16 %v2142, %v2142
      %2153 = vst [vmem:[%s290] sm:$0xf] %v2145
      %2154 = vst [vmem:[%s290 + $0x4] sm:$0xf] %v2146
      %2155 = vst [vmem:[%s290 + $0x8] sm:$0xf] %v2147
      %2156 = vst [vmem:[%s290 + $0xc] sm:$0xf] %v2148
      %2157 = vst [vmem:[%s290 + $0x10] sm:$0xf] %v2149
      %2158 = vst [vmem:[%s290 + $0x14] sm:$0xf] %v2150
      %2159 = vst [vmem:[%s290 + $0x18] sm:$0xf] %v2151
      %2160 = vst [vmem:[%s290 + $0x1c] sm:$0xf] %v2152
      %v2161 = vadd.f32 %v2115, %v2118
      %v2162 = vadd.f32 %v2161, %v2123
      %v2163 = vadd.f32 %v2162, %v2126
      %v2164 = vadd.f32 %v2163, %v2131
      %v2165 = vadd.f32 %v2164, %v2134
      %v2166 = vadd.f32 %v2165, %v2139
      %v2167 = vadd.f32 %v2166, %v2142
      %v2168 = vrot.slane %v2167, 4
      %v2169 = vadd.f32 %v2167, %v2168
      %v2170 = vrot.slane %v2169, 2
      %v2171 = vadd.f32 %v2169, %v2170
      %v2172 = vrot.slane %v2171, 1
      %v2173 = vadd.f32 %v2171, %v2172
      %v2174 = vmul.f32 %v2173, 0.015625
      %v2175 = vsub.f32 %v2115, %v2174
      %v2176 = vsub.f32 %v2118, %v2174
      %v2177 = vsub.f32 %v2123, %v2174
      %v2178 = vsub.f32 %v2126, %v2174
      %v2179 = vsub.f32 %v2131, %v2174
      %v2180 = vsub.f32 %v2134, %v2174
      %v2181 = vsub.f32 %v2139, %v2174
      %v2182 = vsub.f32 %v2142, %v2174
      %v2183 = vmul.f32 %v2175, %v2175
      %v2184 = vmul.f32 %v2176, %v2176
      %v2185 = vmul.f32 %v2177, %v2177
      %v2186 = vmul.f32 %v2178, %v2178
      %v2187 = vmul.f32 %v2179, %v2179
      %v2188 = vmul.f32 %v2180, %v2180
      %v2189 = vmul.f32 %v2181, %v2181
      %v2190 = vmul.f32 %v2182, %v2182
      %v2191 = vadd.f32 %v2183, %v2184
      %v2192 = vadd.f32 %v2191, %v2185
      %v2193 = vadd.f32 %v2192, %v2186
      %v2194 = vadd.f32 %v2193, %v2187
      %v2195 = vadd.f32 %v2194, %v2188
      %v2196 = vadd.f32 %v2195, %v2189
      %v2197 = vadd.f32 %v2196, %v2190
      %v2198 = vrot.slane %v2197, 4
      %v2199 = vadd.f32 %v2197, %v2198
      %v2200 = vrot.slane %v2199, 2
      %v2201 = vadd.f32 %v2199, %v2200
      %v2202 = vrot.slane %v2201, 1
      %v2203 = vadd.f32 %v2201, %v2202
      %vm2204 = vcmask 1040384
      %v2205 = vsel %vm2204, %v1953, %v1983
      %vm2206 = vcmask 1041408
      %v2207 = vsel %vm2206, %v2205, %v2173
      %vm2208 = vcmask 1042432
      %v2209 = vsel %vm2208, %v2207, %v2203
      %vm2210 = vcmask 1043456
      %v2211 = vsel %vm2210, %v2209, 0.0
      %2212 = vst [vmem:[%s294] sm:$0xff] %v2211
      %p2213 = scmp.lt.s32.totalorder %s18, 1
      %s2214 = scalar_select %p2213, %s18, 1
      %s2215 = smul.addr %s2214, 8
      %s2216 = smul.addr %s2215, 4
      %s2217 = scalar_lea.vmem %s4, %s2216
      %p2218 = scmp.lt.s32.totalorder %s18, 1
      %s2219 = scalar_select %p2218, %s18, 1
      %s2220 = smul.addr %s2219, 8
      %s2221 = smul.addr %s2220, 4
      %s2222 = scalar_lea.vmem %s5, %s2221
      %p2223 = scmp.lt.s32.totalorder %s18, 1
      %s2224 = scalar_select %p2223, %s18, 1
      %s2225 = smul.addr %s2224, 8
      %s2226 = scalar_lea.vmem %s6, %s2225
      // Predicated region
      $region37: #{basic_block_forward.6} parent=35 // pred_check
        %p2227 = pneg %p130
      $region38: #{basic_block_forward.6} parent=35 // pred_check_branch
        %2229 = sbr.rel (%p2227) target = $region40
      $region39: #{basic_block_forward.6} parent=35 // pred_region
        _
      $region40: #{basic_block_forward.6} parent=35 // pred_fallthru
        _
      // Predicated region
      $region41: #{basic_block_forward.6} parent=35 // pred_check
        %p2230 = pneg %p156
      $region42: #{basic_block_forward.6} parent=35 // pred_check_branch
        %2232 = sbr.rel (%p2230) target = $region44
      $region43: #{basic_block_forward.6} parent=35 // pred_region
        _
      $region44: #{basic_block_forward.6} parent=35 // pred_fallthru
        _
      // Predicated region
      $region45: #{basic_block_forward.6} parent=35 // pred_check
        %p2233 = pneg %p182
      $region46: #{basic_block_forward.6} parent=35 // pred_check_branch
        %2235 = sbr.rel (%p2233) target = $region48
      $region47: #{basic_block_forward.6} parent=35 // pred_region
        _
      $region48: #{basic_block_forward.6} parent=35 // pred_fallthru
        _
    $region36: #{basic_block_forward.6} parent=5 // pred_fallthru
      _
    %p2236 = scmp.le.s32.totalorder 2, %s13
    // Predicated region
    $region49: #{basic_block_forward.6} parent=5 // pred_check
      %p2237 = pneg %p2236
    $region50: #{basic_block_forward.6} parent=5 // pred_check_branch
      %2239 = sbr.rel (%p2237) target = $region52
    $region51: #{basic_block_forward.6} parent=5 // pred_region
      %s2240 = ssub.s32 %s13, 2
      // Predicated region
      $region53: #{basic_block_forward.6} parent=51 // pred_check
        %p2241 = pneg %p136
      $region54: #{basic_block_forward.6} parent=51 // pred_check_branch
        %2243 = sbr.rel (%p2241) target = $region56
      $region55: #{basic_block_forward.6} parent=51 // pred_region
        %p2244 = scmp.lt.s32.totalorder %s19, 1
        %s2245 = scalar_select %p2244, %s19, 1
        %s2246 = smul.addr %s2245, 8
        %s2247 = smul.addr %s2246, 4
        %s2248 = scalar_lea.vmem %s4, %s2247
      $region56: #{basic_block_forward.6} parent=51 // pred_fallthru
        _
      // Predicated region
      $region57: #{basic_block_forward.6} parent=51 // pred_check
        %p2249 = pneg %p162
      $region58: #{basic_block_forward.6} parent=51 // pred_check_branch
        %2251 = sbr.rel (%p2249) target = $region60
      $region59: #{basic_block_forward.6} parent=51 // pred_region
        %p2252 = scmp.lt.s32.totalorder %s19, 1
        %s2253 = scalar_select %p2252, %s19, 1
        %s2254 = smul.addr %s2253, 8
        %s2255 = smul.addr %s2254, 4
        %s2256 = scalar_lea.vmem %s5, %s2255
      $region60: #{basic_block_forward.6} parent=51 // pred_fallthru
        _
      // Predicated region
      $region61: #{basic_block_forward.6} parent=51 // pred_check
        %p2257 = pneg %p188
      $region62: #{basic_block_forward.6} parent=51 // pred_check_branch
        %2259 = sbr.rel (%p2257) target = $region64
      $region63: #{basic_block_forward.6} parent=51 // pred_region
        %p2260 = scmp.lt.s32.totalorder %s19, 1
        %s2261 = scalar_select %p2260, %s19, 1
        %s2262 = smul.addr %s2261, 8
        %s2263 = scalar_lea.vmem %s6, %s2262
      $region64: #{basic_block_forward.6} parent=51 // pred_fallthru
        _
    $region52: #{basic_block_forward.6} parent=5 // pred_fallthru
      _
  $region6: #{basic_block_forward.6} parent=0 // loop_footer
    %s17 = sadd.s32 1, %s13
  $region7: #{basic_block_forward.6} parent=0 // loop_footer_branch
    %12 = sbr.rel target = $region3
  $region8: #{basic_block_forward.6} parent=0 // loop_exit
    _

</llo_original>
